<compile_context>
chip_gen: v7x
topology: tpu7x:2x2x1
jax: 0.10.0
libtpu: 0.0.40
codegen_flags: <defaults>
</compile_context>

<pallas_src>
import functools

import jax
import jax.numpy as jnp
from jax.experimental import pallas as pl
from jax.experimental.pallas import tpu as pltpu


def _leaky(y):
    return jnp.where(y >= 0, y, 0.1 * y)


def _dot(a, b):
    return jnp.dot(a, b, preferred_element_type=jnp.float32)


# ---------------------------------------------------------------------------
# Fused DA_conv kernel — one grid step per batch element.
# ---------------------------------------------------------------------------
def _da_conv_kernel(K, H, W,
                    x_ref, d_ref, v_ref,
                    kcw1_ref, kcw2_ref,
                    ksw1_ref, ksb1_ref, ksw2_ref, ksb2_ref,
                    convw_ref, convb_ref,
                    caw1_ref, caw2_ref, saw_ref,
                    o_ref):
    P = K // 2
    HW = H * W
    C = x_ref.shape[-1]

    vb = v_ref[0]                                    # (1, C) degradation vector

    # --- kernel_channel: Linear(C,C,no bias) -> LeakyReLU -> Linear(C, C*K*K)
    # kcw2 is pre-permuted tap-major (column = tap*C + c) so per-tap channel
    # vectors are contiguous C-wide lane slices.
    t = _leaky(_dot(vb, kcw1_ref[...]))
    kc_flat = _dot(t, kcw2_ref[...])                 # (1, K*K*C)

    # --- CA_layer attention vector: sigmoid(W2 @ leaky(W1 @ v)) ---
    u = _leaky(_dot(vb, caw1_ref[...]))
    att = jax.nn.sigmoid(_dot(u, caw2_ref[...]))     # (1, C)

    # --- kernel_spatial: Conv1x1(C,C)+b -> LeakyReLU -> Conv1x1(C, K*K)+b ---
    # Stays entirely in VMEM/registers (never a lane-sparse HBM store).
    dmat = d_ref[0]                                  # (H*W, C)
    s = _leaky(_dot(dmat, ksw1_ref[...]) + ksb1_ref[...])
    ks = _dot(s, ksw2_ref[...]) + ksb2_ref[...]      # (H*W, K*K)

    # --- ddf, 'mul' combine, depthwise KxK, stride 1, dilation 1, zero pad ---
    acc = jnp.zeros((HW, C), jnp.float32)
    for dy in range(K):
        for dx in range(K):
            tap = dy * K + dx
            patch = x_ref[0, dy:dy + H, dx:dx + W, :].reshape(HW, C)
            kc_tap = kc_flat[:, tap * C:(tap + 1) * C]   # (1, C)
            ks_tap = ks[:, tap:tap + 1]                  # (HW, 1)
            acc = acc + patch * kc_tap * ks_tap

    # --- 1x1 conv (common.default_conv with kernel 1, bias=True) ------------
    conv_out = _dot(acc, convw_ref[...]) + convb_ref[...]    # (HW, C)

    # --- SpatialAttention(x0): channel max/mean -> KxK conv(2->1)+b -> sigmoid
    # Pooled maps of the zero-padded x0 are 0 on the border, identical to
    # zero-padding the pooled maps (exact PyTorch semantics).
    xp = x_ref[0]                                    # (H+2P, W+2P, C)
    maxmap = jnp.max(xp, axis=-1)                    # (H+2P, W+2P)
    avgmap = jnp.mean(xp, axis=-1)
    w = [saw_ref[i] for i in range(2 * K * K + 1)]   # hoisted SMEM scalar reads
    sa_acc = jnp.zeros((H, W), jnp.float32)
    for dy in range(K):
        for dx in range(K):
            tap = dy * K + dx
            sa_acc = (sa_acc
                      + maxmap[dy:dy + H, dx:dx + W] * w[tap]
                      + avgmap[dy:dy + H, dx:dx + W] * w[K * K + tap])
    sa = jax.nn.sigmoid(sa_acc + w[2 * K * K])[:, :, None]   # (H, W, 1)

    # --- out = conv(ddf) + x0 + x0*CA_att + x0*SA   (no trailing activation) --
    x0 = x_ref[0, P:P + H, P:P + W, :]               # (H, W, C)
    att3 = att.reshape(1, 1, C)
    y = conv_out.reshape(H, W, C) + x0 * (1.0 + att3 + sa)
    o_ref[...] = y[None]


# ---------------------------------------------------------------------------
# Wrapper: one pallas_call per DA_conv forward.
# ---------------------------------------------------------------------------
def da_conv_forward(p, x0, v, d, K):
    """x0: (B,H,W,C) NHWC feature map (x[0]); v: (B,C) (x[1]); d: (B,H,W,C) (x[2])."""
    B, H, W, C = x0.shape
    P = K // 2
    Hp, Wp = H + 2 * P, W + 2 * P
    Cr = p["ca_w1"].shape[1]

    # Pad x0 exactly once; the kernel slices the centre back out for the
    # residual / CA / SA terms.
    xp = jnp.pad(x0, ((0, 0), (P, P), (P, P), (0, 0)))
    dmat = d.reshape(B, H * W, C)
    v3 = v.reshape(B, 1, C)

    # Permute kernel_channel second-layer weight to tap-major columns.
    # PyTorch .view(b, c, K, K) means column n = c*K*K + tap; we want tap*C + c.
    kc_w2_tap = (p["kc_w2"].reshape(C, C, K * K)
                 .transpose(0, 2, 1).reshape(C, K * K * C))

    zero2 = lambda b: (0, 0)
    return pl.pallas_call(
        functools.partial(_da_conv_kernel, K, H, W),
        grid=(B,),
        in_specs=[
            pl.BlockSpec((1, Hp, Wp, C), lambda b: (b, 0, 0, 0)),   # padded x0
            pl.BlockSpec((1, H * W, C), lambda b: (b, 0, 0)),       # degradation map
            pl.BlockSpec((1, 1, C), lambda b: (b, 0, 0)),           # degradation vector
            pl.BlockSpec((C, C), zero2),                            # kc_w1
            pl.BlockSpec((C, K * K * C), zero2),                    # kc_w2 (tap-major)
            pl.BlockSpec((C, C), zero2),                            # ks_w1
            pl.BlockSpec((1, C), zero2),                            # ks_b1
            pl.BlockSpec((C, K * K), zero2),                        # ks_w2
            pl.BlockSpec((1, K * K), zero2),                        # ks_b2
            pl.BlockSpec((C, C), zero2),                            # conv_w
            pl.BlockSpec((1, C), zero2),                            # conv_b
            pl.BlockSpec((C, Cr), zero2),                           # ca_w1
            pl.BlockSpec((Cr, C), zero2),                           # ca_w2
            pl.BlockSpec(memory_space=pltpu.MemorySpace.SMEM),      # SA taps + bias
        ],
        out_specs=pl.BlockSpec((1, H, W, C), lambda b: (b, 0, 0, 0)),
        out_shape=jax.ShapeDtypeStruct((B, H, W, C), jnp.float32),
        compiler_params=pltpu.CompilerParams(
            dimension_semantics=("parallel",)),   # B>=2 keeps both v7x TCs busy
    )(xp, dmat, v3,
      p["kc_w1"], kc_w2_tap,
      p["ks_w1"], p["ks_b1"].reshape(1, C),
      p["ks_w2"], p["ks_b2"].reshape(1, K * K),
      p["conv_w"], p["conv_b"].reshape(1, C),
      p["ca_w1"], p["ca_w2"], p["sa_w"])


# ---------------------------------------------------------------------------
# Pure-JAX reference (mirrors the PyTorch module) for correctness checking.
# ---------------------------------------------------------------------------
def da_conv_reference(p, x0, v, d, K):
    B, H, W, C = x0.shape
    P = K // 2
    # kernel_channel
    t = _leaky(v @ p["kc_w1"])
    kc = (t @ p["kc_w2"]).reshape(B, C, K, K)      # PyTorch .view(b, c, K, K)
    # kernel_spatial
    dflat = d.reshape(B * H * W, C)
    s = _leaky(dflat @ p["ks_w1"] + p["ks_b1"])
    ks = (s @ p["ks_w2"] + p["ks_b2"]).reshape(B, H, W, K * K)
    # ddf, 'mul' combine
    xp = jnp.pad(x0, ((0, 0), (P, P), (P, P), (0, 0)))
    out = jnp.zeros_like(x0)
    for dy in range(K):
        for dx in range(K):
            patch = xp[:, dy:dy + H, dx:dx + W, :]
            out = out + (patch
                         * kc[:, :, dy, dx][:, None, None, :]
                         * ks[:, :, :, dy * K + dx][..., None])
    conv = (out.reshape(B * H * W, C) @ p["conv_w"] + p["conv_b"]).reshape(B, H, W, C)
    # CA_layer
    u = _leaky(v @ p["ca_w1"])
    att = jax.nn.sigmoid(u @ p["ca_w2"])           # (B, C)
    # SpatialAttention
    mxp = jnp.pad(jnp.max(x0, axis=-1), ((0, 0), (P, P), (P, P)))
    avp = jnp.pad(jnp.mean(x0, axis=-1), ((0, 0), (P, P), (P, P)))
    sa = jnp.zeros((B, H, W), jnp.float32)
    for dy in range(K):
        for dx in range(K):
            sa = sa + mxp[:, dy:dy + H, dx:dx + W] * p["sa_w"][dy * K + dx] \
                    + avp[:, dy:dy + H, dx:dx + W] * p["sa_w"][K * K + dy * K + dx]
    sa = jax.nn.sigmoid(sa + p["sa_w"][2 * K * K])
    return conv + x0 + x0 * att[:, None, None, :] + x0 * sa[..., None]


# ---------------------------------------------------------------------------
# Deterministic synthetic parameters (PyTorch-equivalent (in, out) layout).
# ---------------------------------------------------------------------------
def _init(key, shape, scale=0.05):
    return (scale * jax.random.normal(key, shape)).astype(jnp.float32)


def init_da_conv(key, C, K, r):
    ks = jax.random.split(key, 11)
    return {
        "kc_w1": _init(ks[0], (C, C)),
        "kc_w2": _init(ks[1], (C, C * K * K)),      # columns: c*K*K + tap
        "ks_w1": _init(ks[2], (C, C)),
        "ks_b1": _init(ks[3], (C,)),
        "ks_w2": _init(ks[4], (C, K * K)),
        "ks_b2": _init(ks[5], (K * K,)),
        "conv_w": _init(ks[6], (C, C)),
        "conv_b": _init(ks[7], (C,)),
        "ca_w1": _init(ks[8], (C, C // r)),
        "ca_w2": _init(ks[9], (C // r, C)),
        # SpatialAttention conv: [K*K taps for max-map | K*K taps for avg-map | bias]
        "sa_w": _init(ks[10], (2 * K * K + 1,)),
    }


if __name__ == "__main__":
    # n_feat must be 64 (kernel_channel = nn.Linear(64, ...)).
    B, C, H, W = 2, 64, 8, 8
    K, R = 3, 8

    key = jax.random.PRNGKey(0)
    kx, kv, kd, kp = jax.random.split(key, 4)
    x0 = jax.random.normal(kx, (B, H, W, C), jnp.float32)   # x[0] feature map (NHWC)
    v = jax.random.normal(kv, (B, C), jnp.float32)          # x[1] degradation vector
    d = jax.random.normal(kd, (B, H, W, C), jnp.float32)    # x[2] degradation map (NHWC)
    params = init_da_conv(kp, C, K, R)

    fwd = jax.jit(functools.partial(da_conv_forward, K=K))
    out = jax.block_until_ready(fwd(params, x0, v, d))

    ref = jax.block_until_ready(
        jax.jit(functools.partial(da_conv_reference, K=K))(params, x0, v, d))

    assert out.shape == (B, H, W, C) and out.dtype == jnp.float32
    assert bool(jnp.all(jnp.isfinite(out)))
    assert bool(jnp.allclose(out, ref, rtol=2e-2, atol=2e-2))
    print("KERNEL_OK")
</pallas_src>

<mosaic_0001>
module attributes {stable_mosaic.version = 11 : i64} {
  func.func @_da_conv_kernel(%arg0: i32, %arg1: memref<1x10x10x64xf32, #tpu.memory_space<vmem>>, %arg2: memref<1x64x64xf32, #tpu.memory_space<vmem>>, %arg3: memref<1x1x64xf32, #tpu.memory_space<vmem>>, %arg4: memref<64x64xf32, #tpu.memory_space<vmem>>, %arg5: memref<64x576xf32, #tpu.memory_space<vmem>>, %arg6: memref<64x64xf32, #tpu.memory_space<vmem>>, %arg7: memref<1x64xf32, #tpu.memory_space<vmem>>, %arg8: memref<64x9xf32, #tpu.memory_space<vmem>>, %arg9: memref<1x9xf32, #tpu.memory_space<vmem>>, %arg10: memref<64x64xf32, #tpu.memory_space<vmem>>, %arg11: memref<1x64xf32, #tpu.memory_space<vmem>>, %arg12: memref<64x8xf32, #tpu.memory_space<vmem>>, %arg13: memref<8x64xf32, #tpu.memory_space<vmem>>, %arg14: memref<19xf32, #tpu.memory_space<smem>>, %arg15: memref<1x8x8x64xf32, #tpu.memory_space<vmem>>) attributes {dimension_semantics = [#tpu.dimension_semantics<parallel>], iteration_bounds = array<i64: 2>, scalar_prefetch = 0 : i64, scratch_operands = 0 : i64, tpu.core_type = #tpu.core_type<tc>, window_params = [{transform_indices = @transform_0, window_bounds = array<i64: 1, 10, 10, 64>}, {transform_indices = @transform_1, window_bounds = array<i64: 1, 64, 64>}, {transform_indices = @transform_2, window_bounds = array<i64: 1, 1, 64>}, {pipeline_mode = #tpu.pipeline_mode<synchronous>, transform_indices = @transform_3, window_bounds = array<i64: 64, 64>}, {pipeline_mode = #tpu.pipeline_mode<synchronous>, transform_indices = @transform_4, window_bounds = array<i64: 64, 576>}, {pipeline_mode = #tpu.pipeline_mode<synchronous>, transform_indices = @transform_5, window_bounds = array<i64: 64, 64>}, {pipeline_mode = #tpu.pipeline_mode<synchronous>, transform_indices = @transform_6, window_bounds = array<i64: 1, 64>}, {pipeline_mode = #tpu.pipeline_mode<synchronous>, transform_indices = @transform_7, window_bounds = array<i64: 64, 9>}, {pipeline_mode = #tpu.pipeline_mode<synchronous>, transform_indices = @transform_8, window_bounds = array<i64: 1, 9>}, {pipeline_mode = #tpu.pipeline_mode<synchronous>, transform_indices = @transform_9, window_bounds = array<i64: 64, 64>}, {pipeline_mode = #tpu.pipeline_mode<synchronous>, transform_indices = @transform_10, window_bounds = array<i64: 1, 64>}, {pipeline_mode = #tpu.pipeline_mode<synchronous>, transform_indices = @transform_11, window_bounds = array<i64: 64, 8>}, {pipeline_mode = #tpu.pipeline_mode<synchronous>, transform_indices = @transform_12, window_bounds = array<i64: 8, 64>}, {transform_indices = @transform_13, window_bounds = array<i64: 19>}, {transform_indices = @transform_14, window_bounds = array<i64: 1, 8, 8, 64>}]} {
    %c0 = arith.constant 0 : index
    %c0_0 = arith.constant 0 : index
    %c0_1 = arith.constant 0 : index
    %0 = vector.load %arg3[%c0, %c0_0, %c0_1] : memref<1x1x64xf32, #tpu.memory_space<vmem>>, vector<1x1x64xf32>
    %1 = vector.shape_cast %0 : vector<1x1x64xf32> to vector<1x64xf32>
    %c0_2 = arith.constant 0 : index
    %c0_3 = arith.constant 0 : index
    %2 = vector.load %arg4[%c0_2, %c0_3] : memref<64x64xf32, #tpu.memory_space<vmem>>, vector<64x64xf32>
    %cst = arith.constant dense<0.000000e+00> : vector<1x64xf32>
    %3 = tpu.matmul %1, %2, %cst {dimension_numbers = #tpu.dot_dimension_numbers<[1], [0], [0], [1], [0, 0, 1, 1], [], []>} : vector<1x64xf32>, vector<64x64xf32>, vector<1x64xf32> -> vector<1x64xf32>
    %cst_4 = arith.constant 0.000000e+00 : f32
    %4 = vector.broadcast %cst_4 : f32 to vector<1x64xf32>
    %5 = arith.cmpf oge, %3, %4 : vector<1x64xf32>
    %cst_5 = arith.constant 1.000000e-01 : f32
    %6 = vector.broadcast %cst_5 : f32 to vector<1x64xf32>
    %7 = arith.mulf %6, %3 : vector<1x64xf32>
    %8 = arith.select %5, %3, %7 : vector<1x64xi1>, vector<1x64xf32>
    %c0_6 = arith.constant 0 : index
    %c0_7 = arith.constant 0 : index
    %9 = vector.load %arg5[%c0_6, %c0_7] : memref<64x576xf32, #tpu.memory_space<vmem>>, vector<64x576xf32>
    %cst_8 = arith.constant dense<0.000000e+00> : vector<1x576xf32>
    %10 = tpu.matmul %8, %9, %cst_8 {dimension_numbers = #tpu.dot_dimension_numbers<[1], [0], [0], [1], [0, 0, 1, 1], [], []>} : vector<1x64xf32>, vector<64x576xf32>, vector<1x576xf32> -> vector<1x576xf32>
    %c0_9 = arith.constant 0 : index
    %c0_10 = arith.constant 0 : index
    %11 = vector.load %arg12[%c0_9, %c0_10] : memref<64x8xf32, #tpu.memory_space<vmem>>, vector<64x8xf32>
    %cst_11 = arith.constant dense<0.000000e+00> : vector<1x8xf32>
    %12 = tpu.matmul %1, %11, %cst_11 {dimension_numbers = #tpu.dot_dimension_numbers<[1], [0], [0], [1], [0, 0, 1, 1], [], []>} : vector<1x64xf32>, vector<64x8xf32>, vector<1x8xf32> -> vector<1x8xf32>
    %cst_12 = arith.constant 0.000000e+00 : f32
    %13 = vector.broadcast %cst_12 : f32 to vector<1x8xf32>
    %14 = arith.cmpf oge, %12, %13 : vector<1x8xf32>
    %cst_13 = arith.constant 1.000000e-01 : f32
    %15 = vector.broadcast %cst_13 : f32 to vector<1x8xf32>
    %16 = arith.mulf %15, %12 : vector<1x8xf32>
    %17 = arith.select %14, %12, %16 : vector<1x8xi1>, vector<1x8xf32>
    %c0_14 = arith.constant 0 : index
    %c0_15 = arith.constant 0 : index
    %18 = vector.load %arg13[%c0_14, %c0_15] : memref<8x64xf32, #tpu.memory_space<vmem>>, vector<8x64xf32>
    %cst_16 = arith.constant dense<0.000000e+00> : vector<1x64xf32>
    %19 = tpu.matmul %17, %18, %cst_16 {dimension_numbers = #tpu.dot_dimension_numbers<[1], [0], [0], [1], [0, 0, 1, 1], [], []>} : vector<1x8xf32>, vector<8x64xf32>, vector<1x64xf32> -> vector<1x64xf32>
    %20 = arith.negf %19 : vector<1x64xf32>
    %21 = math.exp %20 : vector<1x64xf32>
    %cst_17 = arith.constant 1.000000e+00 : f32
    %22 = vector.broadcast %cst_17 : f32 to vector<1x64xf32>
    %23 = arith.addf %22, %21 : vector<1x64xf32>
    %24 = arith.divf %22, %23 : vector<1x64xf32>
    %c0_18 = arith.constant 0 : index
    %c0_19 = arith.constant 0 : index
    %c0_20 = arith.constant 0 : index
    %25 = vector.load %arg2[%c0_18, %c0_19, %c0_20] : memref<1x64x64xf32, #tpu.memory_space<vmem>>, vector<1x64x64xf32>
    %26 = vector.shape_cast %25 : vector<1x64x64xf32> to vector<64x64xf32>
    %c0_21 = arith.constant 0 : index
    %c0_22 = arith.constant 0 : index
    %27 = vector.load %arg6[%c0_21, %c0_22] : memref<64x64xf32, #tpu.memory_space<vmem>>, vector<64x64xf32>
    %cst_23 = arith.constant dense<0.000000e+00> : vector<64x64xf32>
    %28 = tpu.matmul %26, %27, %cst_23 {dimension_numbers = #tpu.dot_dimension_numbers<[1], [0], [0], [1], [0, 0, 1, 1], [], []>} : vector<64x64xf32>, vector<64x64xf32>, vector<64x64xf32> -> vector<64x64xf32>
    %c0_24 = arith.constant 0 : index
    %c0_25 = arith.constant 0 : index
    %29 = vector.load %arg7[%c0_24, %c0_25] : memref<1x64xf32, #tpu.memory_space<vmem>>, vector<1x64xf32>
    %30 = vector.broadcast %29 : vector<1x64xf32> to vector<64x64xf32>
    %31 = arith.addf %28, %30 : vector<64x64xf32>
    %cst_26 = arith.constant 0.000000e+00 : f32
    %32 = vector.broadcast %cst_26 : f32 to vector<64x64xf32>
    %33 = arith.cmpf oge, %31, %32 : vector<64x64xf32>
    %cst_27 = arith.constant 1.000000e-01 : f32
    %34 = vector.broadcast %cst_27 : f32 to vector<64x64xf32>
    %35 = arith.mulf %34, %31 : vector<64x64xf32>
    %36 = arith.select %33, %31, %35 : vector<64x64xi1>, vector<64x64xf32>
    %c0_28 = arith.constant 0 : index
    %c0_29 = arith.constant 0 : index
    %37 = vector.load %arg8[%c0_28, %c0_29] : memref<64x9xf32, #tpu.memory_space<vmem>>, vector<64x9xf32>
    %cst_30 = arith.constant dense<0.000000e+00> : vector<64x9xf32>
    %38 = tpu.matmul %36, %37, %cst_30 {dimension_numbers = #tpu.dot_dimension_numbers<[1], [0], [0], [1], [0, 0, 1, 1], [], []>} : vector<64x64xf32>, vector<64x9xf32>, vector<64x9xf32> -> vector<64x9xf32>
    %c0_31 = arith.constant 0 : index
    %c0_32 = arith.constant 0 : index
    %39 = vector.load %arg9[%c0_31, %c0_32] : memref<1x9xf32, #tpu.memory_space<vmem>>, vector<1x9xf32>
    %40 = vector.broadcast %39 : vector<1x9xf32> to vector<64x9xf32>
    %41 = arith.addf %38, %40 : vector<64x9xf32>
    %cst_33 = arith.constant 0.000000e+00 : f32
    %42 = vector.broadcast %cst_33 : f32 to vector<64x64xf32>
    %c0_34 = arith.constant 0 : index
    %c0_35 = arith.constant 0 : index
    %c0_36 = arith.constant 0 : index
    %c0_37 = arith.constant 0 : index
    %43 = vector.load %arg1[%c0_34, %c0_35, %c0_36, %c0_37] : memref<1x10x10x64xf32, #tpu.memory_space<vmem>>, vector<1x8x8x64xf32>
    %44 = vector.shape_cast %43 : vector<1x8x8x64xf32> to vector<8x8x64xf32>
    %45 = vector.shape_cast %44 : vector<8x8x64xf32> to vector<64x64xf32>
    %46 = vector.extract_strided_slice %10 {offsets = [0, 0], sizes = [1, 64], strides = [1, 1]} : vector<1x576xf32> to vector<1x64xf32>
    %47 = vector.extract_strided_slice %41 {offsets = [0, 0], sizes = [64, 1], strides = [1, 1]} : vector<64x9xf32> to vector<64x1xf32>
    %48 = vector.broadcast %46 : vector<1x64xf32> to vector<64x64xf32>
    %49 = arith.mulf %45, %48 : vector<64x64xf32>
    %50 = vector.broadcast %47 : vector<64x1xf32> to vector<64x64xf32>
    %51 = arith.mulf %49, %50 : vector<64x64xf32>
    %52 = arith.addf %42, %51 : vector<64x64xf32>
    %c0_38 = arith.constant 0 : index
    %c0_39 = arith.constant 0 : index
    %c1 = arith.constant 1 : index
    %c0_40 = arith.constant 0 : index
    %53 = vector.load %arg1[%c0_38, %c0_39, %c1, %c0_40] : memref<1x10x10x64xf32, #tpu.memory_space<vmem>>, vector<1x8x8x64xf32>
    %54 = vector.shape_cast %53 : vector<1x8x8x64xf32> to vector<8x8x64xf32>
    %55 = vector.shape_cast %54 : vector<8x8x64xf32> to vector<64x64xf32>
    %56 = vector.extract_strided_slice %10 {offsets = [0, 64], sizes = [1, 64], strides = [1, 1]} : vector<1x576xf32> to vector<1x64xf32>
    %57 = vector.extract_strided_slice %41 {offsets = [0, 1], sizes = [64, 1], strides = [1, 1]} : vector<64x9xf32> to vector<64x1xf32>
    %58 = vector.broadcast %56 : vector<1x64xf32> to vector<64x64xf32>
    %59 = arith.mulf %55, %58 : vector<64x64xf32>
    %60 = vector.broadcast %57 : vector<64x1xf32> to vector<64x64xf32>
    %61 = arith.mulf %59, %60 : vector<64x64xf32>
    %62 = arith.addf %52, %61 : vector<64x64xf32>
    %c0_41 = arith.constant 0 : index
    %c0_42 = arith.constant 0 : index
    %c2 = arith.constant 2 : index
    %c0_43 = arith.constant 0 : index
    %63 = vector.load %arg1[%c0_41, %c0_42, %c2, %c0_43] : memref<1x10x10x64xf32, #tpu.memory_space<vmem>>, vector<1x8x8x64xf32>
    %64 = vector.shape_cast %63 : vector<1x8x8x64xf32> to vector<8x8x64xf32>
    %65 = vector.shape_cast %64 : vector<8x8x64xf32> to vector<64x64xf32>
    %66 = vector.extract_strided_slice %10 {offsets = [0, 128], sizes = [1, 64], strides = [1, 1]} : vector<1x576xf32> to vector<1x64xf32>
    %67 = vector.extract_strided_slice %41 {offsets = [0, 2], sizes = [64, 1], strides = [1, 1]} : vector<64x9xf32> to vector<64x1xf32>
    %68 = vector.broadcast %66 : vector<1x64xf32> to vector<64x64xf32>
    %69 = arith.mulf %65, %68 : vector<64x64xf32>
    %70 = vector.broadcast %67 : vector<64x1xf32> to vector<64x64xf32>
    %71 = arith.mulf %69, %70 : vector<64x64xf32>
    %72 = arith.addf %62, %71 : vector<64x64xf32>
    %c0_44 = arith.constant 0 : index
    %c1_45 = arith.constant 1 : index
    %c0_46 = arith.constant 0 : index
    %c0_47 = arith.constant 0 : index
    %73 = vector.load %arg1[%c0_44, %c1_45, %c0_46, %c0_47] : memref<1x10x10x64xf32, #tpu.memory_space<vmem>>, vector<1x8x8x64xf32>
    %74 = vector.shape_cast %73 : vector<1x8x8x64xf32> to vector<8x8x64xf32>
    %75 = vector.shape_cast %74 : vector<8x8x64xf32> to vector<64x64xf32>
    %76 = vector.extract_strided_slice %10 {offsets = [0, 192], sizes = [1, 64], strides = [1, 1]} : vector<1x576xf32> to vector<1x64xf32>
    %77 = vector.extract_strided_slice %41 {offsets = [0, 3], sizes = [64, 1], strides = [1, 1]} : vector<64x9xf32> to vector<64x1xf32>
    %78 = vector.broadcast %76 : vector<1x64xf32> to vector<64x64xf32>
    %79 = arith.mulf %75, %78 : vector<64x64xf32>
    %80 = vector.broadcast %77 : vector<64x1xf32> to vector<64x64xf32>
    %81 = arith.mulf %79, %80 : vector<64x64xf32>
    %82 = arith.addf %72, %81 : vector<64x64xf32>
    %c0_48 = arith.constant 0 : index
    %c1_49 = arith.constant 1 : index
    %c1_50 = arith.constant 1 : index
    %c0_51 = arith.constant 0 : index
    %83 = vector.load %arg1[%c0_48, %c1_49, %c1_50, %c0_51] : memref<1x10x10x64xf32, #tpu.memory_space<vmem>>, vector<1x8x8x64xf32>
    %84 = vector.shape_cast %83 : vector<1x8x8x64xf32> to vector<8x8x64xf32>
    %85 = vector.shape_cast %84 : vector<8x8x64xf32> to vector<64x64xf32>
    %86 = vector.extract_strided_slice %10 {offsets = [0, 256], sizes = [1, 64], strides = [1, 1]} : vector<1x576xf32> to vector<1x64xf32>
    %87 = vector.extract_strided_slice %41 {offsets = [0, 4], sizes = [64, 1], strides = [1, 1]} : vector<64x9xf32> to vector<64x1xf32>
    %88 = vector.broadcast %86 : vector<1x64xf32> to vector<64x64xf32>
    %89 = arith.mulf %85, %88 : vector<64x64xf32>
    %90 = vector.broadcast %87 : vector<64x1xf32> to vector<64x64xf32>
    %91 = arith.mulf %89, %90 : vector<64x64xf32>
    %92 = arith.addf %82, %91 : vector<64x64xf32>
    %c0_52 = arith.constant 0 : index
    %c1_53 = arith.constant 1 : index
    %c2_54 = arith.constant 2 : index
    %c0_55 = arith.constant 0 : index
    %93 = vector.load %arg1[%c0_52, %c1_53, %c2_54, %c0_55] : memref<1x10x10x64xf32, #tpu.memory_space<vmem>>, vector<1x8x8x64xf32>
    %94 = vector.shape_cast %93 : vector<1x8x8x64xf32> to vector<8x8x64xf32>
    %95 = vector.shape_cast %94 : vector<8x8x64xf32> to vector<64x64xf32>
    %96 = vector.extract_strided_slice %10 {offsets = [0, 320], sizes = [1, 64], strides = [1, 1]} : vector<1x576xf32> to vector<1x64xf32>
    %97 = vector.extract_strided_slice %41 {offsets = [0, 5], sizes = [64, 1], strides = [1, 1]} : vector<64x9xf32> to vector<64x1xf32>
    %98 = vector.broadcast %96 : vector<1x64xf32> to vector<64x64xf32>
    %99 = arith.mulf %95, %98 : vector<64x64xf32>
    %100 = vector.broadcast %97 : vector<64x1xf32> to vector<64x64xf32>
    %101 = arith.mulf %99, %100 : vector<64x64xf32>
    %102 = arith.addf %92, %101 : vector<64x64xf32>
    %c0_56 = arith.constant 0 : index
    %c2_57 = arith.constant 2 : index
    %c0_58 = arith.constant 0 : index
    %c0_59 = arith.constant 0 : index
    %103 = vector.load %arg1[%c0_56, %c2_57, %c0_58, %c0_59] : memref<1x10x10x64xf32, #tpu.memory_space<vmem>>, vector<1x8x8x64xf32>
    %104 = vector.shape_cast %103 : vector<1x8x8x64xf32> to vector<8x8x64xf32>
    %105 = vector.shape_cast %104 : vector<8x8x64xf32> to vector<64x64xf32>
    %106 = vector.extract_strided_slice %10 {offsets = [0, 384], sizes = [1, 64], strides = [1, 1]} : vector<1x576xf32> to vector<1x64xf32>
    %107 = vector.extract_strided_slice %41 {offsets = [0, 6], sizes = [64, 1], strides = [1, 1]} : vector<64x9xf32> to vector<64x1xf32>
    %108 = vector.broadcast %106 : vector<1x64xf32> to vector<64x64xf32>
    %109 = arith.mulf %105, %108 : vector<64x64xf32>
    %110 = vector.broadcast %107 : vector<64x1xf32> to vector<64x64xf32>
    %111 = arith.mulf %109, %110 : vector<64x64xf32>
    %112 = arith.addf %102, %111 : vector<64x64xf32>
    %c0_60 = arith.constant 0 : index
    %c2_61 = arith.constant 2 : index
    %c1_62 = arith.constant 1 : index
    %c0_63 = arith.constant 0 : index
    %113 = vector.load %arg1[%c0_60, %c2_61, %c1_62, %c0_63] : memref<1x10x10x64xf32, #tpu.memory_space<vmem>>, vector<1x8x8x64xf32>
    %114 = vector.shape_cast %113 : vector<1x8x8x64xf32> to vector<8x8x64xf32>
    %115 = vector.shape_cast %114 : vector<8x8x64xf32> to vector<64x64xf32>
    %116 = vector.extract_strided_slice %10 {offsets = [0, 448], sizes = [1, 64], strides = [1, 1]} : vector<1x576xf32> to vector<1x64xf32>
    %117 = vector.extract_strided_slice %41 {offsets = [0, 7], sizes = [64, 1], strides = [1, 1]} : vector<64x9xf32> to vector<64x1xf32>
    %118 = vector.broadcast %116 : vector<1x64xf32> to vector<64x64xf32>
    %119 = arith.mulf %115, %118 : vector<64x64xf32>
    %120 = vector.broadcast %117 : vector<64x1xf32> to vector<64x64xf32>
    %121 = arith.mulf %119, %120 : vector<64x64xf32>
    %122 = arith.addf %112, %121 : vector<64x64xf32>
    %c0_64 = arith.constant 0 : index
    %c2_65 = arith.constant 2 : index
    %c2_66 = arith.constant 2 : index
    %c0_67 = arith.constant 0 : index
    %123 = vector.load %arg1[%c0_64, %c2_65, %c2_66, %c0_67] : memref<1x10x10x64xf32, #tpu.memory_space<vmem>>, vector<1x8x8x64xf32>
    %124 = vector.shape_cast %123 : vector<1x8x8x64xf32> to vector<8x8x64xf32>
    %125 = vector.shape_cast %124 : vector<8x8x64xf32> to vector<64x64xf32>
    %126 = vector.extract_strided_slice %10 {offsets = [0, 512], sizes = [1, 64], strides = [1, 1]} : vector<1x576xf32> to vector<1x64xf32>
    %127 = vector.extract_strided_slice %41 {offsets = [0, 8], sizes = [64, 1], strides = [1, 1]} : vector<64x9xf32> to vector<64x1xf32>
    %128 = vector.broadcast %126 : vector<1x64xf32> to vector<64x64xf32>
    %129 = arith.mulf %125, %128 : vector<64x64xf32>
    %130 = vector.broadcast %127 : vector<64x1xf32> to vector<64x64xf32>
    %131 = arith.mulf %129, %130 : vector<64x64xf32>
    %132 = arith.addf %122, %131 : vector<64x64xf32>
    %c0_68 = arith.constant 0 : index
    %c0_69 = arith.constant 0 : index
    %133 = vector.load %arg10[%c0_68, %c0_69] : memref<64x64xf32, #tpu.memory_space<vmem>>, vector<64x64xf32>
    %cst_70 = arith.constant dense<0.000000e+00> : vector<64x64xf32>
    %134 = tpu.matmul %132, %133, %cst_70 {dimension_numbers = #tpu.dot_dimension_numbers<[1], [0], [0], [1], [0, 0, 1, 1], [], []>} : vector<64x64xf32>, vector<64x64xf32>, vector<64x64xf32> -> vector<64x64xf32>
    %c0_71 = arith.constant 0 : index
    %c0_72 = arith.constant 0 : index
    %135 = vector.load %arg11[%c0_71, %c0_72] : memref<1x64xf32, #tpu.memory_space<vmem>>, vector<1x64xf32>
    %136 = vector.broadcast %135 : vector<1x64xf32> to vector<64x64xf32>
    %137 = arith.addf %134, %136 : vector<64x64xf32>
    %c0_73 = arith.constant 0 : index
    %c0_74 = arith.constant 0 : index
    %c0_75 = arith.constant 0 : index
    %c0_76 = arith.constant 0 : index
    %138 = vector.load %arg1[%c0_73, %c0_74, %c0_75, %c0_76] : memref<1x10x10x64xf32, #tpu.memory_space<vmem>>, vector<1x10x10x64xf32>
    %139 = vector.shape_cast %138 : vector<1x10x10x64xf32> to vector<10x10x64xf32>
    %cst_77 = arith.constant dense<0xFF800000> : vector<10x10xf32>
    %140 = vector.multi_reduction <maximumf>, %139, %cst_77 [2] : vector<10x10x64xf32> to vector<10x10xf32>
    %cst_78 = arith.constant dense<0.000000e+00> : vector<10x10xf32>
    %141 = vector.multi_reduction <add>, %139, %cst_78 [2] : vector<10x10x64xf32> to vector<10x10xf32>
    %cst_79 = arith.constant 6.400000e+01 : f32
    %142 = vector.broadcast %cst_79 : f32 to vector<10x10xf32>
    %143 = arith.divf %141, %142 : vector<10x10xf32>
    %c0_80 = arith.constant 0 : index
    %144 = memref.load %arg14[%c0_80] : memref<19xf32, #tpu.memory_space<smem>>
    %c1_81 = arith.constant 1 : index
    %145 = memref.load %arg14[%c1_81] : memref<19xf32, #tpu.memory_space<smem>>
    %c2_82 = arith.constant 2 : index
    %146 = memref.load %arg14[%c2_82] : memref<19xf32, #tpu.memory_space<smem>>
    %c3 = arith.constant 3 : index
    %147 = memref.load %arg14[%c3] : memref<19xf32, #tpu.memory_space<smem>>
    %c4 = arith.constant 4 : index
    %148 = memref.load %arg14[%c4] : memref<19xf32, #tpu.memory_space<smem>>
    %c5 = arith.constant 5 : index
    %149 = memref.load %arg14[%c5] : memref<19xf32, #tpu.memory_space<smem>>
    %c6 = arith.constant 6 : index
    %150 = memref.load %arg14[%c6] : memref<19xf32, #tpu.memory_space<smem>>
    %c7 = arith.constant 7 : index
    %151 = memref.load %arg14[%c7] : memref<19xf32, #tpu.memory_space<smem>>
    %c8 = arith.constant 8 : index
    %152 = memref.load %arg14[%c8] : memref<19xf32, #tpu.memory_space<smem>>
    %c9 = arith.constant 9 : index
    %153 = memref.load %arg14[%c9] : memref<19xf32, #tpu.memory_space<smem>>
    %c10 = arith.constant 10 : index
    %154 = memref.load %arg14[%c10] : memref<19xf32, #tpu.memory_space<smem>>
    %c11 = arith.constant 11 : index
    %155 = memref.load %arg14[%c11] : memref<19xf32, #tpu.memory_space<smem>>
    %c12 = arith.constant 12 : index
    %156 = memref.load %arg14[%c12] : memref<19xf32, #tpu.memory_space<smem>>
    %c13 = arith.constant 13 : index
    %157 = memref.load %arg14[%c13] : memref<19xf32, #tpu.memory_space<smem>>
    %c14 = arith.constant 14 : index
    %158 = memref.load %arg14[%c14] : memref<19xf32, #tpu.memory_space<smem>>
    %c15 = arith.constant 15 : index
    %159 = memref.load %arg14[%c15] : memref<19xf32, #tpu.memory_space<smem>>
    %c16 = arith.constant 16 : index
    %160 = memref.load %arg14[%c16] : memref<19xf32, #tpu.memory_space<smem>>
    %c17 = arith.constant 17 : index
    %161 = memref.load %arg14[%c17] : memref<19xf32, #tpu.memory_space<smem>>
    %c18 = arith.constant 18 : index
    %162 = memref.load %arg14[%c18] : memref<19xf32, #tpu.memory_space<smem>>
    %cst_83 = arith.constant 0.000000e+00 : f32
    %163 = vector.broadcast %cst_83 : f32 to vector<8x8xf32>
    %164 = vector.extract_strided_slice %140 {offsets = [0, 0], sizes = [8, 8], strides = [1, 1]} : vector<10x10xf32> to vector<8x8xf32>
    %165 = vector.broadcast %144 : f32 to vector<8x8xf32>
    %166 = arith.mulf %164, %165 : vector<8x8xf32>
    %167 = arith.addf %163, %166 : vector<8x8xf32>
    %168 = vector.extract_strided_slice %143 {offsets = [0, 0], sizes = [8, 8], strides = [1, 1]} : vector<10x10xf32> to vector<8x8xf32>
    %169 = vector.broadcast %153 : f32 to vector<8x8xf32>
    %170 = arith.mulf %168, %169 : vector<8x8xf32>
    %171 = arith.addf %167, %170 : vector<8x8xf32>
    %172 = vector.extract_strided_slice %140 {offsets = [0, 1], sizes = [8, 8], strides = [1, 1]} : vector<10x10xf32> to vector<8x8xf32>
    %173 = vector.broadcast %145 : f32 to vector<8x8xf32>
    %174 = arith.mulf %172, %173 : vector<8x8xf32>
    %175 = arith.addf %171, %174 : vector<8x8xf32>
    %176 = vector.extract_strided_slice %143 {offsets = [0, 1], sizes = [8, 8], strides = [1, 1]} : vector<10x10xf32> to vector<8x8xf32>
    %177 = vector.broadcast %154 : f32 to vector<8x8xf32>
    %178 = arith.mulf %176, %177 : vector<8x8xf32>
    %179 = arith.addf %175, %178 : vector<8x8xf32>
    %180 = vector.extract_strided_slice %140 {offsets = [0, 2], sizes = [8, 8], strides = [1, 1]} : vector<10x10xf32> to vector<8x8xf32>
    %181 = vector.broadcast %146 : f32 to vector<8x8xf32>
    %182 = arith.mulf %180, %181 : vector<8x8xf32>
    %183 = arith.addf %179, %182 : vector<8x8xf32>
    %184 = vector.extract_strided_slice %143 {offsets = [0, 2], sizes = [8, 8], strides = [1, 1]} : vector<10x10xf32> to vector<8x8xf32>
    %185 = vector.broadcast %155 : f32 to vector<8x8xf32>
    %186 = arith.mulf %184, %185 : vector<8x8xf32>
    %187 = arith.addf %183, %186 : vector<8x8xf32>
    %188 = vector.extract_strided_slice %140 {offsets = [1, 0], sizes = [8, 8], strides = [1, 1]} : vector<10x10xf32> to vector<8x8xf32>
    %189 = vector.broadcast %147 : f32 to vector<8x8xf32>
    %190 = arith.mulf %188, %189 : vector<8x8xf32>
    %191 = arith.addf %187, %190 : vector<8x8xf32>
    %192 = vector.extract_strided_slice %143 {offsets = [1, 0], sizes = [8, 8], strides = [1, 1]} : vector<10x10xf32> to vector<8x8xf32>
    %193 = vector.broadcast %156 : f32 to vector<8x8xf32>
    %194 = arith.mulf %192, %193 : vector<8x8xf32>
    %195 = arith.addf %191, %194 : vector<8x8xf32>
    %196 = vector.extract_strided_slice %140 {offsets = [1, 1], sizes = [8, 8], strides = [1, 1]} : vector<10x10xf32> to vector<8x8xf32>
    %197 = vector.broadcast %148 : f32 to vector<8x8xf32>
    %198 = arith.mulf %196, %197 : vector<8x8xf32>
    %199 = arith.addf %195, %198 : vector<8x8xf32>
    %200 = vector.extract_strided_slice %143 {offsets = [1, 1], sizes = [8, 8], strides = [1, 1]} : vector<10x10xf32> to vector<8x8xf32>
    %201 = vector.broadcast %157 : f32 to vector<8x8xf32>
    %202 = arith.mulf %200, %201 : vector<8x8xf32>
    %203 = arith.addf %199, %202 : vector<8x8xf32>
    %204 = vector.extract_strided_slice %140 {offsets = [1, 2], sizes = [8, 8], strides = [1, 1]} : vector<10x10xf32> to vector<8x8xf32>
    %205 = vector.broadcast %149 : f32 to vector<8x8xf32>
    %206 = arith.mulf %204, %205 : vector<8x8xf32>
    %207 = arith.addf %203, %206 : vector<8x8xf32>
    %208 = vector.extract_strided_slice %143 {offsets = [1, 2], sizes = [8, 8], strides = [1, 1]} : vector<10x10xf32> to vector<8x8xf32>
    %209 = vector.broadcast %158 : f32 to vector<8x8xf32>
    %210 = arith.mulf %208, %209 : vector<8x8xf32>
    %211 = arith.addf %207, %210 : vector<8x8xf32>
    %212 = vector.extract_strided_slice %140 {offsets = [2, 0], sizes = [8, 8], strides = [1, 1]} : vector<10x10xf32> to vector<8x8xf32>
    %213 = vector.broadcast %150 : f32 to vector<8x8xf32>
    %214 = arith.mulf %212, %213 : vector<8x8xf32>
    %215 = arith.addf %211, %214 : vector<8x8xf32>
    %216 = vector.extract_strided_slice %143 {offsets = [2, 0], sizes = [8, 8], strides = [1, 1]} : vector<10x10xf32> to vector<8x8xf32>
    %217 = vector.broadcast %159 : f32 to vector<8x8xf32>
    %218 = arith.mulf %216, %217 : vector<8x8xf32>
    %219 = arith.addf %215, %218 : vector<8x8xf32>
    %220 = vector.extract_strided_slice %140 {offsets = [2, 1], sizes = [8, 8], strides = [1, 1]} : vector<10x10xf32> to vector<8x8xf32>
    %221 = vector.broadcast %151 : f32 to vector<8x8xf32>
    %222 = arith.mulf %220, %221 : vector<8x8xf32>
    %223 = arith.addf %219, %222 : vector<8x8xf32>
    %224 = vector.extract_strided_slice %143 {offsets = [2, 1], sizes = [8, 8], strides = [1, 1]} : vector<10x10xf32> to vector<8x8xf32>
    %225 = vector.broadcast %160 : f32 to vector<8x8xf32>
    %226 = arith.mulf %224, %225 : vector<8x8xf32>
    %227 = arith.addf %223, %226 : vector<8x8xf32>
    %228 = vector.extract_strided_slice %140 {offsets = [2, 2], sizes = [8, 8], strides = [1, 1]} : vector<10x10xf32> to vector<8x8xf32>
    %229 = vector.broadcast %152 : f32 to vector<8x8xf32>
    %230 = arith.mulf %228, %229 : vector<8x8xf32>
    %231 = arith.addf %227, %230 : vector<8x8xf32>
    %232 = vector.extract_strided_slice %143 {offsets = [2, 2], sizes = [8, 8], strides = [1, 1]} : vector<10x10xf32> to vector<8x8xf32>
    %233 = vector.broadcast %161 : f32 to vector<8x8xf32>
    %234 = arith.mulf %232, %233 : vector<8x8xf32>
    %235 = arith.addf %231, %234 : vector<8x8xf32>
    %236 = vector.broadcast %162 : f32 to vector<8x8xf32>
    %237 = arith.addf %235, %236 : vector<8x8xf32>
    %238 = arith.negf %237 : vector<8x8xf32>
    %239 = math.exp %238 : vector<8x8xf32>
    %cst_84 = arith.constant 1.000000e+00 : f32
    %240 = vector.broadcast %cst_84 : f32 to vector<8x8xf32>
    %241 = arith.addf %240, %239 : vector<8x8xf32>
    %242 = arith.divf %240, %241 : vector<8x8xf32>
    %243 = vector.shape_cast %242 : vector<8x8xf32> to vector<8x8x1xf32>
    %c0_85 = arith.constant 0 : index
    %c1_86 = arith.constant 1 : index
    %c1_87 = arith.constant 1 : index
    %c0_88 = arith.constant 0 : index
    %244 = vector.load %arg1[%c0_85, %c1_86, %c1_87, %c0_88] : memref<1x10x10x64xf32, #tpu.memory_space<vmem>>, vector<1x8x8x64xf32>
    %245 = vector.shape_cast %244 : vector<1x8x8x64xf32> to vector<8x8x64xf32>
    %246 = vector.shape_cast %24 : vector<1x64xf32> to vector<1x1x64xf32>
    %247 = vector.shape_cast %137 : vector<64x64xf32> to vector<8x8x64xf32>
    %cst_89 = arith.constant 1.000000e+00 : f32
    %248 = vector.broadcast %cst_89 : f32 to vector<1x1x64xf32>
    %249 = arith.addf %248, %246 : vector<1x1x64xf32>
    %250 = vector.broadcast %249 : vector<1x1x64xf32> to vector<8x8x64xf32>
    %251 = vector.broadcast %243 : vector<8x8x1xf32> to vector<8x8x64xf32>
    %252 = arith.addf %250, %251 : vector<8x8x64xf32>
    %253 = arith.mulf %245, %252 : vector<8x8x64xf32>
    %254 = arith.addf %247, %253 : vector<8x8x64xf32>
    %255 = vector.shape_cast %254 : vector<8x8x64xf32> to vector<1x8x8x64xf32>
    %c0_90 = arith.constant 0 : index
    %c0_91 = arith.constant 0 : index
    %c0_92 = arith.constant 0 : index
    %c0_93 = arith.constant 0 : index
    %256 = vector.load %arg15[%c0_90, %c0_91, %c0_92, %c0_93] : memref<1x8x8x64xf32, #tpu.memory_space<vmem>>, vector<1x8x8x64xf32>
    tpu.vector_store %arg15[%c0_90, %c0_91, %c0_92, %c0_93], %255 {strides = array<i32>} : memref<1x8x8x64xf32, #tpu.memory_space<vmem>>, vector<1x8x8x64xf32>,
    return
  }
  func.func @transform_0(%arg0: i32) -> (i32, i32, i32, i32) {
    %c0_i32 = arith.constant 0 : i32
    %c0_i32_0 = arith.constant 0 : i32
    %c0_i32_1 = arith.constant 0 : i32
    %c0_i32_2 = arith.constant 0 : i32
    return %arg0, %c0_i32, %c0_i32_0, %c0_i32_1 : i32, i32, i32, i32
  }
  func.func @transform_1(%arg0: i32) -> (i32, i32, i32) {
    %c0_i32 = arith.constant 0 : i32
    %c0_i32_0 = arith.constant 0 : i32
    %c0_i32_1 = arith.constant 0 : i32
    return %arg0, %c0_i32, %c0_i32_0 : i32, i32, i32
  }
  func.func @transform_2(%arg0: i32) -> (i32, i32, i32) {
    %c0_i32 = arith.constant 0 : i32
    %c0_i32_0 = arith.constant 0 : i32
    %c0_i32_1 = arith.constant 0 : i32
    return %arg0, %c0_i32, %c0_i32_0 : i32, i32, i32
  }
  func.func @transform_3(%arg0: i32) -> (i32, i32) {
    %c0_i32 = arith.constant 0 : i32
    %c0_i32_0 = arith.constant 0 : i32
    %c0_i32_1 = arith.constant 0 : i32
    return %c0_i32, %c0_i32_0 : i32, i32
  }
  func.func @transform_4(%arg0: i32) -> (i32, i32) {
    %c0_i32 = arith.constant 0 : i32
    %c0_i32_0 = arith.constant 0 : i32
    %c0_i32_1 = arith.constant 0 : i32
    return %c0_i32, %c0_i32_0 : i32, i32
  }
  func.func @transform_5(%arg0: i32) -> (i32, i32) {
    %c0_i32 = arith.constant 0 : i32
    %c0_i32_0 = arith.constant 0 : i32
    %c0_i32_1 = arith.constant 0 : i32
    return %c0_i32, %c0_i32_0 : i32, i32
  }
  func.func @transform_6(%arg0: i32) -> (i32, i32) {
    %c0_i32 = arith.constant 0 : i32
    %c0_i32_0 = arith.constant 0 : i32
    %c0_i32_1 = arith.constant 0 : i32
    return %c0_i32, %c0_i32_0 : i32, i32
  }
  func.func @transform_7(%arg0: i32) -> (i32, i32) {
    %c0_i32 = arith.constant 0 : i32
    %c0_i32_0 = arith.constant 0 : i32
    %c0_i32_1 = arith.constant 0 : i32
    return %c0_i32, %c0_i32_0 : i32, i32
  }
  func.func @transform_8(%arg0: i32) -> (i32, i32) {
    %c0_i32 = arith.constant 0 : i32
    %c0_i32_0 = arith.constant 0 : i32
    %c0_i32_1 = arith.constant 0 : i32
    return %c0_i32, %c0_i32_0 : i32, i32
  }
  func.func @transform_9(%arg0: i32) -> (i32, i32) {
    %c0_i32 = arith.constant 0 : i32
    %c0_i32_0 = arith.constant 0 : i32
    %c0_i32_1 = arith.constant 0 : i32
    return %c0_i32, %c0_i32_0 : i32, i32
  }
  func.func @transform_10(%arg0: i32) -> (i32, i32) {
    %c0_i32 = arith.constant 0 : i32
    %c0_i32_0 = arith.constant 0 : i32
    %c0_i32_1 = arith.constant 0 : i32
    return %c0_i32, %c0_i32_0 : i32, i32
  }
  func.func @transform_11(%arg0: i32) -> (i32, i32) {
    %c0_i32 = arith.constant 0 : i32
    %c0_i32_0 = arith.constant 0 : i32
    %c0_i32_1 = arith.constant 0 : i32
    return %c0_i32, %c0_i32_0 : i32, i32
  }
  func.func @transform_12(%arg0: i32) -> (i32, i32) {
    %c0_i32 = arith.constant 0 : i32
    %c0_i32_0 = arith.constant 0 : i32
    %c0_i32_1 = arith.constant 0 : i32
    return %c0_i32, %c0_i32_0 : i32, i32
  }
  func.func @transform_13(%arg0: i32) -> i32 {
    %c0_i32 = arith.constant 0 : i32
    %c0_i32_0 = arith.constant 0 : i32
    return %c0_i32 : i32
  }
  func.func @transform_14(%arg0: i32) -> (i32, i32, i32, i32) {
    %c0_i32 = arith.constant 0 : i32
    %c0_i32_0 = arith.constant 0 : i32
    %c0_i32_1 = arith.constant 0 : i32
    %c0_i32_2 = arith.constant 0 : i32
    return %arg0, %c0_i32, %c0_i32_0, %c0_i32_1 : i32, i32, i32, i32
  }
}

</mosaic_0001>

<llo_original>
// kernel: da_conv_forward.1
$region0: #{da_conv_forward.1}
  #allocation0 [shape = 'u32[]', space=smem, size = 0x4, offset = 0x4, fixed_abs, tag = 'smem constant byte address 0x4 - core index']
  #allocation1 [shape = 'u32[144,128]{1,0:T(1,128)}', space=vmem, size = 0x12000, scoped, tag = 'internal scratch']
  %s0 = inlined_call_operand.vmem [shape: f32[2,10,10,64], index: 0, kind: input, shape index: {}]
  %s1 = inlined_call_operand.vmem [shape: f32[2,64,64], index: 1, kind: input, shape index: {}]
  %s2 = inlined_call_operand.vmem [shape: f32[2,1,64], index: 2, kind: input, shape index: {}]
  %s3 = inlined_call_operand.vmem [shape: f32[64,64], index: 3, kind: input, shape index: {}]
  %s4 = inlined_call_operand.vmem [shape: f32[64,576], index: 4, kind: input, shape index: {}]
  %s5 = inlined_call_operand.vmem [shape: f32[64,64], index: 5, kind: input, shape index: {}]
  %s6 = inlined_call_operand.vmem [shape: f32[1,64], index: 6, kind: input, shape index: {}]
  %s7 = inlined_call_operand.vmem [shape: f32[64,9], index: 7, kind: input, shape index: {}]
  %s8 = inlined_call_operand.vmem [shape: f32[1,9], index: 8, kind: input, shape index: {}]
  %s9 = inlined_call_operand.vmem [shape: f32[64,64], index: 9, kind: input, shape index: {}]
  %s10 = inlined_call_operand.vmem [shape: f32[1,64], index: 10, kind: input, shape index: {}]
  %s11 = inlined_call_operand.vmem [shape: f32[64,8], index: 11, kind: input, shape index: {}]
  %s12 = inlined_call_operand.vmem [shape: f32[8,64], index: 12, kind: input, shape index: {}]
  %s13 = inlined_call_operand.vmem [shape: f32[19], index: 13, kind: input, shape index: {}]
  %s14 = inlined_call_operand.hbm [shape: f32[2,8,8,64], index: 14, kind: output, shape index: {}]
  %s15 = sld [smem:[#allocation0]]
  $region93: #{da_conv_forward.1} parent=0
    _
  %s17 = ssub.s32 1, %s15
  %s18 = scalar_select 0, %s17, %s15
  $region1: #{da_conv_forward.1} parent=0
    #allocation2 [shape = 'u8[512]{0}', space=smem, size = 0x200, scoped, tag = 'input window, operand 13, single buffered']
    #allocation3 [shape = 's32[2]{0}', space=sflag, size = 0x8, scoped, tag = 'scoped memory for da_conv_forward.1']
    #allocation4 [shape = 's32[2]{0}', space=sflag, size = 0x8, scoped, tag = 'scoped memory for da_conv_forward.1']
    #allocation5 [shape = 'u8[65536]{0}', space=vmem, size = 0x10000, scoped, tag = 'output window, operand 0']
    %19 = vsyncpa [#allocation4], 0
    %20 = vsyncpa [#allocation3], 0
    %s21 = scalar_lea.sflag [#allocation3], 1
    %22 = vsyncpa %s21, 0
    loop: start=0, step=1, limit=4
    $region2: #{da_conv_forward.1} parent=1 // loop_pre_header
      _
    $region3: #{da_conv_forward.1} parent=1 // loop_header
      %s24 = sphi 0, %s28
      %p25 = scmp.ge.s32.totalorder %s24, 4
      %s34 = sphi 0, %s36
      %s37 = sphi 0, %s34
      %s38 = sphi 0, %s37
      %s54 = sphi 0, %s38
      %s60 = sphi 0, %s62
      %s63 = sphi 0, %s60
      %s64 = sphi 0, %s63
      %s80 = sphi 0, %s64
      %s86 = sphi 0, %s88
      %s89 = sphi 0, %s86
      %s90 = sphi 0, %s89
      %s106 = sphi 0, %s90
      %s110 = sphi 0, %s110
      %s112 = sphi 0, %s110
      %s113 = sphi 0, %s112
      %s127 = sphi 0, %s113
      %s131 = sphi 0, %s131
      %s133 = sphi 0, %s131
      %s134 = sphi 0, %s133
      %s148 = sphi 0, %s134
      %s152 = sphi 0, %s152
      %s154 = sphi 0, %s152
      %s155 = sphi 0, %s154
      %s169 = sphi 0, %s155
      %s173 = sphi 0, %s173
      %s175 = sphi 0, %s173
      %s176 = sphi 0, %s175
      %s190 = sphi 0, %s176
      %s194 = sphi 0, %s194
      %s196 = sphi 0, %s194
      %s197 = sphi 0, %s196
      %s211 = sphi 0, %s197
      %s215 = sphi 0, %s215
      %s217 = sphi 0, %s215
      %s218 = sphi 0, %s217
      %s232 = sphi 0, %s218
      %s236 = sphi 0, %s236
      %s238 = sphi 0, %s236
      %s239 = sphi 0, %s238
      %s253 = sphi 0, %s239
      %s257 = sphi 0, %s257
      %s259 = sphi 0, %s257
      %s260 = sphi 0, %s259
      %s274 = sphi 0, %s260
      %s278 = sphi 0, %s278
      %s280 = sphi 0, %s278
      %s281 = sphi 0, %s280
      %s295 = sphi 0, %s281
      %s299 = sphi 0, %s299
      %s301 = sphi 0, %s299
      %s302 = sphi 0, %s301
      %s316 = sphi 0, %s302
      %s320 = sphi 0, %s320
      %s322 = sphi 0, %s320
      %s323 = sphi 0, %s322
      %s337 = sphi 0, %s323
      %s343 = sphi 0, %s345
      %s346 = sphi 0, %s343
      %s347 = sphi 0, %s346
      %s363 = sphi 0, %s347
    $region4: #{da_conv_forward.1} parent=1 // loop_header_branch
      %27 = sbr.rel (%p25) target = $region8
    $region5: #{da_conv_forward.1} parent=1 // loop_body
      %s29 = ssub.s32 %s24, 1
      %s30 = ssub.s32 %s24, 2
      %s31 = sadd.s32 %s24, 1
      %s32 = ssub.s32 %s24, %s31
      %p33 = scmp.eq.s32.totalorder %s32, 0
      %s35 = sadd.s32 %s34, 1
      %s36 = scalar_select %p33, %s34, %s35
      %p39 = pneg %p33
      %p40 = scmp.eq.s32.totalorder %s24, 1
      %p41 = por %p39, %p40
      %p42 = scmp.ne.s32.totalorder %s34, %s37
      %p43 = scmp.eq.s32.totalorder %s24, 0
      %p44 = por %p42, %p43
      %p45 = scmp.ne.s32.totalorder %s34, %s37
      %p46 = scmp.eq.s32.totalorder %s29, 1
      %p47 = por %p45, %p46
      %p48 = scmp.ne.s32.totalorder %s37, %s38
      %p49 = scmp.eq.s32.totalorder %s29, 0
      %p50 = por %p48, %p49
      %p51 = scmp.ne.s32.totalorder %s37, %s38
      %p52 = scmp.eq.s32.totalorder %s30, 1
      %p53 = por %p51, %p52
      %p55 = scmp.ne.s32.totalorder %s38, %s54
      %p56 = scmp.eq.s32.totalorder %s30, 0
      %p57 = por %p55, %p56
      %s58 = ssub.s32 %s24, %s31
      %p59 = scmp.eq.s32.totalorder %s58, 0
      %s61 = sadd.s32 %s60, 1
      %s62 = scalar_select %p59, %s60, %s61
      %p65 = pneg %p59
      %p66 = scmp.eq.s32.totalorder %s24, 1
      %p67 = por %p65, %p66
      %p68 = scmp.ne.s32.totalorder %s60, %s63
      %p69 = scmp.eq.s32.totalorder %s24, 0
      %p70 = por %p68, %p69
      %p71 = scmp.ne.s32.totalorder %s60, %s63
      %p72 = scmp.eq.s32.totalorder %s29, 1
      %p73 = por %p71, %p72
      %p74 = scmp.ne.s32.totalorder %s63, %s64
      %p75 = scmp.eq.s32.totalorder %s29, 0
      %p76 = por %p74, %p75
      %p77 = scmp.ne.s32.totalorder %s63, %s64
      %p78 = scmp.eq.s32.totalorder %s30, 1
      %p79 = por %p77, %p78
      %p81 = scmp.ne.s32.totalorder %s64, %s80
      %p82 = scmp.eq.s32.totalorder %s30, 0
      %p83 = por %p81, %p82
      %s84 = ssub.s32 %s24, %s31
      %p85 = scmp.eq.s32.totalorder %s84, 0
      %s87 = sadd.s32 %s86, 1
      %s88 = scalar_select %p85, %s86, %s87
      %p91 = pneg %p85
      %p92 = scmp.eq.s32.totalorder %s24, 1
      %p93 = por %p91, %p92
      %p94 = scmp.ne.s32.totalorder %s86, %s89
      %p95 = scmp.eq.s32.totalorder %s24, 0
      %p96 = por %p94, %p95
      %p97 = scmp.ne.s32.totalorder %s86, %s89
      %p98 = scmp.eq.s32.totalorder %s29, 1
      %p99 = por %p97, %p98
      %p100 = scmp.ne.s32.totalorder %s89, %s90
      %p101 = scmp.eq.s32.totalorder %s29, 0
      %p102 = por %p100, %p101
      %p103 = scmp.ne.s32.totalorder %s89, %s90
      %p104 = scmp.eq.s32.totalorder %s30, 1
      %p105 = por %p103, %p104
      %p107 = scmp.ne.s32.totalorder %s90, %s106
      %p108 = scmp.eq.s32.totalorder %s30, 0
      %p109 = por %p107, %p108
      %s111 = sadd.s32 %s110, 1
      %p114 = scmp.eq.s32.totalorder %s24, 1
      %p115 = scmp.ne.s32.totalorder %s110, %s112
      %p116 = scmp.eq.s32.totalorder %s24, 0
      %p117 = por %p115, %p116
      %p118 = scmp.ne.s32.totalorder %s110, %s112
      %p119 = scmp.eq.s32.totalorder %s29, 1
      %p120 = por %p118, %p119
      %p121 = scmp.ne.s32.totalorder %s112, %s113
      %p122 = scmp.eq.s32.totalorder %s29, 0
      %p123 = por %p121, %p122
      %p124 = scmp.ne.s32.totalorder %s112, %s113
      %p125 = scmp.eq.s32.totalorder %s30, 1
      %p126 = por %p124, %p125
      %p128 = scmp.ne.s32.totalorder %s113, %s127
      %p129 = scmp.eq.s32.totalorder %s30, 0
      %p130 = por %p128, %p129
      %s132 = sadd.s32 %s131, 1
      %p135 = scmp.eq.s32.totalorder %s24, 1
      %p136 = scmp.ne.s32.totalorder %s131, %s133
      %p137 = scmp.eq.s32.totalorder %s24, 0
      %p138 = por %p136, %p137
      %p139 = scmp.ne.s32.totalorder %s131, %s133
      %p140 = scmp.eq.s32.totalorder %s29, 1
      %p141 = por %p139, %p140
      %p142 = scmp.ne.s32.totalorder %s133, %s134
      %p143 = scmp.eq.s32.totalorder %s29, 0
      %p144 = por %p142, %p143
      %p145 = scmp.ne.s32.totalorder %s133, %s134
      %p146 = scmp.eq.s32.totalorder %s30, 1
      %p147 = por %p145, %p146
      %p149 = scmp.ne.s32.totalorder %s134, %s148
      %p150 = scmp.eq.s32.totalorder %s30, 0
      %p151 = por %p149, %p150
      %s153 = sadd.s32 %s152, 1
      %p156 = scmp.eq.s32.totalorder %s24, 1
      %p157 = scmp.ne.s32.totalorder %s152, %s154
      %p158 = scmp.eq.s32.totalorder %s24, 0
      %p159 = por %p157, %p158
      %p160 = scmp.ne.s32.totalorder %s152, %s154
      %p161 = scmp.eq.s32.totalorder %s29, 1
      %p162 = por %p160, %p161
      %p163 = scmp.ne.s32.totalorder %s154, %s155
      %p164 = scmp.eq.s32.totalorder %s29, 0
      %p165 = por %p163, %p164
      %p166 = scmp.ne.s32.totalorder %s154, %s155
      %p167 = scmp.eq.s32.totalorder %s30, 1
      %p168 = por %p166, %p167
      %p170 = scmp.ne.s32.totalorder %s155, %s169
      %p171 = scmp.eq.s32.totalorder %s30, 0
      %p172 = por %p170, %p171
      %s174 = sadd.s32 %s173, 1
      %p177 = scmp.eq.s32.totalorder %s24, 1
      %p178 = scmp.ne.s32.totalorder %s173, %s175
      %p179 = scmp.eq.s32.totalorder %s24, 0
      %p180 = por %p178, %p179
      %p181 = scmp.ne.s32.totalorder %s173, %s175
      %p182 = scmp.eq.s32.totalorder %s29, 1
      %p183 = por %p181, %p182
      %p184 = scmp.ne.s32.totalorder %s175, %s176
      %p185 = scmp.eq.s32.totalorder %s29, 0
      %p186 = por %p184, %p185
      %p187 = scmp.ne.s32.totalorder %s175, %s176
      %p188 = scmp.eq.s32.totalorder %s30, 1
      %p189 = por %p187, %p188
      %p191 = scmp.ne.s32.totalorder %s176, %s190
      %p192 = scmp.eq.s32.totalorder %s30, 0
      %p193 = por %p191, %p192
      %s195 = sadd.s32 %s194, 1
      %p198 = scmp.eq.s32.totalorder %s24, 1
      %p199 = scmp.ne.s32.totalorder %s194, %s196
      %p200 = scmp.eq.s32.totalorder %s24, 0
      %p201 = por %p199, %p200
      %p202 = scmp.ne.s32.totalorder %s194, %s196
      %p203 = scmp.eq.s32.totalorder %s29, 1
      %p204 = por %p202, %p203
      %p205 = scmp.ne.s32.totalorder %s196, %s197
      %p206 = scmp.eq.s32.totalorder %s29, 0
      %p207 = por %p205, %p206
      %p208 = scmp.ne.s32.totalorder %s196, %s197
      %p209 = scmp.eq.s32.totalorder %s30, 1
      %p210 = por %p208, %p209
      %p212 = scmp.ne.s32.totalorder %s197, %s211
      %p213 = scmp.eq.s32.totalorder %s30, 0
      %p214 = por %p212, %p213
      %s216 = sadd.s32 %s215, 1
      %p219 = scmp.eq.s32.totalorder %s24, 1
      %p220 = scmp.ne.s32.totalorder %s215, %s217
      %p221 = scmp.eq.s32.totalorder %s24, 0
      %p222 = por %p220, %p221
      %p223 = scmp.ne.s32.totalorder %s215, %s217
      %p224 = scmp.eq.s32.totalorder %s29, 1
      %p225 = por %p223, %p224
      %p226 = scmp.ne.s32.totalorder %s217, %s218
      %p227 = scmp.eq.s32.totalorder %s29, 0
      %p228 = por %p226, %p227
      %p229 = scmp.ne.s32.totalorder %s217, %s218
      %p230 = scmp.eq.s32.totalorder %s30, 1
      %p231 = por %p229, %p230
      %p233 = scmp.ne.s32.totalorder %s218, %s232
      %p234 = scmp.eq.s32.totalorder %s30, 0
      %p235 = por %p233, %p234
      %s237 = sadd.s32 %s236, 1
      %p240 = scmp.eq.s32.totalorder %s24, 1
      %p241 = scmp.ne.s32.totalorder %s236, %s238
      %p242 = scmp.eq.s32.totalorder %s24, 0
      %p243 = por %p241, %p242
      %p244 = scmp.ne.s32.totalorder %s236, %s238
      %p245 = scmp.eq.s32.totalorder %s29, 1
      %p246 = por %p244, %p245
      %p247 = scmp.ne.s32.totalorder %s238, %s239
      %p248 = scmp.eq.s32.totalorder %s29, 0
      %p249 = por %p247, %p248
      %p250 = scmp.ne.s32.totalorder %s238, %s239
      %p251 = scmp.eq.s32.totalorder %s30, 1
      %p252 = por %p250, %p251
      %p254 = scmp.ne.s32.totalorder %s239, %s253
      %p255 = scmp.eq.s32.totalorder %s30, 0
      %p256 = por %p254, %p255
      %s258 = sadd.s32 %s257, 1
      %p261 = scmp.eq.s32.totalorder %s24, 1
      %p262 = scmp.ne.s32.totalorder %s257, %s259
      %p263 = scmp.eq.s32.totalorder %s24, 0
      %p264 = por %p262, %p263
      %p265 = scmp.ne.s32.totalorder %s257, %s259
      %p266 = scmp.eq.s32.totalorder %s29, 1
      %p267 = por %p265, %p266
      %p268 = scmp.ne.s32.totalorder %s259, %s260
      %p269 = scmp.eq.s32.totalorder %s29, 0
      %p270 = por %p268, %p269
      %p271 = scmp.ne.s32.totalorder %s259, %s260
      %p272 = scmp.eq.s32.totalorder %s30, 1
      %p273 = por %p271, %p272
      %p275 = scmp.ne.s32.totalorder %s260, %s274
      %p276 = scmp.eq.s32.totalorder %s30, 0
      %p277 = por %p275, %p276
      %s279 = sadd.s32 %s278, 1
      %p282 = scmp.eq.s32.totalorder %s24, 1
      %p283 = scmp.ne.s32.totalorder %s278, %s280
      %p284 = scmp.eq.s32.totalorder %s24, 0
      %p285 = por %p283, %p284
      %p286 = scmp.ne.s32.totalorder %s278, %s280
      %p287 = scmp.eq.s32.totalorder %s29, 1
      %p288 = por %p286, %p287
      %p289 = scmp.ne.s32.totalorder %s280, %s281
      %p290 = scmp.eq.s32.totalorder %s29, 0
      %p291 = por %p289, %p290
      %p292 = scmp.ne.s32.totalorder %s280, %s281
      %p293 = scmp.eq.s32.totalorder %s30, 1
      %p294 = por %p292, %p293
      %p296 = scmp.ne.s32.totalorder %s281, %s295
      %p297 = scmp.eq.s32.totalorder %s30, 0
      %p298 = por %p296, %p297
      %s300 = sadd.s32 %s299, 1
      %p303 = scmp.eq.s32.totalorder %s24, 1
      %p304 = scmp.ne.s32.totalorder %s299, %s301
      %p305 = scmp.eq.s32.totalorder %s24, 0
      %p306 = por %p304, %p305
      %p307 = scmp.ne.s32.totalorder %s299, %s301
      %p308 = scmp.eq.s32.totalorder %s29, 1
      %p309 = por %p307, %p308
      %p310 = scmp.ne.s32.totalorder %s301, %s302
      %p311 = scmp.eq.s32.totalorder %s29, 0
      %p312 = por %p310, %p311
      %p313 = scmp.ne.s32.totalorder %s301, %s302
      %p314 = scmp.eq.s32.totalorder %s30, 1
      %p315 = por %p313, %p314
      %p317 = scmp.ne.s32.totalorder %s302, %s316
      %p318 = scmp.eq.s32.totalorder %s30, 0
      %p319 = por %p317, %p318
      %s321 = sadd.s32 %s320, 1
      %p324 = scmp.eq.s32.totalorder %s24, 1
      %p325 = scmp.ne.s32.totalorder %s320, %s322
      %p326 = scmp.eq.s32.totalorder %s24, 0
      %p327 = por %p325, %p326
      %p328 = scmp.ne.s32.totalorder %s320, %s322
      %p329 = scmp.eq.s32.totalorder %s29, 1
      %p330 = por %p328, %p329
      %p331 = scmp.ne.s32.totalorder %s322, %s323
      %p332 = scmp.eq.s32.totalorder %s29, 0
      %p333 = por %p331, %p332
      %p334 = scmp.ne.s32.totalorder %s322, %s323
      %p335 = scmp.eq.s32.totalorder %s30, 1
      %p336 = por %p334, %p335
      %p338 = scmp.ne.s32.totalorder %s323, %s337
      %p339 = scmp.eq.s32.totalorder %s30, 0
      %p340 = por %p338, %p339
      %s341 = ssub.s32 %s24, %s31
      %p342 = scmp.eq.s32.totalorder %s341, 0
      %s344 = sadd.s32 %s343, 1
      %s345 = scalar_select %p342, %s343, %s344
      %p348 = pneg %p342
      %p349 = scmp.eq.s32.totalorder %s24, 1
      %p350 = por %p348, %p349
      %p351 = scmp.ne.s32.totalorder %s343, %s346
      %p352 = scmp.eq.s32.totalorder %s24, 0
      %p353 = por %p351, %p352
      %p354 = scmp.ne.s32.totalorder %s343, %s346
      %p355 = scmp.eq.s32.totalorder %s29, 1
      %p356 = por %p354, %p355
      %p357 = scmp.ne.s32.totalorder %s346, %s347
      %p358 = scmp.eq.s32.totalorder %s29, 0
      %p359 = por %p357, %p358
      %p360 = scmp.ne.s32.totalorder %s346, %s347
      %p361 = scmp.eq.s32.totalorder %s30, 1
      %p362 = por %p360, %p361
      %p364 = scmp.ne.s32.totalorder %s347, %s363
      %p365 = scmp.eq.s32.totalorder %s30, 0
      %p366 = por %p364, %p365
      %p367 = scmp.le.s32.totalorder 1, %s24
      %p368 = scmp.lt.s32.totalorder %s24, 3
      %p369 = pnand %p367, %p368
      %p370 = pneg %p369
      // Predicated region
      $region9: #{da_conv_forward.1} parent=5 // pred_check
        _
      $region10: #{da_conv_forward.1} parent=5 // pred_check_branch
        %372 = sbr.rel (%p369) target = $region12
      $region11: #{da_conv_forward.1} parent=5 // pred_region
        %s373 = ssub.s32 %s24, 1
        // Predicated region
        $region13: #{da_conv_forward.1} parent=11 // pred_check
          %p374 = pneg %p123
        $region14: #{da_conv_forward.1} parent=11 // pred_check_branch
          %376 = sbr.rel (%p374) target = $region16
        $region15: #{da_conv_forward.1} parent=11 // pred_region
          _
        $region16: #{da_conv_forward.1} parent=11 // pred_fallthru
          _
        // Predicated region
        $region17: #{da_conv_forward.1} parent=11 // pred_check
          %p377 = pneg %p144
        $region18: #{da_conv_forward.1} parent=11 // pred_check_branch
          %379 = sbr.rel (%p377) target = $region20
        $region19: #{da_conv_forward.1} parent=11 // pred_region
          _
        $region20: #{da_conv_forward.1} parent=11 // pred_fallthru
          _
        // Predicated region
        $region21: #{da_conv_forward.1} parent=11 // pred_check
          %p380 = pneg %p165
        $region22: #{da_conv_forward.1} parent=11 // pred_check_branch
          %382 = sbr.rel (%p380) target = $region24
        $region23: #{da_conv_forward.1} parent=11 // pred_region
          _
        $region24: #{da_conv_forward.1} parent=11 // pred_fallthru
          _
        // Predicated region
        $region25: #{da_conv_forward.1} parent=11 // pred_check
          %p383 = pneg %p186
        $region26: #{da_conv_forward.1} parent=11 // pred_check_branch
          %385 = sbr.rel (%p383) target = $region28
        $region27: #{da_conv_forward.1} parent=11 // pred_region
          _
        $region28: #{da_conv_forward.1} parent=11 // pred_fallthru
          _
        // Predicated region
        $region29: #{da_conv_forward.1} parent=11 // pred_check
          %p386 = pneg %p207
        $region30: #{da_conv_forward.1} parent=11 // pred_check_branch
          %388 = sbr.rel (%p386) target = $region32
        $region31: #{da_conv_forward.1} parent=11 // pred_region
          _
        $region32: #{da_conv_forward.1} parent=11 // pred_fallthru
          _
        // Predicated region
        $region33: #{da_conv_forward.1} parent=11 // pred_check
          %p389 = pneg %p228
        $region34: #{da_conv_forward.1} parent=11 // pred_check_branch
          %391 = sbr.rel (%p389) target = $region36
        $region35: #{da_conv_forward.1} parent=11 // pred_region
          _
        $region36: #{da_conv_forward.1} parent=11 // pred_fallthru
          _
        // Predicated region
        $region37: #{da_conv_forward.1} parent=11 // pred_check
          %p392 = pneg %p249
        $region38: #{da_conv_forward.1} parent=11 // pred_check_branch
          %394 = sbr.rel (%p392) target = $region40
        $region39: #{da_conv_forward.1} parent=11 // pred_region
          _
        $region40: #{da_conv_forward.1} parent=11 // pred_fallthru
          _
        // Predicated region
        $region41: #{da_conv_forward.1} parent=11 // pred_check
          %p395 = pneg %p270
        $region42: #{da_conv_forward.1} parent=11 // pred_check_branch
          %397 = sbr.rel (%p395) target = $region44
        $region43: #{da_conv_forward.1} parent=11 // pred_region
          _
        $region44: #{da_conv_forward.1} parent=11 // pred_fallthru
          _
        // Predicated region
        $region45: #{da_conv_forward.1} parent=11 // pred_check
          %p398 = pneg %p291
        $region46: #{da_conv_forward.1} parent=11 // pred_check_branch
          %400 = sbr.rel (%p398) target = $region48
        $region47: #{da_conv_forward.1} parent=11 // pred_region
          _
        $region48: #{da_conv_forward.1} parent=11 // pred_fallthru
          _
        // Predicated region
        $region49: #{da_conv_forward.1} parent=11 // pred_check
          %p401 = pneg %p312
        $region50: #{da_conv_forward.1} parent=11 // pred_check_branch
          %403 = sbr.rel (%p401) target = $region52
        $region51: #{da_conv_forward.1} parent=11 // pred_region
          _
        $region52: #{da_conv_forward.1} parent=11 // pred_fallthru
          _
        // Predicated region
        $region53: #{da_conv_forward.1} parent=11 // pred_check
          %p404 = pneg %p333
        $region54: #{da_conv_forward.1} parent=11 // pred_check_branch
          %406 = sbr.rel (%p404) target = $region56
        $region55: #{da_conv_forward.1} parent=11 // pred_region
          %s408 = ssub.s32 16, 16
          %409 = vsyncadd [#allocation4], %s408
          %s411 = sshll.u32 %s13, 4
          %s412 = int_to_ptr.vmem [resolvable:$true] %s411
          %414 = dma.vmem_to_smem %s412, 16, [#allocation2], [#allocation4]
        $region56: #{da_conv_forward.1} parent=11 // pred_fallthru
          _
      $region12: #{da_conv_forward.1} parent=5 // pred_fallthru
        _
      %p415 = scmp.lt.s32.totalorder %s24, 2
      // Predicated region
      $region57: #{da_conv_forward.1} parent=5 // pred_check
        %p416 = pneg %p415
      $region58: #{da_conv_forward.1} parent=5 // pred_check_branch
        %418 = sbr.rel (%p416) target = $region60
      $region59: #{da_conv_forward.1} parent=5 // pred_region
        // Predicated region
        $region61: #{da_conv_forward.1} parent=59 // pred_check
          %p419 = pneg %p44
        $region62: #{da_conv_forward.1} parent=59 // pred_check_branch
          %421 = sbr.rel (%p419) target = $region64
        $region63: #{da_conv_forward.1} parent=59 // pred_region
          %p422 = scmp.lt.s32.totalorder %s24, 1
          %s423 = scalar_select %p422, %s24, 1
          %s424 = smul.addr %s423, 20
          %s425 = smul.addr %s424, 8
          %s426 = scalar_lea.vmem %s0, %s425
        $region64: #{da_conv_forward.1} parent=59 // pred_fallthru
          _
        // Predicated region
        $region65: #{da_conv_forward.1} parent=59 // pred_check
          %p427 = pneg %p70
        $region66: #{da_conv_forward.1} parent=59 // pred_check_branch
          %429 = sbr.rel (%p427) target = $region68
        $region67: #{da_conv_forward.1} parent=59 // pred_region
          %p430 = scmp.lt.s32.totalorder %s24, 1
          %s431 = scalar_select %p430, %s24, 1
          %s432 = smul.addr %s431, 8
          %s433 = smul.addr %s432, 8
          %s434 = scalar_lea.vmem %s1, %s433
        $region68: #{da_conv_forward.1} parent=59 // pred_fallthru
          _
        // Predicated region
        $region69: #{da_conv_forward.1} parent=59 // pred_check
          %p435 = pneg %p96
        $region70: #{da_conv_forward.1} parent=59 // pred_check_branch
          %437 = sbr.rel (%p435) target = $region72
        $region71: #{da_conv_forward.1} parent=59 // pred_region
          %p438 = scmp.lt.s32.totalorder %s24, 1
          %s439 = scalar_select %p438, %s24, 1
          %s440 = scalar_lea.vmem %s2, %s439
        $region72: #{da_conv_forward.1} parent=59 // pred_fallthru
          _
      $region60: #{da_conv_forward.1} parent=5 // pred_fallthru
        _
      %p441 = scmp.le.s32.totalorder 1, %s24
      %p442 = scmp.lt.s32.totalorder %s24, 3
      %p443 = pnand %p441, %p442
      %p444 = pneg %p443
      // Predicated region
      $region73: #{da_conv_forward.1} parent=5 // pred_check
        _
      $region74: #{da_conv_forward.1} parent=5 // pred_check_branch
        %446 = sbr.rel (%p443) target = $region76
      $region75: #{da_conv_forward.1} parent=5 // pred_region
        %s447 = ssub.s32 %s24, 1
        // Predicated region
        $region77: #{da_conv_forward.1} parent=75 // pred_check
          %p448 = pneg %p333
        $region78: #{da_conv_forward.1} parent=75 // pred_check_branch
          %450 = sbr.rel (%p448) target = $region80
        $region79: #{da_conv_forward.1} parent=75 // pred_region
          %451 = dma.done [#allocation4], 16
        $region80: #{da_conv_forward.1} parent=75 // pred_fallthru
          _
        %452 = sfence
        %p453 = scmp.lt.s32.totalorder %s29, 1
        %s454 = scalar_select %p453, %s29, 1
        %s455 = smul.addr %s454, 20
        %s456 = smul.addr %s455, 8
        %s457 = scalar_lea.vmem %s0, %s456
        %p458 = pneg %p50
        %p459 = pneg %p47
        %p460 = scmp.lt.s32.totalorder %s29, 1
        %s461 = scalar_select %p460, %s29, 1
        %s462 = smul.addr %s461, 8
        %s463 = smul.addr %s462, 8
        %s464 = scalar_lea.vmem %s1, %s463
        %p465 = pneg %p76
        %p466 = pneg %p73
        %p467 = scmp.lt.s32.totalorder %s29, 1
        %s468 = scalar_select %p467, %s29, 1
        %s469 = scalar_lea.vmem %s2, %s468
        %p470 = pneg %p102
        %p471 = pneg %p99
        %p472 = pneg %p123
        %p473 = pneg %p120
        %p474 = pneg %p144
        %p475 = pneg %p141
        %p476 = pneg %p165
        %p477 = pneg %p162
        %p478 = pneg %p186
        %p479 = pneg %p183
        %p480 = pneg %p207
        %p481 = pneg %p204
        %p482 = pneg %p228
        %p483 = pneg %p225
        %p484 = pneg %p249
        %p485 = pneg %p246
        %p486 = pneg %p270
        %p487 = pneg %p267
        %p488 = pneg %p291
        %p489 = pneg %p288
        %p490 = pneg %p312
        %p491 = pneg %p309
        %p492 = pneg %p333
        %p493 = pneg %p330
        %p494 = pneg %p359
        %p495 = pneg %p356
        %s496 = sand.u32 %s346, 1
        %s497 = scalar_lea.sflag [#allocation3], %s496
        %s498 = sand.u32 %s346, 1
        %s499 = smul.addr %s498, 64
        %s500 = scalar_lea.vmem [#allocation5], %s499
        %p501 = scmp.lt.s32.totalorder %s29, 1
        %s502 = scalar_select %p501, %s29, 1
        %s503 = smul.addr %s502, 20
        %s504 = smul.addr %s503, 8
        %s505 = scalar_lea.vmem %s0, %s504
        %p506 = scmp.lt.s32.totalorder %s29, 1
        %s507 = scalar_select %p506, %s29, 1
        %s508 = smul.addr %s507, 8
        %s509 = smul.addr %s508, 8
        %s510 = scalar_lea.vmem %s1, %s509
        %p511 = scmp.lt.s32.totalorder %s29, 1
        %s512 = scalar_select %p511, %s29, 1
        %s513 = scalar_lea.vmem %s2, %s512
        %v514 = vld [vmem:[%s513] sm:$0x1]
        %v515 = vld [vmem:[%s3] sm:$0xff]
        %v516 = vld [vmem:[%s3 + $0x8] sm:$0xff]
        %v517 = vld [vmem:[%s3 + $0x10] sm:$0xff]
        %v518 = vld [vmem:[%s3 + $0x18] sm:$0xff]
        %v519 = vld [vmem:[%s3 + $0x20] sm:$0xff]
        %v520 = vld [vmem:[%s3 + $0x28] sm:$0xff]
        %v521 = vld [vmem:[%s3 + $0x30] sm:$0xff]
        %v522 = vld [vmem:[%s3 + $0x38] sm:$0xff]
        %vm523 = vcmask 523264
        %v525 = vsel %vm523, %v514, 0
        %527 = vmatprep.subr.mxu0 0.0
        %528 = vmatpush1.msra.mxu0 %v515
        %529 = vmatprep.subr.mxu0 0.0
        %530 = vmatpush1.msra.mxu0 %v516
        %531 = vmatprep.subr.mxu0 0.0
        %532 = vmatpush1.msra.mxu0 %v517
        %533 = vmatprep.subr.mxu0 0.0
        %534 = vmatpush1.msra.mxu0 %v518
        %535 = vmatprep.subr.mxu0 0.0
        %536 = vmatpush1.msra.mxu0 %v519
        %537 = vmatprep.subr.mxu0 0.0
        %538 = vmatpush1.msra.mxu0 %v520
        %539 = vmatprep.subr.mxu0 0.0
        %540 = vmatpush1.msra.mxu0 %v521
        %541 = vmatprep.subr.mxu0 0.0
        %542 = vmatpush1.msra.mxu0 %v522
        %543 = vmatprep.subr.mxu0 0.0
        %544 = vmatpush1.msra.mxu0 0.0
        %545 = vmatprep.subr.mxu0 0.0
        %546 = vmatpush1.msra.mxu0 0.0
        %547 = vmatprep.subr.mxu0 0.0
        %548 = vmatpush1.msra.mxu0 0.0
        %549 = vmatprep.subr.mxu0 0.0
        %550 = vmatpush1.msra.mxu0 0.0
        %551 = vmatprep.subr.mxu0 0.0
        %552 = vmatpush1.msra.mxu0 0.0
        %553 = vmatprep.subr.mxu0 0.0
        %554 = vmatpush1.msra.mxu0 0.0
        %555 = vmatprep.subr.mxu0 0.0
        %556 = vmatpush1.msra.mxu0 0.0
        %557 = vmatprep.subr.mxu0 0.0
        %558 = vmatpush1.msra.mxu0 0.0
        %559 = vmatprep.subr.mxu0 0.0
        %560 = vmatpush1.msra.mxu0 0.0
        %561 = vmatprep.subr.mxu0 0.0
        %562 = vmatpush1.msra.mxu0 0.0
        %563 = vmatprep.subr.mxu0 0.0
        %564 = vmatpush1.msra.mxu0 0.0
        %565 = vmatprep.subr.mxu0 0.0
        %566 = vmatpush1.msra.mxu0 0.0
        %567 = vmatprep.subr.mxu0 0.0
        %568 = vmatpush1.msra.mxu0 0.0
        %569 = vmatprep.subr.mxu0 0.0
        %570 = vmatpush1.msra.mxu0 0.0
        %571 = vmatprep.subr.mxu0 0.0
        %572 = vmatpush1.msra.mxu0 0.0
        %573 = vmatprep.subr.mxu0 0.0
        %574 = vmatpush1.msra.mxu0 0.0
        %575 = vmatprep.subr.mxu0 0.0
        %576 = vmatpush1.msra.mxu0 0.0
        %577 = vmatprep.subr.mxu0 0.0
        %578 = vmatpush1.msra.mxu0 0.0
        %579 = vmatprep.subr.mxu0 0.0
        %580 = vmatpush1.msra.mxu0 0.0
        %581 = vmatprep.subr.mxu0 0.0
        %582 = vmatpush1.msra.mxu0 0.0
        %583 = vmatprep.subr.mxu0 0.0
        %584 = vmatpush1.msra.mxu0 0.0
        %585 = vmatprep.subr.mxu0 0.0
        %586 = vmatpush1.msra.mxu0 0.0
        %587 = vmatprep.subr.mxu0 0.0
        %588 = vmatpush1.msra.mxu0 0.0
        %589 = vmatprep.subr.mxu0 0.0
        %590 = vmatpush1.msra.mxu0 0.0
        %591 = vmatprep.mubr.f32.mxu0 0.0
        %592 = vmatmul.mubr.f32.gmra.mrb[0].mxu0 %v525
        %v593 = vpop.f32.mrb[0].mxu0
        %v594 = vadd.f32 0.0, %v593
        %v595 = vpop.f32.mrb[0].mxu0
        %596 = vdwg.mxu0
        %vm597 = vcmp.ge.f32.partialorder %v594, 0.0
        %v598 = vmul.f32 %v594, 0.1
        %v599 = vsel %vm597, %v594, %v598
        %v600 = vld [vmem:[%s4] sm:$0xff]
        %v601 = vld [vmem:[%s4 + $0x8] sm:$0xff]
        %v602 = vld [vmem:[%s4 + $0x10] sm:$0xff]
        %v603 = vld [vmem:[%s4 + $0x18] sm:$0xff]
        %v604 = vld [vmem:[%s4 + $0x20] sm:$0xff]
        %v605 = vld [vmem:[%s4 + $0x28] sm:$0xff]
        %v606 = vld [vmem:[%s4 + $0x30] sm:$0xff]
        %v607 = vld [vmem:[%s4 + $0x38] sm:$0xff]
        %v608 = vld [vmem:[%s4 + $0x40] sm:$0xff]
        %v609 = vld [vmem:[%s4 + $0x48] sm:$0xff]
        %v610 = vld [vmem:[%s4 + $0x50] sm:$0xff]
        %v611 = vld [vmem:[%s4 + $0x58] sm:$0xff]
        %v612 = vld [vmem:[%s4 + $0x60] sm:$0xff]
        %v613 = vld [vmem:[%s4 + $0x68] sm:$0xff]
        %v614 = vld [vmem:[%s4 + $0x70] sm:$0xff]
        %v615 = vld [vmem:[%s4 + $0x78] sm:$0xff]
        %v616 = vld [vmem:[%s4 + $0x80] sm:$0xff]
        %v617 = vld [vmem:[%s4 + $0x88] sm:$0xff]
        %v618 = vld [vmem:[%s4 + $0x90] sm:$0xff]
        %v619 = vld [vmem:[%s4 + $0x98] sm:$0xff]
        %v620 = vld [vmem:[%s4 + $0xa0] sm:$0xff]
        %v621 = vld [vmem:[%s4 + $0xa8] sm:$0xff]
        %v622 = vld [vmem:[%s4 + $0xb0] sm:$0xff]
        %v623 = vld [vmem:[%s4 + $0xb8] sm:$0xff]
        %v624 = vld [vmem:[%s4 + $0xc0] sm:$0xff]
        %v625 = vld [vmem:[%s4 + $0xc8] sm:$0xff]
        %v626 = vld [vmem:[%s4 + $0xd0] sm:$0xff]
        %v627 = vld [vmem:[%s4 + $0xd8] sm:$0xff]
        %v628 = vld [vmem:[%s4 + $0xe0] sm:$0xff]
        %v629 = vld [vmem:[%s4 + $0xe8] sm:$0xff]
        %v630 = vld [vmem:[%s4 + $0xf0] sm:$0xff]
        %v631 = vld [vmem:[%s4 + $0xf8] sm:$0xff]
        %v632 = vld [vmem:[%s4 + $0x100] sm:$0xff]
        %v633 = vld [vmem:[%s4 + $0x108] sm:$0xff]
        %v634 = vld [vmem:[%s4 + $0x110] sm:$0xff]
        %v635 = vld [vmem:[%s4 + $0x118] sm:$0xff]
        %v636 = vld [vmem:[%s4 + $0x120] sm:$0xff]
        %v637 = vld [vmem:[%s4 + $0x128] sm:$0xff]
        %v638 = vld [vmem:[%s4 + $0x130] sm:$0xff]
        %v639 = vld [vmem:[%s4 + $0x138] sm:$0xff]
        %v641 = vsel %vm523, %v599, 0
        %643 = vmatprep.subr.mxu0 %v601
        %644 = vmatpush1.msra.mxu0 %v600
        %645 = vmatprep.subr.mxu0 %v606
        %646 = vmatpush1.msra.mxu0 %v605
        %647 = vmatprep.subr.mxu0 %v611
        %648 = vmatpush1.msra.mxu0 %v610
        %649 = vmatprep.subr.mxu0 %v616
        %650 = vmatpush1.msra.mxu0 %v615
        %651 = vmatprep.subr.mxu0 %v621
        %652 = vmatpush1.msra.mxu0 %v620
        %653 = vmatprep.subr.mxu0 %v626
        %654 = vmatpush1.msra.mxu0 %v625
        %655 = vmatprep.subr.mxu0 %v631
        %656 = vmatpush1.msra.mxu0 %v630
        %657 = vmatprep.subr.mxu0 %v636
        %658 = vmatpush1.msra.mxu0 %v635
        %659 = vmatprep.subr.mxu0 0.0
        %660 = vmatpush1.msra.mxu0 0.0
        %661 = vmatprep.subr.mxu0 0.0
        %662 = vmatpush1.msra.mxu0 0.0
        %663 = vmatprep.subr.mxu0 0.0
        %664 = vmatpush1.msra.mxu0 0.0
        %665 = vmatprep.subr.mxu0 0.0
        %666 = vmatpush1.msra.mxu0 0.0
        %667 = vmatprep.subr.mxu0 0.0
        %668 = vmatpush1.msra.mxu0 0.0
        %669 = vmatprep.subr.mxu0 0.0
        %670 = vmatpush1.msra.mxu0 0.0
        %671 = vmatprep.subr.mxu0 0.0
        %672 = vmatpush1.msra.mxu0 0.0
        %673 = vmatprep.subr.mxu0 0.0
        %674 = vmatpush1.msra.mxu0 0.0
        %675 = vmatprep.subr.mxu0 0.0
        %676 = vmatpush1.msra.mxu0 0.0
        %677 = vmatprep.subr.mxu0 0.0
        %678 = vmatpush1.msra.mxu0 0.0
        %679 = vmatprep.subr.mxu0 0.0
        %680 = vmatpush1.msra.mxu0 0.0
        %681 = vmatprep.subr.mxu0 0.0
        %682 = vmatpush1.msra.mxu0 0.0
        %683 = vmatprep.subr.mxu0 0.0
        %684 = vmatpush1.msra.mxu0 0.0
        %685 = vmatprep.subr.mxu0 0.0
        %686 = vmatpush1.msra.mxu0 0.0
        %687 = vmatprep.subr.mxu0 0.0
        %688 = vmatpush1.msra.mxu0 0.0
        %689 = vmatprep.subr.mxu0 0.0
        %690 = vmatpush1.msra.mxu0 0.0
        %691 = vmatprep.subr.mxu0 0.0
        %692 = vmatpush1.msra.mxu0 0.0
        %693 = vmatprep.subr.mxu0 0.0
        %694 = vmatpush1.msra.mxu0 0.0
        %695 = vmatprep.subr.mxu0 0.0
        %696 = vmatpush1.msra.mxu0 0.0
        %697 = vmatprep.subr.mxu0 0.0
        %698 = vmatpush1.msra.mxu0 0.0
        %699 = vmatprep.subr.mxu0 0.0
        %700 = vmatpush1.msra.mxu0 0.0
        %701 = vmatprep.subr.mxu0 0.0
        %702 = vmatpush1.msra.mxu0 0.0
        %703 = vmatprep.subr.mxu0 0.0
        %704 = vmatpush1.msra.mxu0 0.0
        %705 = vmatprep.subr.mxu0 0.0
        %706 = vmatpush1.msra.mxu0 0.0
        %707 = vmatprep.mubr.f32.mxu0 0.0
        %708 = vmatmul.mubr.f32.gmra.mrb[0].mxu0 %v641
        %v709 = vpop.f32.mrb[0].mxu0
        %v710 = vadd.f32 0.0, %v709
        %v711 = vpop.f32.mrb[0].mxu0
        %v712 = vadd.f32 0.0, %v711
        %713 = vdwg.mxu0
        %714 = vmatprep.subr.mxu0 %v603
        %715 = vmatpush1.msra.mxu0 %v602
        %716 = vmatprep.subr.mxu0 %v608
        %717 = vmatpush1.msra.mxu0 %v607
        %718 = vmatprep.subr.mxu0 %v613
        %719 = vmatpush1.msra.mxu0 %v612
        %720 = vmatprep.subr.mxu0 %v618
        %721 = vmatpush1.msra.mxu0 %v617
        %722 = vmatprep.subr.mxu0 %v623
        %723 = vmatpush1.msra.mxu0 %v622
        %724 = vmatprep.subr.mxu0 %v628
        %725 = vmatpush1.msra.mxu0 %v627
        %726 = vmatprep.subr.mxu0 %v633
        %727 = vmatpush1.msra.mxu0 %v632
        %728 = vmatprep.subr.mxu0 %v638
        %729 = vmatpush1.msra.mxu0 %v637
        %730 = vmatprep.subr.mxu0 0.0
        %731 = vmatpush1.msra.mxu0 0.0
        %732 = vmatprep.subr.mxu0 0.0
        %733 = vmatpush1.msra.mxu0 0.0
        %734 = vmatprep.subr.mxu0 0.0
        %735 = vmatpush1.msra.mxu0 0.0
        %736 = vmatprep.subr.mxu0 0.0
        %737 = vmatpush1.msra.mxu0 0.0
        %738 = vmatprep.subr.mxu0 0.0
        %739 = vmatpush1.msra.mxu0 0.0
        %740 = vmatprep.subr.mxu0 0.0
        %741 = vmatpush1.msra.mxu0 0.0
        %742 = vmatprep.subr.mxu0 0.0
        %743 = vmatpush1.msra.mxu0 0.0
        %744 = vmatprep.subr.mxu0 0.0
        %745 = vmatpush1.msra.mxu0 0.0
        %746 = vmatprep.subr.mxu0 0.0
        %747 = vmatpush1.msra.mxu0 0.0
        %748 = vmatprep.subr.mxu0 0.0
        %749 = vmatpush1.msra.mxu0 0.0
        %750 = vmatprep.subr.mxu0 0.0
        %751 = vmatpush1.msra.mxu0 0.0
        %752 = vmatprep.subr.mxu0 0.0
        %753 = vmatpush1.msra.mxu0 0.0
        %754 = vmatprep.subr.mxu0 0.0
        %755 = vmatpush1.msra.mxu0 0.0
        %756 = vmatprep.subr.mxu0 0.0
        %757 = vmatpush1.msra.mxu0 0.0
        %758 = vmatprep.subr.mxu0 0.0
        %759 = vmatpush1.msra.mxu0 0.0
        %760 = vmatprep.subr.mxu0 0.0
        %761 = vmatpush1.msra.mxu0 0.0
        %762 = vmatprep.subr.mxu0 0.0
        %763 = vmatpush1.msra.mxu0 0.0
        %764 = vmatprep.subr.mxu0 0.0
        %765 = vmatpush1.msra.mxu0 0.0
        %766 = vmatprep.subr.mxu0 0.0
        %767 = vmatpush1.msra.mxu0 0.0
        %768 = vmatprep.subr.mxu0 0.0
        %769 = vmatpush1.msra.mxu0 0.0
        %770 = vmatprep.subr.mxu0 0.0
        %771 = vmatpush1.msra.mxu0 0.0
        %772 = vmatprep.subr.mxu0 0.0
        %773 = vmatpush1.msra.mxu0 0.0
        %774 = vmatprep.subr.mxu0 0.0
        %775 = vmatpush1.msra.mxu0 0.0
        %776 = vmatprep.subr.mxu0 0.0
        %777 = vmatpush1.msra.mxu0 0.0
        %778 = vmatprep.mubr.f32.mxu0 0.0
        %779 = vmatmul.mubr.f32.gmra.mrb[0].mxu0 %v641
        %v780 = vpop.f32.mrb[0].mxu0
        %v781 = vadd.f32 0.0, %v780
        %v782 = vpop.f32.mrb[0].mxu0
        %v783 = vadd.f32 0.0, %v782
        %784 = vdwg.mxu0
        %785 = vmatprep.subr.mxu0 0.0
        %786 = vmatpush1.msra.mxu0 %v604
        %787 = vmatprep.subr.mxu0 0.0
        %788 = vmatpush1.msra.mxu0 %v609
        %789 = vmatprep.subr.mxu0 0.0
        %790 = vmatpush1.msra.mxu0 %v614
        %791 = vmatprep.subr.mxu0 0.0
        %792 = vmatpush1.msra.mxu0 %v619
        %793 = vmatprep.subr.mxu0 0.0
        %794 = vmatpush1.msra.mxu0 %v624
        %795 = vmatprep.subr.mxu0 0.0
        %796 = vmatpush1.msra.mxu0 %v629
        %797 = vmatprep.subr.mxu0 0.0
        %798 = vmatpush1.msra.mxu0 %v634
        %799 = vmatprep.subr.mxu0 0.0
        %800 = vmatpush1.msra.mxu0 %v639
        %801 = vmatprep.subr.mxu0 0.0
        %802 = vmatpush1.msra.mxu0 0.0
        %803 = vmatprep.subr.mxu0 0.0
        %804 = vmatpush1.msra.mxu0 0.0
        %805 = vmatprep.subr.mxu0 0.0
        %806 = vmatpush1.msra.mxu0 0.0
        %807 = vmatprep.subr.mxu0 0.0
        %808 = vmatpush1.msra.mxu0 0.0
        %809 = vmatprep.subr.mxu0 0.0
        %810 = vmatpush1.msra.mxu0 0.0
        %811 = vmatprep.subr.mxu0 0.0
        %812 = vmatpush1.msra.mxu0 0.0
        %813 = vmatprep.subr.mxu0 0.0
        %814 = vmatpush1.msra.mxu0 0.0
        %815 = vmatprep.subr.mxu0 0.0
        %816 = vmatpush1.msra.mxu0 0.0
        %817 = vmatprep.subr.mxu0 0.0
        %818 = vmatpush1.msra.mxu0 0.0
        %819 = vmatprep.subr.mxu0 0.0
        %820 = vmatpush1.msra.mxu0 0.0
        %821 = vmatprep.subr.mxu0 0.0
        %822 = vmatpush1.msra.mxu0 0.0
        %823 = vmatprep.subr.mxu0 0.0
        %824 = vmatpush1.msra.mxu0 0.0
        %825 = vmatprep.subr.mxu0 0.0
        %826 = vmatpush1.msra.mxu0 0.0
        %827 = vmatprep.subr.mxu0 0.0
        %828 = vmatpush1.msra.mxu0 0.0
        %829 = vmatprep.subr.mxu0 0.0
        %830 = vmatpush1.msra.mxu0 0.0
        %831 = vmatprep.subr.mxu0 0.0
        %832 = vmatpush1.msra.mxu0 0.0
        %833 = vmatprep.subr.mxu0 0.0
        %834 = vmatpush1.msra.mxu0 0.0
        %835 = vmatprep.subr.mxu0 0.0
        %836 = vmatpush1.msra.mxu0 0.0
        %837 = vmatprep.subr.mxu0 0.0
        %838 = vmatpush1.msra.mxu0 0.0
        %839 = vmatprep.subr.mxu0 0.0
        %840 = vmatpush1.msra.mxu0 0.0
        %841 = vmatprep.subr.mxu0 0.0
        %842 = vmatpush1.msra.mxu0 0.0
        %843 = vmatprep.subr.mxu0 0.0
        %844 = vmatpush1.msra.mxu0 0.0
        %845 = vmatprep.subr.mxu0 0.0
        %846 = vmatpush1.msra.mxu0 0.0
        %847 = vmatprep.subr.mxu0 0.0
        %848 = vmatpush1.msra.mxu0 0.0
        %849 = vmatprep.mubr.f32.mxu0 0.0
        %850 = vmatmul.mubr.f32.gmra.mrb[0].mxu0 %v641
        %v851 = vpop.f32.mrb[0].mxu0
        %v852 = vadd.f32 0.0, %v851
        %v853 = vpop.f32.mrb[0].mxu0
        %854 = vdwg.mxu0
        %v855 = vld [vmem:[%s11] sm:$0xff]
        %v856 = vld [vmem:[%s11 + $0x8] sm:$0xff]
        %v857 = vld [vmem:[%s11 + $0x10] sm:$0xff]
        %v858 = vld [vmem:[%s11 + $0x18] sm:$0xff]
        %v859 = vld [vmem:[%s11 + $0x20] sm:$0xff]
        %v860 = vld [vmem:[%s11 + $0x28] sm:$0xff]
        %v861 = vld [vmem:[%s11 + $0x30] sm:$0xff]
        %v862 = vld [vmem:[%s11 + $0x38] sm:$0xff]
        %863 = vmatprep.subr.mxu0 0.0
        %864 = vmatpush1.msra.mxu0 %v855
        %865 = vmatprep.subr.mxu0 0.0
        %866 = vmatpush1.msra.mxu0 %v856
        %867 = vmatprep.subr.mxu0 0.0
        %868 = vmatpush1.msra.mxu0 %v857
        %869 = vmatprep.subr.mxu0 0.0
        %870 = vmatpush1.msra.mxu0 %v858
        %871 = vmatprep.subr.mxu0 0.0
        %872 = vmatpush1.msra.mxu0 %v859
        %873 = vmatprep.subr.mxu0 0.0
        %874 = vmatpush1.msra.mxu0 %v860
        %875 = vmatprep.subr.mxu0 0.0
        %876 = vmatpush1.msra.mxu0 %v861
        %877 = vmatprep.subr.mxu0 0.0
        %878 = vmatpush1.msra.mxu0 %v862
        %879 = vmatprep.subr.mxu0 0.0
        %880 = vmatpush1.msra.mxu0 0.0
        %881 = vmatprep.subr.mxu0 0.0
        %882 = vmatpush1.msra.mxu0 0.0
        %883 = vmatprep.subr.mxu0 0.0
        %884 = vmatpush1.msra.mxu0 0.0
        %885 = vmatprep.subr.mxu0 0.0
        %886 = vmatpush1.msra.mxu0 0.0
        %887 = vmatprep.subr.mxu0 0.0
        %888 = vmatpush1.msra.mxu0 0.0
        %889 = vmatprep.subr.mxu0 0.0
        %890 = vmatpush1.msra.mxu0 0.0
        %891 = vmatprep.subr.mxu0 0.0
        %892 = vmatpush1.msra.mxu0 0.0
        %893 = vmatprep.subr.mxu0 0.0
        %894 = vmatpush1.msra.mxu0 0.0
        %895 = vmatprep.subr.mxu0 0.0
        %896 = vmatpush1.msra.mxu0 0.0
        %897 = vmatprep.subr.mxu0 0.0
        %898 = vmatpush1.msra.mxu0 0.0
        %899 = vmatprep.subr.mxu0 0.0
        %900 = vmatpush1.msra.mxu0 0.0
        %901 = vmatprep.subr.mxu0 0.0
        %902 = vmatpush1.msra.mxu0 0.0
        %903 = vmatprep.subr.mxu0 0.0
        %904 = vmatpush1.msra.mxu0 0.0
        %905 = vmatprep.subr.mxu0 0.0
        %906 = vmatpush1.msra.mxu0 0.0
        %907 = vmatprep.subr.mxu0 0.0
        %908 = vmatpush1.msra.mxu0 0.0
        %909 = vmatprep.subr.mxu0 0.0
        %910 = vmatpush1.msra.mxu0 0.0
        %911 = vmatprep.subr.mxu0 0.0
        %912 = vmatpush1.msra.mxu0 0.0
        %913 = vmatprep.subr.mxu0 0.0
        %914 = vmatpush1.msra.mxu0 0.0
        %915 = vmatprep.subr.mxu0 0.0
        %916 = vmatpush1.msra.mxu0 0.0
        %917 = vmatprep.subr.mxu0 0.0
        %918 = vmatpush1.msra.mxu0 0.0
        %919 = vmatprep.subr.mxu0 0.0
        %920 = vmatpush1.msra.mxu0 0.0
        %921 = vmatprep.subr.mxu0 0.0
        %922 = vmatpush1.msra.mxu0 0.0
        %923 = vmatprep.subr.mxu0 0.0
        %924 = vmatpush1.msra.mxu0 0.0
        %925 = vmatprep.subr.mxu0 0.0
        %926 = vmatpush1.msra.mxu0 0.0
        %927 = vmatprep.mubr.f32.mxu0 0.0
        %928 = vmatmul.mubr.f32.gmra.mrb[0].mxu0 %v525
        %v929 = vpop.f32.mrb[0].mxu0
        %v930 = vadd.f32 0.0, %v929
        %v931 = vpop.f32.mrb[0].mxu0
        %932 = vdwg.mxu0
        %vm933 = vcmp.ge.f32.partialorder %v930, 0.0
        %v934 = vmul.f32 %v930, 0.1
        %v935 = vsel %vm933, %v930, %v934
        %v936 = vld [vmem:[%s12] sm:$0xff]
        %vm937 = vcmask 64512
        %v939 = vsel %vm937, %v935, 0
        %941 = vmatprep.subr.mxu0 0.0
        %942 = vmatpush1.msra.mxu0 %v936
        %943 = vmatprep.subr.mxu0 0.0
        %944 = vmatpush1.msra.mxu0 0.0
        %945 = vmatprep.subr.mxu0 0.0
        %946 = vmatpush1.msra.mxu0 0.0
        %947 = vmatprep.subr.mxu0 0.0
        %948 = vmatpush1.msra.mxu0 0.0
        %949 = vmatprep.subr.mxu0 0.0
        %950 = vmatpush1.msra.mxu0 0.0
        %951 = vmatprep.subr.mxu0 0.0
        %952 = vmatpush1.msra.mxu0 0.0
        %953 = vmatprep.subr.mxu0 0.0
        %954 = vmatpush1.msra.mxu0 0.0
        %955 = vmatprep.subr.mxu0 0.0
        %956 = vmatpush1.msra.mxu0 0.0
        %957 = vmatprep.subr.mxu0 0.0
        %958 = vmatpush1.msra.mxu0 0.0
        %959 = vmatprep.subr.mxu0 0.0
        %960 = vmatpush1.msra.mxu0 0.0
        %961 = vmatprep.subr.mxu0 0.0
        %962 = vmatpush1.msra.mxu0 0.0
        %963 = vmatprep.subr.mxu0 0.0
        %964 = vmatpush1.msra.mxu0 0.0
        %965 = vmatprep.subr.mxu0 0.0
        %966 = vmatpush1.msra.mxu0 0.0
        %967 = vmatprep.subr.mxu0 0.0
        %968 = vmatpush1.msra.mxu0 0.0
        %969 = vmatprep.subr.mxu0 0.0
        %970 = vmatpush1.msra.mxu0 0.0
        %971 = vmatprep.subr.mxu0 0.0
        %972 = vmatpush1.msra.mxu0 0.0
        %973 = vmatprep.subr.mxu0 0.0
        %974 = vmatpush1.msra.mxu0 0.0
        %975 = vmatprep.subr.mxu0 0.0
        %976 = vmatpush1.msra.mxu0 0.0
        %977 = vmatprep.subr.mxu0 0.0
        %978 = vmatpush1.msra.mxu0 0.0
        %979 = vmatprep.subr.mxu0 0.0
        %980 = vmatpush1.msra.mxu0 0.0
        %981 = vmatprep.subr.mxu0 0.0
        %982 = vmatpush1.msra.mxu0 0.0
        %983 = vmatprep.subr.mxu0 0.0
        %984 = vmatpush1.msra.mxu0 0.0
        %985 = vmatprep.subr.mxu0 0.0
        %986 = vmatpush1.msra.mxu0 0.0
        %987 = vmatprep.subr.mxu0 0.0
        %988 = vmatpush1.msra.mxu0 0.0
        %989 = vmatprep.subr.mxu0 0.0
        %990 = vmatpush1.msra.mxu0 0.0
        %991 = vmatprep.subr.mxu0 0.0
        %992 = vmatpush1.msra.mxu0 0.0
        %993 = vmatprep.subr.mxu0 0.0
        %994 = vmatpush1.msra.mxu0 0.0
        %995 = vmatprep.subr.mxu0 0.0
        %996 = vmatpush1.msra.mxu0 0.0
        %997 = vmatprep.subr.mxu0 0.0
        %998 = vmatpush1.msra.mxu0 0.0
        %999 = vmatprep.subr.mxu0 0.0
        %1000 = vmatpush1.msra.mxu0 0.0
        %1001 = vmatprep.subr.mxu0 0.0
        %1002 = vmatpush1.msra.mxu0 0.0
        %1003 = vmatprep.subr.mxu0 0.0
        %1004 = vmatpush1.msra.mxu0 0.0
        %1005 = vmatprep.mubr.f32.mxu0 0.0
        %1006 = vmatmul.mubr.f32.gmra.mrb[0].mxu0 %v939
        %v1007 = vpop.f32.mrb[0].mxu0
        %v1008 = vadd.f32 0.0, %v1007
        %v1009 = vpop.f32.mrb[0].mxu0
        %1010 = vdwg.mxu0
        %v1011 = vxor.u32 %v1008, 2147483648
        %v1012 = vmul.f32 %v1011, 1.442695
        %v1013 = vpow.pop %v1012
        %v1014 = vadd.f32 %v1013, 1.0
        %v1015 = vrcp.pop %v1014
        %v1016 = vmul.f32 1.0, %v1015
        %v1017 = vld [vmem:[%s510] sm:$0xff]
        %v1018 = vld [vmem:[%s510 + $0x8] sm:$0xff]
        %v1019 = vld [vmem:[%s510 + $0x10] sm:$0xff]
        %v1020 = vld [vmem:[%s510 + $0x18] sm:$0xff]
        %v1021 = vld [vmem:[%s510 + $0x20] sm:$0xff]
        %v1022 = vld [vmem:[%s510 + $0x28] sm:$0xff]
        %v1023 = vld [vmem:[%s510 + $0x30] sm:$0xff]
        %v1024 = vld [vmem:[%s510 + $0x38] sm:$0xff]
        %v1025 = vld [vmem:[%s5] sm:$0xff]
        %v1026 = vld [vmem:[%s5 + $0x8] sm:$0xff]
        %v1027 = vld [vmem:[%s5 + $0x10] sm:$0xff]
        %v1028 = vld [vmem:[%s5 + $0x18] sm:$0xff]
        %v1029 = vld [vmem:[%s5 + $0x20] sm:$0xff]
        %v1030 = vld [vmem:[%s5 + $0x28] sm:$0xff]
        %v1031 = vld [vmem:[%s5 + $0x30] sm:$0xff]
        %v1032 = vld [vmem:[%s5 + $0x38] sm:$0xff]
        %v1033 = vld [vmem:[%s6] sm:$0x1]
        %v1035 = vlaneseq
        %v1036 = vshrl.u32 %v1035, 7
        %v1037 = vsub.s32 0, %v1036
        %v1038 = vrot.slane %v1033, %v1037
        %v1041 = vsel %vm523, %v1017, 0
        %v1044 = vsel %vm523, %v1018, 0
        %v1047 = vsel %vm523, %v1019, 0
        %v1050 = vsel %vm523, %v1020, 0
        %v1053 = vsel %vm523, %v1021, 0
        %v1056 = vsel %vm523, %v1022, 0
        %v1059 = vsel %vm523, %v1023, 0
        %v1062 = vsel %vm523, %v1024, 0
        %1064 = vmatprep.subr.mxu0 0.0
        %1065 = vmatpush1.msra.mxu0 %v1025
        %1066 = vmatprep.subr.mxu0 0.0
        %1067 = vmatpush1.msra.mxu0 %v1026
        %1068 = vmatprep.subr.mxu0 0.0
        %1069 = vmatpush1.msra.mxu0 %v1027
        %1070 = vmatprep.subr.mxu0 0.0
        %1071 = vmatpush1.msra.mxu0 %v1028
        %1072 = vmatprep.subr.mxu0 0.0
        %1073 = vmatpush1.msra.mxu0 %v1029
        %1074 = vmatprep.subr.mxu0 0.0
        %1075 = vmatpush1.msra.mxu0 %v1030
        %1076 = vmatprep.subr.mxu0 0.0
        %1077 = vmatpush1.msra.mxu0 %v1031
        %1078 = vmatprep.subr.mxu0 0.0
        %1079 = vmatpush1.msra.mxu0 %v1032
        %1080 = vmatprep.subr.mxu0 0.0
        %1081 = vmatpush1.msra.mxu0 0.0
        %1082 = vmatprep.subr.mxu0 0.0
        %1083 = vmatpush1.msra.mxu0 0.0
        %1084 = vmatprep.subr.mxu0 0.0
        %1085 = vmatpush1.msra.mxu0 0.0
        %1086 = vmatprep.subr.mxu0 0.0
        %1087 = vmatpush1.msra.mxu0 0.0
        %1088 = vmatprep.subr.mxu0 0.0
        %1089 = vmatpush1.msra.mxu0 0.0
        %1090 = vmatprep.subr.mxu0 0.0
        %1091 = vmatpush1.msra.mxu0 0.0
        %1092 = vmatprep.subr.mxu0 0.0
        %1093 = vmatpush1.msra.mxu0 0.0
        %1094 = vmatprep.subr.mxu0 0.0
        %1095 = vmatpush1.msra.mxu0 0.0
        %1096 = vmatprep.subr.mxu0 0.0
        %1097 = vmatpush1.msra.mxu0 0.0
        %1098 = vmatprep.subr.mxu0 0.0
        %1099 = vmatpush1.msra.mxu0 0.0
        %1100 = vmatprep.subr.mxu0 0.0
        %1101 = vmatpush1.msra.mxu0 0.0
        %1102 = vmatprep.subr.mxu0 0.0
        %1103 = vmatpush1.msra.mxu0 0.0
        %1104 = vmatprep.subr.mxu0 0.0
        %1105 = vmatpush1.msra.mxu0 0.0
        %1106 = vmatprep.subr.mxu0 0.0
        %1107 = vmatpush1.msra.mxu0 0.0
        %1108 = vmatprep.subr.mxu0 0.0
        %1109 = vmatpush1.msra.mxu0 0.0
        %1110 = vmatprep.subr.mxu0 0.0
        %1111 = vmatpush1.msra.mxu0 0.0
        %1112 = vmatprep.subr.mxu0 0.0
        %1113 = vmatpush1.msra.mxu0 0.0
        %1114 = vmatprep.subr.mxu0 0.0
        %1115 = vmatpush1.msra.mxu0 0.0
        %1116 = vmatprep.subr.mxu0 0.0
        %1117 = vmatpush1.msra.mxu0 0.0
        %1118 = vmatprep.subr.mxu0 0.0
        %1119 = vmatpush1.msra.mxu0 0.0
        %1120 = vmatprep.subr.mxu0 0.0
        %1121 = vmatpush1.msra.mxu0 0.0
        %1122 = vmatprep.subr.mxu0 0.0
        %1123 = vmatpush1.msra.mxu0 0.0
        %1124 = vmatprep.subr.mxu0 0.0
        %1125 = vmatpush1.msra.mxu0 0.0
        %1126 = vmatprep.subr.mxu0 0.0
        %1127 = vmatpush1.msra.mxu0 0.0
        %1128 = vmatprep.mubr.f32.mxu0 0.0
        %1129 = vmatmul.mubr.f32.gmra.mrb[0].mxu0 %v1041
        %v1130 = vpop.f32.mrb[0].mxu0
        %v1131 = vadd.f32 %v1038, %v1130
        %v1132 = vpop.f32.mrb[0].mxu0
        %1133 = vmatprep.mubr.f32.mxu0 0.0
        %1134 = vmatmul.mubr.f32.gmra.mrb[0].mxu0 %v1044
        %v1135 = vpop.f32.mrb[0].mxu0
        %v1136 = vadd.f32 %v1038, %v1135
        %v1137 = vpop.f32.mrb[0].mxu0
        %1138 = vmatprep.mubr.f32.mxu0 0.0
        %1139 = vmatmul.mubr.f32.gmra.mrb[0].mxu0 %v1047
        %v1140 = vpop.f32.mrb[0].mxu0
        %v1141 = vadd.f32 %v1038, %v1140
        %v1142 = vpop.f32.mrb[0].mxu0
        %1143 = vmatprep.mubr.f32.mxu0 0.0
        %1144 = vmatmul.mubr.f32.gmra.mrb[0].mxu0 %v1050
        %v1145 = vpop.f32.mrb[0].mxu0
        %v1146 = vadd.f32 %v1038, %v1145
        %v1147 = vpop.f32.mrb[0].mxu0
        %1148 = vmatprep.mubr.f32.mxu0 0.0
        %1149 = vmatmul.mubr.f32.gmra.mrb[0].mxu0 %v1053
        %v1150 = vpop.f32.mrb[0].mxu0
        %v1151 = vadd.f32 %v1038, %v1150
        %v1152 = vpop.f32.mrb[0].mxu0
        %1153 = vmatprep.mubr.f32.mxu0 0.0
        %1154 = vmatmul.mubr.f32.gmra.mrb[0].mxu0 %v1056
        %v1155 = vpop.f32.mrb[0].mxu0
        %v1156 = vadd.f32 %v1038, %v1155
        %v1157 = vpop.f32.mrb[0].mxu0
        %1158 = vmatprep.mubr.f32.mxu0 0.0
        %1159 = vmatmul.mubr.f32.gmra.mrb[0].mxu0 %v1059
        %v1160 = vpop.f32.mrb[0].mxu0
        %v1161 = vadd.f32 %v1038, %v1160
        %v1162 = vpop.f32.mrb[0].mxu0
        %1163 = vmatprep.mubr.f32.mxu0 0.0
        %1164 = vmatmul.mubr.f32.gmra.mrb[0].mxu0 %v1062
        %v1165 = vpop.f32.mrb[0].mxu0
        %v1166 = vadd.f32 %v1038, %v1165
        %v1167 = vpop.f32.mrb[0].mxu0
        %1168 = vdwg.mxu0
        %vm1169 = vcmp.ge.f32.partialorder %v1131, 0.0
        %vm1170 = vcmp.ge.f32.partialorder %v1136, 0.0
        %vm1171 = vcmp.ge.f32.partialorder %v1141, 0.0
        %vm1172 = vcmp.ge.f32.partialorder %v1146, 0.0
        %vm1173 = vcmp.ge.f32.partialorder %v1151, 0.0
        %vm1174 = vcmp.ge.f32.partialorder %v1156, 0.0
        %vm1175 = vcmp.ge.f32.partialorder %v1161, 0.0
        %vm1176 = vcmp.ge.f32.partialorder %v1166, 0.0
        %v1177 = vmul.f32 %v1131, 0.1
        %v1178 = vmul.f32 %v1136, 0.1
        %v1179 = vmul.f32 %v1141, 0.1
        %v1180 = vmul.f32 %v1146, 0.1
        %v1181 = vmul.f32 %v1151, 0.1
        %v1182 = vmul.f32 %v1156, 0.1
        %v1183 = vmul.f32 %v1161, 0.1
        %v1184 = vmul.f32 %v1166, 0.1
        %v1185 = vsel %vm1169, %v1131, %v1177
        %v1186 = vsel %vm1170, %v1136, %v1178
        %v1187 = vsel %vm1171, %v1141, %v1179
        %v1188 = vsel %vm1172, %v1146, %v1180
        %v1189 = vsel %vm1173, %v1151, %v1181
        %v1190 = vsel %vm1174, %v1156, %v1182
        %v1191 = vsel %vm1175, %v1161, %v1183
        %v1192 = vsel %vm1176, %v1166, %v1184
        %v1193 = vld [vmem:[%s7] sm:$0xff]
        %v1194 = vld [vmem:[%s7 + $0x8] sm:$0xff]
        %v1195 = vld [vmem:[%s7 + $0x10] sm:$0xff]
        %v1196 = vld [vmem:[%s7 + $0x18] sm:$0xff]
        %v1197 = vld [vmem:[%s7 + $0x20] sm:$0xff]
        %v1198 = vld [vmem:[%s7 + $0x28] sm:$0xff]
        %v1199 = vld [vmem:[%s7 + $0x30] sm:$0xff]
        %v1200 = vld [vmem:[%s7 + $0x38] sm:$0xff]
        %v1201 = vld [vmem:[%s8] sm:$0x1]
        %v1203 = vlaneseq
        %v1204 = vshrl.u32 %v1203, 7
        %v1205 = vsub.s32 0, %v1204
        %v1206 = vrot.slane %v1201, %v1205
        %v1209 = vsel %vm523, %v1185, 0
        %v1212 = vsel %vm523, %v1186, 0
        %v1215 = vsel %vm523, %v1187, 0
        %v1218 = vsel %vm523, %v1188, 0
        %v1221 = vsel %vm523, %v1189, 0
        %v1224 = vsel %vm523, %v1190, 0
        %v1227 = vsel %vm523, %v1191, 0
        %v1230 = vsel %vm523, %v1192, 0
        %1232 = vmatprep.subr.mxu0 0.0
        %1233 = vmatpush1.msra.mxu0 %v1193
        %1234 = vmatprep.subr.mxu0 0.0
        %1235 = vmatpush1.msra.mxu0 %v1194
        %1236 = vmatprep.subr.mxu0 0.0
        %1237 = vmatpush1.msra.mxu0 %v1195
        %1238 = vmatprep.subr.mxu0 0.0
        %1239 = vmatpush1.msra.mxu0 %v1196
        %1240 = vmatprep.subr.mxu0 0.0
        %1241 = vmatpush1.msra.mxu0 %v1197
        %1242 = vmatprep.subr.mxu0 0.0
        %1243 = vmatpush1.msra.mxu0 %v1198
        %1244 = vmatprep.subr.mxu0 0.0
        %1245 = vmatpush1.msra.mxu0 %v1199
        %1246 = vmatprep.subr.mxu0 0.0
        %1247 = vmatpush1.msra.mxu0 %v1200
        %1248 = vmatprep.subr.mxu0 0.0
        %1249 = vmatpush1.msra.mxu0 0.0
        %1250 = vmatprep.subr.mxu0 0.0
        %1251 = vmatpush1.msra.mxu0 0.0
        %1252 = vmatprep.subr.mxu0 0.0
        %1253 = vmatpush1.msra.mxu0 0.0
        %1254 = vmatprep.subr.mxu0 0.0
        %1255 = vmatpush1.msra.mxu0 0.0
        %1256 = vmatprep.subr.mxu0 0.0
        %1257 = vmatpush1.msra.mxu0 0.0
        %1258 = vmatprep.subr.mxu0 0.0
        %1259 = vmatpush1.msra.mxu0 0.0
        %1260 = vmatprep.subr.mxu0 0.0
        %1261 = vmatpush1.msra.mxu0 0.0
        %1262 = vmatprep.subr.mxu0 0.0
        %1263 = vmatpush1.msra.mxu0 0.0
        %1264 = vmatprep.subr.mxu0 0.0
        %1265 = vmatpush1.msra.mxu0 0.0
        %1266 = vmatprep.subr.mxu0 0.0
        %1267 = vmatpush1.msra.mxu0 0.0
        %1268 = vmatprep.subr.mxu0 0.0
        %1269 = vmatpush1.msra.mxu0 0.0
        %1270 = vmatprep.subr.mxu0 0.0
        %1271 = vmatpush1.msra.mxu0 0.0
        %1272 = vmatprep.subr.mxu0 0.0
        %1273 = vmatpush1.msra.mxu0 0.0
        %1274 = vmatprep.subr.mxu0 0.0
        %1275 = vmatpush1.msra.mxu0 0.0
        %1276 = vmatprep.subr.mxu0 0.0
        %1277 = vmatpush1.msra.mxu0 0.0
        %1278 = vmatprep.subr.mxu0 0.0
        %1279 = vmatpush1.msra.mxu0 0.0
        %1280 = vmatprep.subr.mxu0 0.0
        %1281 = vmatpush1.msra.mxu0 0.0
        %1282 = vmatprep.subr.mxu0 0.0
        %1283 = vmatpush1.msra.mxu0 0.0
        %1284 = vmatprep.subr.mxu0 0.0
        %1285 = vmatpush1.msra.mxu0 0.0
        %1286 = vmatprep.subr.mxu0 0.0
        %1287 = vmatpush1.msra.mxu0 0.0
        %1288 = vmatprep.subr.mxu0 0.0
        %1289 = vmatpush1.msra.mxu0 0.0
        %1290 = vmatprep.subr.mxu0 0.0
        %1291 = vmatpush1.msra.mxu0 0.0
        %1292 = vmatprep.subr.mxu0 0.0
        %1293 = vmatpush1.msra.mxu0 0.0
        %1294 = vmatprep.subr.mxu0 0.0
        %1295 = vmatpush1.msra.mxu0 0.0
        %1296 = vmatprep.mubr.f32.mxu0 0.0
        %1297 = vmatmul.mubr.f32.gmra.mrb[0].mxu0 %v1209
        %v1298 = vpop.f32.mrb[0].mxu0
        %v1299 = vadd.f32 %v1206, %v1298
        %v1300 = vpop.f32.mrb[0].mxu0
        %1301 = vmatprep.mubr.f32.mxu0 0.0
        %1302 = vmatmul.mubr.f32.gmra.mrb[0].mxu0 %v1212
        %v1303 = vpop.f32.mrb[0].mxu0
        %v1304 = vadd.f32 %v1206, %v1303
        %v1305 = vpop.f32.mrb[0].mxu0
        %1306 = vmatprep.mubr.f32.mxu0 0.0
        %1307 = vmatmul.mubr.f32.gmra.mrb[0].mxu0 %v1215
        %v1308 = vpop.f32.mrb[0].mxu0
        %v1309 = vadd.f32 %v1206, %v1308
        %v1310 = vpop.f32.mrb[0].mxu0
        %1311 = vmatprep.mubr.f32.mxu0 0.0
        %1312 = vmatmul.mubr.f32.gmra.mrb[0].mxu0 %v1218
        %v1313 = vpop.f32.mrb[0].mxu0
        %v1314 = vadd.f32 %v1206, %v1313
        %v1315 = vpop.f32.mrb[0].mxu0
        %1316 = vmatprep.mubr.f32.mxu0 0.0
        %1317 = vmatmul.mubr.f32.gmra.mrb[0].mxu0 %v1221
        %v1318 = vpop.f32.mrb[0].mxu0
        %v1319 = vadd.f32 %v1206, %v1318
        %v1320 = vpop.f32.mrb[0].mxu0
        %1321 = vmatprep.mubr.f32.mxu0 0.0
        %1322 = vmatmul.mubr.f32.gmra.mrb[0].mxu0 %v1224
        %v1323 = vpop.f32.mrb[0].mxu0
        %v1324 = vadd.f32 %v1206, %v1323
        %v1325 = vpop.f32.mrb[0].mxu0
        %1326 = vmatprep.mubr.f32.mxu0 0.0
        %1327 = vmatmul.mubr.f32.gmra.mrb[0].mxu0 %v1227
        %v1328 = vpop.f32.mrb[0].mxu0
        %v1329 = vadd.f32 %v1206, %v1328
        %v1330 = vpop.f32.mrb[0].mxu0
        %1331 = vmatprep.mubr.f32.mxu0 0.0
        %1332 = vmatmul.mubr.f32.gmra.mrb[0].mxu0 %v1230
        %v1333 = vpop.f32.mrb[0].mxu0
        %v1334 = vadd.f32 %v1206, %v1333
        %v1335 = vpop.f32.mrb[0].mxu0
        %1336 = vdwg.mxu0
        %v1337 = vld [vmem:[%s505] sm:$0xff]
        %v1338 = vld [vmem:[%s505 + $0x10] sm:$0xff]
        %v1339 = vld [vmem:[%s505 + $0x20] sm:$0xff]
        %v1340 = vld [vmem:[%s505 + $0x30] sm:$0xff]
        %v1341 = vld [vmem:[%s505 + $0x40] sm:$0xff]
        %v1342 = vld [vmem:[%s505 + $0x50] sm:$0xff]
        %v1343 = vld [vmem:[%s505 + $0x60] sm:$0xff]
        %v1344 = vld [vmem:[%s505 + $0x70] sm:$0xff]
        %v1345 = vlaneseq
        %v1346 = vshrl.u32 %v1345, 7
        %v1347 = vsub.s32 0, %v1346
        %v1348 = vrot.slane %v710, %v1347
        %v1349 = vmul.f32 %v1337, %v1348
        %v1350 = vmul.f32 %v1338, %v1348
        %v1351 = vmul.f32 %v1339, %v1348
        %v1352 = vmul.f32 %v1340, %v1348
        %v1353 = vmul.f32 %v1341, %v1348
        %v1354 = vmul.f32 %v1342, %v1348
        %v1355 = vmul.f32 %v1343, %v1348
        %v1356 = vmul.f32 %v1344, %v1348
        %1358 = vset.pattern.permute.xlu0 0
        %1359 = vperm.xlu0 %1358, %v1299
        %v1360 = vpop.permute.xlu0 %1359
        %1363 = vset.pattern.permute.xlu0 0
        %1364 = vperm.xlu0 %1363, %v1304
        %v1365 = vpop.permute.xlu0 %1364
        %1368 = vset.pattern.permute.xlu0 0
        %1369 = vperm.xlu0 %1368, %v1309
        %v1370 = vpop.permute.xlu0 %1369
        %1373 = vset.pattern.permute.xlu0 0
        %1374 = vperm.xlu0 %1373, %v1314
        %v1375 = vpop.permute.xlu0 %1374
        %1378 = vset.pattern.permute.xlu0 0
        %1379 = vperm.xlu0 %1378, %v1319
        %v1380 = vpop.permute.xlu0 %1379
        %1383 = vset.pattern.permute.xlu0 0
        %1384 = vperm.xlu0 %1383, %v1324
        %v1385 = vpop.permute.xlu0 %1384
        %1388 = vset.pattern.permute.xlu0 0
        %1389 = vperm.xlu0 %1388, %v1329
        %v1390 = vpop.permute.xlu0 %1389
        %1393 = vset.pattern.permute.xlu0 0
        %1394 = vperm.xlu0 %1393, %v1334
        %v1395 = vpop.permute.xlu0 %1394
        %v1397 = vmul.f32 %v1349, %v1360
        %v1398 = vmul.f32 %v1350, %v1365
        %v1399 = vmul.f32 %v1351, %v1370
        %v1400 = vmul.f32 %v1352, %v1375
        %v1401 = vmul.f32 %v1353, %v1380
        %v1402 = vmul.f32 %v1354, %v1385
        %v1403 = vmul.f32 %v1355, %v1390
        %v1404 = vmul.f32 %v1356, %v1395
        %v1405 = vadd.f32 %v1397, 0.0
        %v1406 = vadd.f32 %v1398, 0.0
        %v1407 = vadd.f32 %v1399, 0.0
        %v1408 = vadd.f32 %v1400, 0.0
        %v1409 = vadd.f32 %v1401, 0.0
        %v1410 = vadd.f32 %v1402, 0.0
        %v1411 = vadd.f32 %v1403, 0.0
        %v1412 = vadd.f32 %v1404, 0.0
        %v1413 = vld [vmem:[%s505 + $0x1] sm:$0xff]
        %v1414 = vld [vmem:[%s505 + $0x11] sm:$0xff]
        %v1415 = vld [vmem:[%s505 + $0x21] sm:$0xff]
        %v1416 = vld [vmem:[%s505 + $0x31] sm:$0xff]
        %v1417 = vld [vmem:[%s505 + $0x41] sm:$0xff]
        %v1418 = vld [vmem:[%s505 + $0x51] sm:$0xff]
        %v1419 = vld [vmem:[%s505 + $0x61] sm:$0xff]
        %v1420 = vld [vmem:[%s505 + $0x71] sm:$0xff]
        %1422 = vrot.lane.b32.xlu0 %v1348, 64
        %v1423 = vpop.permute.xlu0 %1422
        %v1425 = vmul.f32 %v1413, %v1423
        %v1426 = vmul.f32 %v1414, %v1423
        %v1427 = vmul.f32 %v1415, %v1423
        %v1428 = vmul.f32 %v1416, %v1423
        %v1429 = vmul.f32 %v1417, %v1423
        %v1430 = vmul.f32 %v1418, %v1423
        %v1431 = vmul.f32 %v1419, %v1423
        %v1432 = vmul.f32 %v1420, %v1423
        %1433 = vset.pattern.permute.xlu0 1
        %1434 = vperm.xlu0 %1433, %v1299
        %v1435 = vpop.permute.xlu0 %1434
        %1437 = vset.pattern.permute.xlu0 1
        %1438 = vperm.xlu0 %1437, %v1304
        %v1439 = vpop.permute.xlu0 %1438
        %1441 = vset.pattern.permute.xlu0 1
        %1442 = vperm.xlu0 %1441, %v1309
        %v1443 = vpop.permute.xlu0 %1442
        %1445 = vset.pattern.permute.xlu0 1
        %1446 = vperm.xlu0 %1445, %v1314
        %v1447 = vpop.permute.xlu0 %1446
        %1449 = vset.pattern.permute.xlu0 1
        %1450 = vperm.xlu0 %1449, %v1319
        %v1451 = vpop.permute.xlu0 %1450
        %1453 = vset.pattern.permute.xlu0 1
        %1454 = vperm.xlu0 %1453, %v1324
        %v1455 = vpop.permute.xlu0 %1454
        %1457 = vset.pattern.permute.xlu0 1
        %1458 = vperm.xlu0 %1457, %v1329
        %v1459 = vpop.permute.xlu0 %1458
        %1461 = vset.pattern.permute.xlu0 1
        %1462 = vperm.xlu0 %1461, %v1334
        %v1463 = vpop.permute.xlu0 %1462
        %v1465 = vmul.f32 %v1425, %v1435
        %v1466 = vmul.f32 %v1426, %v1439
        %v1467 = vmul.f32 %v1427, %v1443
        %v1468 = vmul.f32 %v1428, %v1447
        %v1469 = vmul.f32 %v1429, %v1451
        %v1470 = vmul.f32 %v1430, %v1455
        %v1471 = vmul.f32 %v1431, %v1459
        %v1472 = vmul.f32 %v1432, %v1463
        %v1473 = vadd.f32 %v1405, %v1465
        %v1474 = vadd.f32 %v1406, %v1466
        %v1475 = vadd.f32 %v1407, %v1467
        %v1476 = vadd.f32 %v1408, %v1468
        %v1477 = vadd.f32 %v1409, %v1469
        %v1478 = vadd.f32 %v1410, %v1470
        %v1479 = vadd.f32 %v1411, %v1471
        %v1480 = vadd.f32 %v1412, %v1472
        %v1481 = vld [vmem:[%s505 + $0x2] sm:$0xff]
        %v1482 = vld [vmem:[%s505 + $0x12] sm:$0xff]
        %v1483 = vld [vmem:[%s505 + $0x22] sm:$0xff]
        %v1484 = vld [vmem:[%s505 + $0x32] sm:$0xff]
        %v1485 = vld [vmem:[%s505 + $0x42] sm:$0xff]
        %v1486 = vld [vmem:[%s505 + $0x52] sm:$0xff]
        %v1487 = vld [vmem:[%s505 + $0x62] sm:$0xff]
        %v1488 = vld [vmem:[%s505 + $0x72] sm:$0xff]
        %v1489 = vlaneseq
        %v1490 = vshrl.u32 %v1489, 7
        %v1491 = vsub.s32 0, %v1490
        %v1492 = vrot.slane %v712, %v1491
        %v1493 = vmul.f32 %v1481, %v1492
        %v1494 = vmul.f32 %v1482, %v1492
        %v1495 = vmul.f32 %v1483, %v1492
        %v1496 = vmul.f32 %v1484, %v1492
        %v1497 = vmul.f32 %v1485, %v1492
        %v1498 = vmul.f32 %v1486, %v1492
        %v1499 = vmul.f32 %v1487, %v1492
        %v1500 = vmul.f32 %v1488, %v1492
        %1501 = vset.pattern.permute.xlu0 2
        %1502 = vperm.xlu0 %1501, %v1299
        %v1503 = vpop.permute.xlu0 %1502
        %1505 = vset.pattern.permute.xlu0 2
        %1506 = vperm.xlu0 %1505, %v1304
        %v1507 = vpop.permute.xlu0 %1506
        %1509 = vset.pattern.permute.xlu0 2
        %1510 = vperm.xlu0 %1509, %v1309
        %v1511 = vpop.permute.xlu0 %1510
        %1513 = vset.pattern.permute.xlu0 2
        %1514 = vperm.xlu0 %1513, %v1314
        %v1515 = vpop.permute.xlu0 %1514
        %1517 = vset.pattern.permute.xlu0 2
        %1518 = vperm.xlu0 %1517, %v1319
        %v1519 = vpop.permute.xlu0 %1518
        %1521 = vset.pattern.permute.xlu0 2
        %1522 = vperm.xlu0 %1521, %v1324
        %v1523 = vpop.permute.xlu0 %1522
        %1525 = vset.pattern.permute.xlu0 2
        %1526 = vperm.xlu0 %1525, %v1329
        %v1527 = vpop.permute.xlu0 %1526
        %1529 = vset.pattern.permute.xlu0 2
        %1530 = vperm.xlu0 %1529, %v1334
        %v1531 = vpop.permute.xlu0 %1530
        %v1533 = vmul.f32 %v1493, %v1503
        %v1534 = vmul.f32 %v1494, %v1507
        %v1535 = vmul.f32 %v1495, %v1511
        %v1536 = vmul.f32 %v1496, %v1515
        %v1537 = vmul.f32 %v1497, %v1519
        %v1538 = vmul.f32 %v1498, %v1523
        %v1539 = vmul.f32 %v1499, %v1527
        %v1540 = vmul.f32 %v1500, %v1531
        %v1541 = vadd.f32 %v1473, %v1533
        %v1542 = vadd.f32 %v1474, %v1534
        %v1543 = vadd.f32 %v1475, %v1535
        %v1544 = vadd.f32 %v1476, %v1536
        %v1545 = vadd.f32 %v1477, %v1537
        %v1546 = vadd.f32 %v1478, %v1538
        %v1547 = vadd.f32 %v1479, %v1539
        %v1548 = vadd.f32 %v1480, %v1540
        %s1549 = scalar_lea.vmem %s505, 16
        %v1550 = vld [vmem:[%s1549] sm:$0xff]
        %v1551 = vld [vmem:[%s1549 + $0x10] sm:$0xff]
        %v1552 = vld [vmem:[%s1549 + $0x20] sm:$0xff]
        %v1553 = vld [vmem:[%s1549 + $0x30] sm:$0xff]
        %v1554 = vld [vmem:[%s1549 + $0x40] sm:$0xff]
        %v1555 = vld [vmem:[%s1549 + $0x50] sm:$0xff]
        %v1556 = vld [vmem:[%s1549 + $0x60] sm:$0xff]
        %v1557 = vld [vmem:[%s1549 + $0x70] sm:$0xff]
        %1559 = vrot.lane.b32.xlu0 %v1492, 64
        %v1560 = vpop.permute.xlu0 %1559
        %v1562 = vmul.f32 %v1550, %v1560
        %v1563 = vmul.f32 %v1551, %v1560
        %v1564 = vmul.f32 %v1552, %v1560
        %v1565 = vmul.f32 %v1553, %v1560
        %v1566 = vmul.f32 %v1554, %v1560
        %v1567 = vmul.f32 %v1555, %v1560
        %v1568 = vmul.f32 %v1556, %v1560
        %v1569 = vmul.f32 %v1557, %v1560
        %1570 = vset.pattern.permute.xlu0 3
        %1571 = vperm.xlu0 %1570, %v1299
        %v1572 = vpop.permute.xlu0 %1571
        %1574 = vset.pattern.permute.xlu0 3
        %1575 = vperm.xlu0 %1574, %v1304
        %v1576 = vpop.permute.xlu0 %1575
        %1578 = vset.pattern.permute.xlu0 3
        %1579 = vperm.xlu0 %1578, %v1309
        %v1580 = vpop.permute.xlu0 %1579
        %1582 = vset.pattern.permute.xlu0 3
        %1583 = vperm.xlu0 %1582, %v1314
        %v1584 = vpop.permute.xlu0 %1583
        %1586 = vset.pattern.permute.xlu0 3
        %1587 = vperm.xlu0 %1586, %v1319
        %v1588 = vpop.permute.xlu0 %1587
        %1590 = vset.pattern.permute.xlu0 3
        %1591 = vperm.xlu0 %1590, %v1324
        %v1592 = vpop.permute.xlu0 %1591
        %1594 = vset.pattern.permute.xlu0 3
        %1595 = vperm.xlu0 %1594, %v1329
        %v1596 = vpop.permute.xlu0 %1595
        %1598 = vset.pattern.permute.xlu0 3
        %1599 = vperm.xlu0 %1598, %v1334
        %v1600 = vpop.permute.xlu0 %1599
        %v1602 = vmul.f32 %v1562, %v1572
        %v1603 = vmul.f32 %v1563, %v1576
        %v1604 = vmul.f32 %v1564, %v1580
        %v1605 = vmul.f32 %v1565, %v1584
        %v1606 = vmul.f32 %v1566, %v1588
        %v1607 = vmul.f32 %v1567, %v1592
        %v1608 = vmul.f32 %v1568, %v1596
        %v1609 = vmul.f32 %v1569, %v1600
        %v1610 = vadd.f32 %v1541, %v1602
        %v1611 = vadd.f32 %v1542, %v1603
        %v1612 = vadd.f32 %v1543, %v1604
        %v1613 = vadd.f32 %v1544, %v1605
        %v1614 = vadd.f32 %v1545, %v1606
        %v1615 = vadd.f32 %v1546, %v1607
        %v1616 = vadd.f32 %v1547, %v1608
        %v1617 = vadd.f32 %v1548, %v1609
        %v1618 = vld [vmem:[%s1549 + $0x1] sm:$0xff]
        %v1619 = vld [vmem:[%s1549 + $0x11] sm:$0xff]
        %v1620 = vld [vmem:[%s1549 + $0x21] sm:$0xff]
        %v1621 = vld [vmem:[%s1549 + $0x31] sm:$0xff]
        %v1622 = vld [vmem:[%s1549 + $0x41] sm:$0xff]
        %v1623 = vld [vmem:[%s1549 + $0x51] sm:$0xff]
        %v1624 = vld [vmem:[%s1549 + $0x61] sm:$0xff]
        %v1625 = vld [vmem:[%s1549 + $0x71] sm:$0xff]
        %v1626 = vlaneseq
        %v1627 = vshrl.u32 %v1626, 7
        %v1628 = vsub.s32 0, %v1627
        %v1629 = vrot.slane %v781, %v1628
        %v1630 = vmul.f32 %v1618, %v1629
        %v1631 = vmul.f32 %v1619, %v1629
        %v1632 = vmul.f32 %v1620, %v1629
        %v1633 = vmul.f32 %v1621, %v1629
        %v1634 = vmul.f32 %v1622, %v1629
        %v1635 = vmul.f32 %v1623, %v1629
        %v1636 = vmul.f32 %v1624, %v1629
        %v1637 = vmul.f32 %v1625, %v1629
        %1638 = vset.pattern.permute.xlu0 4
        %1639 = vperm.xlu0 %1638, %v1299
        %v1640 = vpop.permute.xlu0 %1639
        %1642 = vset.pattern.permute.xlu0 4
        %1643 = vperm.xlu0 %1642, %v1304
        %v1644 = vpop.permute.xlu0 %1643
        %1646 = vset.pattern.permute.xlu0 4
        %1647 = vperm.xlu0 %1646, %v1309
        %v1648 = vpop.permute.xlu0 %1647
        %1650 = vset.pattern.permute.xlu0 4
        %1651 = vperm.xlu0 %1650, %v1314
        %v1652 = vpop.permute.xlu0 %1651
        %1654 = vset.pattern.permute.xlu0 4
        %1655 = vperm.xlu0 %1654, %v1319
        %v1656 = vpop.permute.xlu0 %1655
        %1658 = vset.pattern.permute.xlu0 4
        %1659 = vperm.xlu0 %1658, %v1324
        %v1660 = vpop.permute.xlu0 %1659
        %1662 = vset.pattern.permute.xlu0 4
        %1663 = vperm.xlu0 %1662, %v1329
        %v1664 = vpop.permute.xlu0 %1663
        %1666 = vset.pattern.permute.xlu0 4
        %1667 = vperm.xlu0 %1666, %v1334
        %v1668 = vpop.permute.xlu0 %1667
        %v1670 = vmul.f32 %v1630, %v1640
        %v1671 = vmul.f32 %v1631, %v1644
        %v1672 = vmul.f32 %v1632, %v1648
        %v1673 = vmul.f32 %v1633, %v1652
        %v1674 = vmul.f32 %v1634, %v1656
        %v1675 = vmul.f32 %v1635, %v1660
        %v1676 = vmul.f32 %v1636, %v1664
        %v1677 = vmul.f32 %v1637, %v1668
        %v1678 = vadd.f32 %v1610, %v1670
        %v1679 = vadd.f32 %v1611, %v1671
        %v1680 = vadd.f32 %v1612, %v1672
        %v1681 = vadd.f32 %v1613, %v1673
        %v1682 = vadd.f32 %v1614, %v1674
        %v1683 = vadd.f32 %v1615, %v1675
        %v1684 = vadd.f32 %v1616, %v1676
        %v1685 = vadd.f32 %v1617, %v1677
        %v1686 = vld [vmem:[%s1549 + $0x2] sm:$0xff]
        %v1687 = vld [vmem:[%s1549 + $0x12] sm:$0xff]
        %v1688 = vld [vmem:[%s1549 + $0x22] sm:$0xff]
        %v1689 = vld [vmem:[%s1549 + $0x32] sm:$0xff]
        %v1690 = vld [vmem:[%s1549 + $0x42] sm:$0xff]
        %v1691 = vld [vmem:[%s1549 + $0x52] sm:$0xff]
        %v1692 = vld [vmem:[%s1549 + $0x62] sm:$0xff]
        %v1693 = vld [vmem:[%s1549 + $0x72] sm:$0xff]
        %1695 = vrot.lane.b32.xlu0 %v1629, 64
        %v1696 = vpop.permute.xlu0 %1695
        %v1698 = vmul.f32 %v1686, %v1696
        %v1699 = vmul.f32 %v1687, %v1696
        %v1700 = vmul.f32 %v1688, %v1696
        %v1701 = vmul.f32 %v1689, %v1696
        %v1702 = vmul.f32 %v1690, %v1696
        %v1703 = vmul.f32 %v1691, %v1696
        %v1704 = vmul.f32 %v1692, %v1696
        %v1705 = vmul.f32 %v1693, %v1696
        %1706 = vset.pattern.permute.xlu0 5
        %1707 = vperm.xlu0 %1706, %v1299
        %v1708 = vpop.permute.xlu0 %1707
        %1710 = vset.pattern.permute.xlu0 5
        %1711 = vperm.xlu0 %1710, %v1304
        %v1712 = vpop.permute.xlu0 %1711
        %1714 = vset.pattern.permute.xlu0 5
        %1715 = vperm.xlu0 %1714, %v1309
        %v1716 = vpop.permute.xlu0 %1715
        %1718 = vset.pattern.permute.xlu0 5
        %1719 = vperm.xlu0 %1718, %v1314
        %v1720 = vpop.permute.xlu0 %1719
        %1722 = vset.pattern.permute.xlu0 5
        %1723 = vperm.xlu0 %1722, %v1319
        %v1724 = vpop.permute.xlu0 %1723
        %1726 = vset.pattern.permute.xlu0 5
        %1727 = vperm.xlu0 %1726, %v1324
        %v1728 = vpop.permute.xlu0 %1727
        %1730 = vset.pattern.permute.xlu0 5
        %1731 = vperm.xlu0 %1730, %v1329
        %v1732 = vpop.permute.xlu0 %1731
        %1734 = vset.pattern.permute.xlu0 5
        %1735 = vperm.xlu0 %1734, %v1334
        %v1736 = vpop.permute.xlu0 %1735
        %v1738 = vmul.f32 %v1698, %v1708
        %v1739 = vmul.f32 %v1699, %v1712
        %v1740 = vmul.f32 %v1700, %v1716
        %v1741 = vmul.f32 %v1701, %v1720
        %v1742 = vmul.f32 %v1702, %v1724
        %v1743 = vmul.f32 %v1703, %v1728
        %v1744 = vmul.f32 %v1704, %v1732
        %v1745 = vmul.f32 %v1705, %v1736
        %v1746 = vadd.f32 %v1678, %v1738
        %v1747 = vadd.f32 %v1679, %v1739
        %v1748 = vadd.f32 %v1680, %v1740
        %v1749 = vadd.f32 %v1681, %v1741
        %v1750 = vadd.f32 %v1682, %v1742
        %v1751 = vadd.f32 %v1683, %v1743
        %v1752 = vadd.f32 %v1684, %v1744
        %v1753 = vadd.f32 %v1685, %v1745
        %s1754 = scalar_lea.vmem %s505, 32
        %v1755 = vld [vmem:[%s1754] sm:$0xff]
        %v1756 = vld [vmem:[%s1754 + $0x10] sm:$0xff]
        %v1757 = vld [vmem:[%s1754 + $0x20] sm:$0xff]
        %v1758 = vld [vmem:[%s1754 + $0x30] sm:$0xff]
        %v1759 = vld [vmem:[%s1754 + $0x40] sm:$0xff]
        %v1760 = vld [vmem:[%s1754 + $0x50] sm:$0xff]
        %v1761 = vld [vmem:[%s1754 + $0x60] sm:$0xff]
        %v1762 = vld [vmem:[%s1754 + $0x70] sm:$0xff]
        %v1763 = vlaneseq
        %v1764 = vshrl.u32 %v1763, 7
        %v1765 = vsub.s32 0, %v1764
        %v1766 = vrot.slane %v783, %v1765
        %v1767 = vmul.f32 %v1755, %v1766
        %v1768 = vmul.f32 %v1756, %v1766
        %v1769 = vmul.f32 %v1757, %v1766
        %v1770 = vmul.f32 %v1758, %v1766
        %v1771 = vmul.f32 %v1759, %v1766
        %v1772 = vmul.f32 %v1760, %v1766
        %v1773 = vmul.f32 %v1761, %v1766
        %v1774 = vmul.f32 %v1762, %v1766
        %1775 = vset.pattern.permute.xlu0 6
        %1776 = vperm.xlu0 %1775, %v1299
        %v1777 = vpop.permute.xlu0 %1776
        %1779 = vset.pattern.permute.xlu0 6
        %1780 = vperm.xlu0 %1779, %v1304
        %v1781 = vpop.permute.xlu0 %1780
        %1783 = vset.pattern.permute.xlu0 6
        %1784 = vperm.xlu0 %1783, %v1309
        %v1785 = vpop.permute.xlu0 %1784
        %1787 = vset.pattern.permute.xlu0 6
        %1788 = vperm.xlu0 %1787, %v1314
        %v1789 = vpop.permute.xlu0 %1788
        %1791 = vset.pattern.permute.xlu0 6
        %1792 = vperm.xlu0 %1791, %v1319
        %v1793 = vpop.permute.xlu0 %1792
        %1795 = vset.pattern.permute.xlu0 6
        %1796 = vperm.xlu0 %1795, %v1324
        %v1797 = vpop.permute.xlu0 %1796
        %1799 = vset.pattern.permute.xlu0 6
        %1800 = vperm.xlu0 %1799, %v1329
        %v1801 = vpop.permute.xlu0 %1800
        %1803 = vset.pattern.permute.xlu0 6
        %1804 = vperm.xlu0 %1803, %v1334
        %v1805 = vpop.permute.xlu0 %1804
        %v1807 = vmul.f32 %v1767, %v1777
        %v1808 = vmul.f32 %v1768, %v1781
        %v1809 = vmul.f32 %v1769, %v1785
        %v1810 = vmul.f32 %v1770, %v1789
        %v1811 = vmul.f32 %v1771, %v1793
        %v1812 = vmul.f32 %v1772, %v1797
        %v1813 = vmul.f32 %v1773, %v1801
        %v1814 = vmul.f32 %v1774, %v1805
        %v1815 = vadd.f32 %v1746, %v1807
        %v1816 = vadd.f32 %v1747, %v1808
        %v1817 = vadd.f32 %v1748, %v1809
        %v1818 = vadd.f32 %v1749, %v1810
        %v1819 = vadd.f32 %v1750, %v1811
        %v1820 = vadd.f32 %v1751, %v1812
        %v1821 = vadd.f32 %v1752, %v1813
        %v1822 = vadd.f32 %v1753, %v1814
        %v1823 = vld [vmem:[%s1754 + $0x1] sm:$0xff]
        %v1824 = vld [vmem:[%s1754 + $0x11] sm:$0xff]
        %v1825 = vld [vmem:[%s1754 + $0x21] sm:$0xff]
        %v1826 = vld [vmem:[%s1754 + $0x31] sm:$0xff]
        %v1827 = vld [vmem:[%s1754 + $0x41] sm:$0xff]
        %v1828 = vld [vmem:[%s1754 + $0x51] sm:$0xff]
        %v1829 = vld [vmem:[%s1754 + $0x61] sm:$0xff]
        %v1830 = vld [vmem:[%s1754 + $0x71] sm:$0xff]
        %1832 = vrot.lane.b32.xlu0 %v1766, 64
        %v1833 = vpop.permute.xlu0 %1832
        %v1835 = vmul.f32 %v1823, %v1833
        %v1836 = vmul.f32 %v1824, %v1833
        %v1837 = vmul.f32 %v1825, %v1833
        %v1838 = vmul.f32 %v1826, %v1833
        %v1839 = vmul.f32 %v1827, %v1833
        %v1840 = vmul.f32 %v1828, %v1833
        %v1841 = vmul.f32 %v1829, %v1833
        %v1842 = vmul.f32 %v1830, %v1833
        %1843 = vset.pattern.permute.xlu0 7
        %1844 = vperm.xlu0 %1843, %v1299
        %v1845 = vpop.permute.xlu0 %1844
        %1847 = vset.pattern.permute.xlu0 7
        %1848 = vperm.xlu0 %1847, %v1304
        %v1849 = vpop.permute.xlu0 %1848
        %1851 = vset.pattern.permute.xlu0 7
        %1852 = vperm.xlu0 %1851, %v1309
        %v1853 = vpop.permute.xlu0 %1852
        %1855 = vset.pattern.permute.xlu0 7
        %1856 = vperm.xlu0 %1855, %v1314
        %v1857 = vpop.permute.xlu0 %1856
        %1859 = vset.pattern.permute.xlu0 7
        %1860 = vperm.xlu0 %1859, %v1319
        %v1861 = vpop.permute.xlu0 %1860
        %1863 = vset.pattern.permute.xlu0 7
        %1864 = vperm.xlu0 %1863, %v1324
        %v1865 = vpop.permute.xlu0 %1864
        %1867 = vset.pattern.permute.xlu0 7
        %1868 = vperm.xlu0 %1867, %v1329
        %v1869 = vpop.permute.xlu0 %1868
        %1871 = vset.pattern.permute.xlu0 7
        %1872 = vperm.xlu0 %1871, %v1334
        %v1873 = vpop.permute.xlu0 %1872
        %v1875 = vmul.f32 %v1835, %v1845
        %v1876 = vmul.f32 %v1836, %v1849
        %v1877 = vmul.f32 %v1837, %v1853
        %v1878 = vmul.f32 %v1838, %v1857
        %v1879 = vmul.f32 %v1839, %v1861
        %v1880 = vmul.f32 %v1840, %v1865
        %v1881 = vmul.f32 %v1841, %v1869
        %v1882 = vmul.f32 %v1842, %v1873
        %v1883 = vadd.f32 %v1815, %v1875
        %v1884 = vadd.f32 %v1816, %v1876
        %v1885 = vadd.f32 %v1817, %v1877
        %v1886 = vadd.f32 %v1818, %v1878
        %v1887 = vadd.f32 %v1819, %v1879
        %v1888 = vadd.f32 %v1820, %v1880
        %v1889 = vadd.f32 %v1821, %v1881
        %v1890 = vadd.f32 %v1822, %v1882
        %v1891 = vld [vmem:[%s1754 + $0x2] sm:$0xff]
        %v1892 = vld [vmem:[%s1754 + $0x12] sm:$0xff]
        %v1893 = vld [vmem:[%s1754 + $0x22] sm:$0xff]
        %v1894 = vld [vmem:[%s1754 + $0x32] sm:$0xff]
        %v1895 = vld [vmem:[%s1754 + $0x42] sm:$0xff]
        %v1896 = vld [vmem:[%s1754 + $0x52] sm:$0xff]
        %v1897 = vld [vmem:[%s1754 + $0x62] sm:$0xff]
        %v1898 = vld [vmem:[%s1754 + $0x72] sm:$0xff]
        %v1899 = vlaneseq
        %v1900 = vshrl.u32 %v1899, 7
        %v1901 = vsub.s32 0, %v1900
        %v1902 = vrot.slane %v852, %v1901
        %v1903 = vmul.f32 %v1891, %v1902
        %v1904 = vmul.f32 %v1892, %v1902
        %v1905 = vmul.f32 %v1893, %v1902
        %v1906 = vmul.f32 %v1894, %v1902
        %v1907 = vmul.f32 %v1895, %v1902
        %v1908 = vmul.f32 %v1896, %v1902
        %v1909 = vmul.f32 %v1897, %v1902
        %v1910 = vmul.f32 %v1898, %v1902
        %1911 = vset.pattern.permute.xlu0 8
        %1912 = vperm.xlu0 %1911, %v1299
        %v1913 = vpop.permute.xlu0 %1912
        %1915 = vset.pattern.permute.xlu0 8
        %1916 = vperm.xlu0 %1915, %v1304
        %v1917 = vpop.permute.xlu0 %1916
        %1919 = vset.pattern.permute.xlu0 8
        %1920 = vperm.xlu0 %1919, %v1309
        %v1921 = vpop.permute.xlu0 %1920
        %1923 = vset.pattern.permute.xlu0 8
        %1924 = vperm.xlu0 %1923, %v1314
        %v1925 = vpop.permute.xlu0 %1924
        %1927 = vset.pattern.permute.xlu0 8
        %1928 = vperm.xlu0 %1927, %v1319
        %v1929 = vpop.permute.xlu0 %1928
        %1931 = vset.pattern.permute.xlu0 8
        %1932 = vperm.xlu0 %1931, %v1324
        %v1933 = vpop.permute.xlu0 %1932
        %1935 = vset.pattern.permute.xlu0 8
        %1936 = vperm.xlu0 %1935, %v1329
        %v1937 = vpop.permute.xlu0 %1936
        %1939 = vset.pattern.permute.xlu0 8
        %1940 = vperm.xlu0 %1939, %v1334
        %v1941 = vpop.permute.xlu0 %1940
        %v1943 = vmul.f32 %v1903, %v1913
        %v1944 = vmul.f32 %v1904, %v1917
        %v1945 = vmul.f32 %v1905, %v1921
        %v1946 = vmul.f32 %v1906, %v1925
        %v1947 = vmul.f32 %v1907, %v1929
        %v1948 = vmul.f32 %v1908, %v1933
        %v1949 = vmul.f32 %v1909, %v1937
        %v1950 = vmul.f32 %v1910, %v1941
        %v1951 = vadd.f32 %v1883, %v1943
        %v1952 = vadd.f32 %v1884, %v1944
        %v1953 = vadd.f32 %v1885, %v1945
        %v1954 = vadd.f32 %v1886, %v1946
        %v1955 = vadd.f32 %v1887, %v1947
        %v1956 = vadd.f32 %v1888, %v1948
        %v1957 = vadd.f32 %v1889, %v1949
        %v1958 = vadd.f32 %v1890, %v1950
        %v1959 = vld [vmem:[%s9] sm:$0xff]
        %v1960 = vld [vmem:[%s9 + $0x8] sm:$0xff]
        %v1961 = vld [vmem:[%s9 + $0x10] sm:$0xff]
        %v1962 = vld [vmem:[%s9 + $0x18] sm:$0xff]
        %v1963 = vld [vmem:[%s9 + $0x20] sm:$0xff]
        %v1964 = vld [vmem:[%s9 + $0x28] sm:$0xff]
        %v1965 = vld [vmem:[%s9 + $0x30] sm:$0xff]
        %v1966 = vld [vmem:[%s9 + $0x38] sm:$0xff]
        %v1967 = vld [vmem:[%s10] sm:$0x1]
        %v1969 = vlaneseq
        %v1970 = vshrl.u32 %v1969, 7
        %v1971 = vsub.s32 0, %v1970
        %v1972 = vrot.slane %v1967, %v1971
        %v1975 = vsel %vm523, %v1951, 0
        %v1978 = vsel %vm523, %v1952, 0
        %v1981 = vsel %vm523, %v1953, 0
        %v1984 = vsel %vm523, %v1954, 0
        %v1987 = vsel %vm523, %v1955, 0
        %v1990 = vsel %vm523, %v1956, 0
        %v1993 = vsel %vm523, %v1957, 0
        %v1996 = vsel %vm523, %v1958, 0
        %1998 = vmatprep.subr.mxu0 0.0
        %1999 = vmatpush1.msra.mxu0 %v1959
        %2000 = vmatprep.subr.mxu0 0.0
        %2001 = vmatpush1.msra.mxu0 %v1960
        %2002 = vmatprep.subr.mxu0 0.0
        %2003 = vmatpush1.msra.mxu0 %v1961
        %2004 = vmatprep.subr.mxu0 0.0
        %2005 = vmatpush1.msra.mxu0 %v1962
        %2006 = vmatprep.subr.mxu0 0.0
        %2007 = vmatpush1.msra.mxu0 %v1963
        %2008 = vmatprep.subr.mxu0 0.0
        %2009 = vmatpush1.msra.mxu0 %v1964
        %2010 = vmatprep.subr.mxu0 0.0
        %2011 = vmatpush1.msra.mxu0 %v1965
        %2012 = vmatprep.subr.mxu0 0.0
        %2013 = vmatpush1.msra.mxu0 %v1966
        %2014 = vmatprep.subr.mxu0 0.0
        %2015 = vmatpush1.msra.mxu0 0.0
        %2016 = vmatprep.subr.mxu0 0.0
        %2017 = vmatpush1.msra.mxu0 0.0
        %2018 = vmatprep.subr.mxu0 0.0
        %2019 = vmatpush1.msra.mxu0 0.0
        %2020 = vmatprep.subr.mxu0 0.0
        %2021 = vmatpush1.msra.mxu0 0.0
        %2022 = vmatprep.subr.mxu0 0.0
        %2023 = vmatpush1.msra.mxu0 0.0
        %2024 = vmatprep.subr.mxu0 0.0
        %2025 = vmatpush1.msra.mxu0 0.0
        %2026 = vmatprep.subr.mxu0 0.0
        %2027 = vmatpush1.msra.mxu0 0.0
        %2028 = vmatprep.subr.mxu0 0.0
        %2029 = vmatpush1.msra.mxu0 0.0
        %2030 = vmatprep.subr.mxu0 0.0
        %2031 = vmatpush1.msra.mxu0 0.0
        %2032 = vmatprep.subr.mxu0 0.0
        %2033 = vmatpush1.msra.mxu0 0.0
        %2034 = vmatprep.subr.mxu0 0.0
        %2035 = vmatpush1.msra.mxu0 0.0
        %2036 = vmatprep.subr.mxu0 0.0
        %2037 = vmatpush1.msra.mxu0 0.0
        %2038 = vmatprep.subr.mxu0 0.0
        %2039 = vmatpush1.msra.mxu0 0.0
        %2040 = vmatprep.subr.mxu0 0.0
        %2041 = vmatpush1.msra.mxu0 0.0
        %2042 = vmatprep.subr.mxu0 0.0
        %2043 = vmatpush1.msra.mxu0 0.0
        %2044 = vmatprep.subr.mxu0 0.0
        %2045 = vmatpush1.msra.mxu0 0.0
        %2046 = vmatprep.subr.mxu0 0.0
        %2047 = vmatpush1.msra.mxu0 0.0
        %2048 = vmatprep.subr.mxu0 0.0
        %2049 = vmatpush1.msra.mxu0 0.0
        %2050 = vmatprep.subr.mxu0 0.0
        %2051 = vmatpush1.msra.mxu0 0.0
        %2052 = vmatprep.subr.mxu0 0.0
        %2053 = vmatpush1.msra.mxu0 0.0
        %2054 = vmatprep.subr.mxu0 0.0
        %2055 = vmatpush1.msra.mxu0 0.0
        %2056 = vmatprep.subr.mxu0 0.0
        %2057 = vmatpush1.msra.mxu0 0.0
        %2058 = vmatprep.subr.mxu0 0.0
        %2059 = vmatpush1.msra.mxu0 0.0
        %2060 = vmatprep.subr.mxu0 0.0
        %2061 = vmatpush1.msra.mxu0 0.0
        %2062 = vmatprep.mubr.f32.mxu0 0.0
        %2063 = vmatmul.mubr.f32.gmra.mrb[0].mxu0 %v1975
        %v2064 = vpop.f32.mrb[0].mxu0
        %v2065 = vadd.f32 %v1972, %v2064
        %v2066 = vpop.f32.mrb[0].mxu0
        %2067 = vmatprep.mubr.f32.mxu0 0.0
        %2068 = vmatmul.mubr.f32.gmra.mrb[0].mxu0 %v1978
        %v2069 = vpop.f32.mrb[0].mxu0
        %v2070 = vadd.f32 %v1972, %v2069
        %v2071 = vpop.f32.mrb[0].mxu0
        %2072 = vmatprep.mubr.f32.mxu0 0.0
        %2073 = vmatmul.mubr.f32.gmra.mrb[0].mxu0 %v1981
        %v2074 = vpop.f32.mrb[0].mxu0
        %v2075 = vadd.f32 %v1972, %v2074
        %v2076 = vpop.f32.mrb[0].mxu0
        %2077 = vmatprep.mubr.f32.mxu0 0.0
        %2078 = vmatmul.mubr.f32.gmra.mrb[0].mxu0 %v1984
        %v2079 = vpop.f32.mrb[0].mxu0
        %v2080 = vadd.f32 %v1972, %v2079
        %v2081 = vpop.f32.mrb[0].mxu0
        %2082 = vmatprep.mubr.f32.mxu0 0.0
        %2083 = vmatmul.mubr.f32.gmra.mrb[0].mxu0 %v1987
        %v2084 = vpop.f32.mrb[0].mxu0
        %v2085 = vadd.f32 %v1972, %v2084
        %v2086 = vpop.f32.mrb[0].mxu0
        %2087 = vmatprep.mubr.f32.mxu0 0.0
        %2088 = vmatmul.mubr.f32.gmra.mrb[0].mxu0 %v1990
        %v2089 = vpop.f32.mrb[0].mxu0
        %v2090 = vadd.f32 %v1972, %v2089
        %v2091 = vpop.f32.mrb[0].mxu0
        %2092 = vmatprep.mubr.f32.mxu0 0.0
        %2093 = vmatmul.mubr.f32.gmra.mrb[0].mxu0 %v1993
        %v2094 = vpop.f32.mrb[0].mxu0
        %v2095 = vadd.f32 %v1972, %v2094
        %v2096 = vpop.f32.mrb[0].mxu0
        %2097 = vmatprep.mubr.f32.mxu0 0.0
        %2098 = vmatmul.mubr.f32.gmra.mrb[0].mxu0 %v1996
        %v2099 = vpop.f32.mrb[0].mxu0
        %v2100 = vadd.f32 %v1972, %v2099
        %v2101 = vpop.f32.mrb[0].mxu0
        %2102 = vdwg.mxu0
        %v2103 = vld [vmem:[%s505] sm:$0xff]
        %v2104 = vld [vmem:[%s505 + $0x8] sm:$0x3]
        %v2105 = vld [vmem:[%s505 + $0x10] sm:$0xff]
        %v2106 = vld [vmem:[%s505 + $0x18] sm:$0x3]
        %v2107 = vld [vmem:[%s505 + $0x20] sm:$0xff]
        %v2108 = vld [vmem:[%s505 + $0x28] sm:$0x3]
        %v2109 = vld [vmem:[%s505 + $0x30] sm:$0xff]
        %v2110 = vld [vmem:[%s505 + $0x38] sm:$0x3]
        %v2111 = vld [vmem:[%s505 + $0x40] sm:$0xff]
        %v2112 = vld [vmem:[%s505 + $0x48] sm:$0x3]
        %v2113 = vld [vmem:[%s505 + $0x50] sm:$0xff]
        %v2114 = vld [vmem:[%s505 + $0x58] sm:$0x3]
        %v2115 = vld [vmem:[%s505 + $0x60] sm:$0xff]
        %v2116 = vld [vmem:[%s505 + $0x68] sm:$0x3]
        %v2117 = vld [vmem:[%s505 + $0x70] sm:$0xff]
        %v2118 = vld [vmem:[%s505 + $0x78] sm:$0x3]
        %v2119 = vld [vmem:[%s505 + $0x80] sm:$0xff]
        %v2120 = vld [vmem:[%s505 + $0x88] sm:$0x3]
        %v2121 = vld [vmem:[%s505 + $0x90] sm:$0xff]
        %v2122 = vld [vmem:[%s505 + $0x98] sm:$0x3]
        %v2123 = vsel %vm523, %v2103, -inf
        %2124 = vmax.xlane.f32.xlu0 %v2123
        %v2125 = vpop.xlane.xlu0 %2124
        %vm2126 = vcmask 517120
        %v2127 = vsel %vm2126, %v2104, -inf
        %2128 = vmax.xlane.f32.xlu0 %v2127
        %v2129 = vpop.xlane.xlu0 %2128
        %v2130 = vsel %vm523, %v2105, -inf
        %2131 = vmax.xlane.f32.xlu0 %v2130
        %v2132 = vpop.xlane.xlu0 %2131
        %v2133 = vsel %vm2126, %v2106, -inf
        %2134 = vmax.xlane.f32.xlu0 %v2133
        %v2135 = vpop.xlane.xlu0 %2134
        %v2136 = vsel %vm523, %v2107, -inf
        %2137 = vmax.xlane.f32.xlu0 %v2136
        %v2138 = vpop.xlane.xlu0 %2137
        %v2139 = vsel %vm2126, %v2108, -inf
        %2140 = vmax.xlane.f32.xlu0 %v2139
        %v2141 = vpop.xlane.xlu0 %2140
        %v2142 = vsel %vm523, %v2109, -inf
        %2143 = vmax.xlane.f32.xlu0 %v2142
        %v2144 = vpop.xlane.xlu0 %2143
        %v2145 = vsel %vm2126, %v2110, -inf
        %2146 = vmax.xlane.f32.xlu0 %v2145
        %v2147 = vpop.xlane.xlu0 %2146
        %v2148 = vsel %vm523, %v2111, -inf
        %2149 = vmax.xlane.f32.xlu0 %v2148
        %v2150 = vpop.xlane.xlu0 %2149
        %v2151 = vsel %vm2126, %v2112, -inf
        %2152 = vmax.xlane.f32.xlu0 %v2151
        %v2153 = vpop.xlane.xlu0 %2152
        %v2154 = vsel %vm523, %v2113, -inf
        %2155 = vmax.xlane.f32.xlu0 %v2154
        %v2156 = vpop.xlane.xlu0 %2155
        %v2157 = vsel %vm2126, %v2114, -inf
        %2158 = vmax.xlane.f32.xlu0 %v2157
        %v2159 = vpop.xlane.xlu0 %2158
        %v2160 = vsel %vm523, %v2115, -inf
        %2161 = vmax.xlane.f32.xlu0 %v2160
        %v2162 = vpop.xlane.xlu0 %2161
        %v2163 = vsel %vm2126, %v2116, -inf
        %2164 = vmax.xlane.f32.xlu0 %v2163
        %v2165 = vpop.xlane.xlu0 %2164
        %v2166 = vsel %vm523, %v2117, -inf
        %2167 = vmax.xlane.f32.xlu0 %v2166
        %v2168 = vpop.xlane.xlu0 %2167
        %v2169 = vsel %vm2126, %v2118, -inf
        %2170 = vmax.xlane.f32.xlu0 %v2169
        %v2171 = vpop.xlane.xlu0 %2170
        %v2172 = vsel %vm523, %v2119, -inf
        %2173 = vmax.xlane.f32.xlu0 %v2172
        %v2174 = vpop.xlane.xlu0 %2173
        %v2175 = vsel %vm2126, %v2120, -inf
        %2176 = vmax.xlane.f32.xlu0 %v2175
        %v2177 = vpop.xlane.xlu0 %2176
        %v2178 = vsel %vm523, %v2121, -inf
        %2179 = vmax.xlane.f32.xlu0 %v2178
        %v2180 = vpop.xlane.xlu0 %2179
        %v2181 = vsel %vm2126, %v2122, -inf
        %2182 = vmax.xlane.f32.xlu0 %v2181
        %v2183 = vpop.xlane.xlu0 %2182
        %v2184 = vsel %vm523, %v2103, 0.0
        %2185 = vadd.xlane.f32.xlu0 %v2184
        %v2186 = vpop.xlane.xlu0 %2185
        %v2187 = vsel %vm2126, %v2104, 0.0
        %2188 = vadd.xlane.f32.xlu0 %v2187
        %v2189 = vpop.xlane.xlu0 %2188
        %v2190 = vsel %vm523, %v2105, 0.0
        %2191 = vadd.xlane.f32.xlu0 %v2190
        %v2192 = vpop.xlane.xlu0 %2191
        %v2193 = vsel %vm2126, %v2106, 0.0
        %2194 = vadd.xlane.f32.xlu0 %v2193
        %v2195 = vpop.xlane.xlu0 %2194
        %v2196 = vsel %vm523, %v2107, 0.0
        %2197 = vadd.xlane.f32.xlu0 %v2196
        %v2198 = vpop.xlane.xlu0 %2197
        %v2199 = vsel %vm2126, %v2108, 0.0
        %2200 = vadd.xlane.f32.xlu0 %v2199
        %v2201 = vpop.xlane.xlu0 %2200
        %v2202 = vsel %vm523, %v2109, 0.0
        %2203 = vadd.xlane.f32.xlu0 %v2202
        %v2204 = vpop.xlane.xlu0 %2203
        %v2205 = vsel %vm2126, %v2110, 0.0
        %2206 = vadd.xlane.f32.xlu0 %v2205
        %v2207 = vpop.xlane.xlu0 %2206
        %v2208 = vsel %vm523, %v2111, 0.0
        %2209 = vadd.xlane.f32.xlu0 %v2208
        %v2210 = vpop.xlane.xlu0 %2209
        %v2211 = vsel %vm2126, %v2112, 0.0
        %2212 = vadd.xlane.f32.xlu0 %v2211
        %v2213 = vpop.xlane.xlu0 %2212
        %v2214 = vsel %vm523, %v2113, 0.0
        %2215 = vadd.xlane.f32.xlu0 %v2214
        %v2216 = vpop.xlane.xlu0 %2215
        %v2217 = vsel %vm2126, %v2114, 0.0
        %2218 = vadd.xlane.f32.xlu0 %v2217
        %v2219 = vpop.xlane.xlu0 %2218
        %v2220 = vsel %vm523, %v2115, 0.0
        %2221 = vadd.xlane.f32.xlu0 %v2220
        %v2222 = vpop.xlane.xlu0 %2221
        %v2223 = vsel %vm2126, %v2116, 0.0
        %2224 = vadd.xlane.f32.xlu0 %v2223
        %v2225 = vpop.xlane.xlu0 %2224
        %v2226 = vsel %vm523, %v2117, 0.0
        %2227 = vadd.xlane.f32.xlu0 %v2226
        %v2228 = vpop.xlane.xlu0 %2227
        %v2229 = vsel %vm2126, %v2118, 0.0
        %2230 = vadd.xlane.f32.xlu0 %v2229
        %v2231 = vpop.xlane.xlu0 %2230
        %v2232 = vsel %vm523, %v2119, 0.0
        %2233 = vadd.xlane.f32.xlu0 %v2232
        %v2234 = vpop.xlane.xlu0 %2233
        %v2235 = vsel %vm2126, %v2120, 0.0
        %2236 = vadd.xlane.f32.xlu0 %v2235
        %v2237 = vpop.xlane.xlu0 %2236
        %v2238 = vsel %vm523, %v2121, 0.0
        %2239 = vadd.xlane.f32.xlu0 %v2238
        %v2240 = vpop.xlane.xlu0 %2239
        %v2241 = vsel %vm2126, %v2122, 0.0
        %2242 = vadd.xlane.f32.xlu0 %v2241
        %v2243 = vpop.xlane.xlu0 %2242
        %v2244 = vrcp.pop 64.0
        %v2245 = vmul.f32 %v2186, %v2244
        %v2246 = vmul.f32 %v2189, %v2244
        %v2247 = vmul.f32 %v2192, %v2244
        %v2248 = vmul.f32 %v2195, %v2244
        %v2249 = vmul.f32 %v2198, %v2244
        %v2250 = vmul.f32 %v2201, %v2244
        %v2251 = vmul.f32 %v2204, %v2244
        %v2252 = vmul.f32 %v2207, %v2244
        %v2253 = vmul.f32 %v2210, %v2244
        %v2254 = vmul.f32 %v2213, %v2244
        %v2255 = vmul.f32 %v2216, %v2244
        %v2256 = vmul.f32 %v2219, %v2244
        %v2257 = vmul.f32 %v2222, %v2244
        %v2258 = vmul.f32 %v2225, %v2244
        %v2259 = vmul.f32 %v2228, %v2244
        %v2260 = vmul.f32 %v2231, %v2244
        %v2261 = vmul.f32 %v2234, %v2244
        %v2262 = vmul.f32 %v2237, %v2244
        %v2263 = vmul.f32 %v2240, %v2244
        %v2264 = vmul.f32 %v2243, %v2244
        %s2265 = sld [smem:[#allocation2]]
        %s2266 = sld [smem:[#allocation2 + $0x1]]
        %s2267 = sld [smem:[#allocation2 + $0x2]]
        %s2268 = sld [smem:[#allocation2 + $0x3]]
        %s2269 = sld [smem:[#allocation2 + $0x4]]
        %s2270 = sld [smem:[#allocation2 + $0x5]]
        %s2271 = sld [smem:[#allocation2 + $0x6]]
        %s2272 = sld [smem:[#allocation2 + $0x7]]
        %s2273 = sld [smem:[#allocation2 + $0x8]]
        %s2274 = sld [smem:[#allocation2 + $0x9]]
        %s2275 = sld [smem:[#allocation2 + $0xa]]
        %s2276 = sld [smem:[#allocation2 + $0xb]]
        %s2277 = sld [smem:[#allocation2 + $0xc]]
        %s2278 = sld [smem:[#allocation2 + $0xd]]
        %s2279 = sld [smem:[#allocation2 + $0xe]]
        %s2280 = sld [smem:[#allocation2 + $0xf]]
        %s2281 = sld [smem:[#allocation2 + $0x10]]
        %s2282 = sld [smem:[#allocation2 + $0x11]]
        %s2283 = sld [smem:[#allocation2 + $0x12]]
        %v2284 = vstv %s2265
        %v2285 = vmul.f32 %v2125, %v2284
        %v2286 = vmul.f32 %v2132, %v2284
        %v2287 = vmul.f32 %v2138, %v2284
        %v2288 = vmul.f32 %v2144, %v2284
        %v2289 = vmul.f32 %v2150, %v2284
        %v2290 = vmul.f32 %v2156, %v2284
        %v2291 = vmul.f32 %v2162, %v2284
        %v2292 = vmul.f32 %v2168, %v2284
        %v2293 = vadd.f32 %v2285, 0.0
        %v2294 = vadd.f32 %v2286, 0.0
        %v2295 = vadd.f32 %v2287, 0.0
        %v2296 = vadd.f32 %v2288, 0.0
        %v2297 = vadd.f32 %v2289, 0.0
        %v2298 = vadd.f32 %v2290, 0.0
        %v2299 = vadd.f32 %v2291, 0.0
        %v2300 = vadd.f32 %v2292, 0.0
        %v2301 = vstv %s2274
        %v2302 = vmul.f32 %v2245, %v2301
        %v2303 = vmul.f32 %v2247, %v2301
        %v2304 = vmul.f32 %v2249, %v2301
        %v2305 = vmul.f32 %v2251, %v2301
        %v2306 = vmul.f32 %v2253, %v2301
        %v2307 = vmul.f32 %v2255, %v2301
        %v2308 = vmul.f32 %v2257, %v2301
        %v2309 = vmul.f32 %v2259, %v2301
        %v2310 = vadd.f32 %v2293, %v2302
        %v2311 = vadd.f32 %v2294, %v2303
        %v2312 = vadd.f32 %v2295, %v2304
        %v2313 = vadd.f32 %v2296, %v2305
        %v2314 = vadd.f32 %v2297, %v2306
        %v2315 = vadd.f32 %v2298, %v2307
        %v2316 = vadd.f32 %v2299, %v2308
        %v2317 = vadd.f32 %v2300, %v2309
        %v2318 = vstv %s2266
        %v2319 = vmul.f32 %v2125, %v2318
        %v2320 = vmul.f32 %v2129, %v2318
        %v2321 = vmul.f32 %v2132, %v2318
        %v2322 = vmul.f32 %v2135, %v2318
        %v2323 = vmul.f32 %v2138, %v2318
        %v2324 = vmul.f32 %v2141, %v2318
        %v2325 = vmul.f32 %v2144, %v2318
        %v2326 = vmul.f32 %v2147, %v2318
        %v2327 = vmul.f32 %v2150, %v2318
        %v2328 = vmul.f32 %v2153, %v2318
        %v2329 = vmul.f32 %v2156, %v2318
        %v2330 = vmul.f32 %v2159, %v2318
        %v2331 = vmul.f32 %v2162, %v2318
        %v2332 = vmul.f32 %v2165, %v2318
        %v2333 = vmul.f32 %v2168, %v2318
        %v2334 = vmul.f32 %v2171, %v2318
        %vm2351 = vcmask 1046528
        %v2352 = vrot.slane %v2319, 1
        %v2353 = vrot.slane %v2320, 1
        %v2354 = vsel %vm2351, %v2352, %v2353
        %v2355 = vrot.slane %v2321, 1
        %v2356 = vrot.slane %v2322, 1
        %v2357 = vsel %vm2351, %v2355, %v2356
        %v2358 = vrot.slane %v2323, 1
        %v2359 = vrot.slane %v2324, 1
        %v2360 = vsel %vm2351, %v2358, %v2359
        %v2361 = vrot.slane %v2325, 1
        %v2362 = vrot.slane %v2326, 1
        %v2363 = vsel %vm2351, %v2361, %v2362
        %v2364 = vrot.slane %v2327, 1
        %v2365 = vrot.slane %v2328, 1
        %v2366 = vsel %vm2351, %v2364, %v2365
        %v2367 = vrot.slane %v2329, 1
        %v2368 = vrot.slane %v2330, 1
        %v2369 = vsel %vm2351, %v2367, %v2368
        %v2370 = vrot.slane %v2331, 1
        %v2371 = vrot.slane %v2332, 1
        %v2372 = vsel %vm2351, %v2370, %v2371
        %v2373 = vrot.slane %v2333, 1
        %v2374 = vrot.slane %v2334, 1
        %v2375 = vsel %vm2351, %v2373, %v2374
        %v2384 = vadd.f32 %v2310, %v2354
        %v2385 = vadd.f32 %v2311, %v2357
        %v2386 = vadd.f32 %v2312, %v2360
        %v2387 = vadd.f32 %v2313, %v2363
        %v2388 = vadd.f32 %v2314, %v2366
        %v2389 = vadd.f32 %v2315, %v2369
        %v2390 = vadd.f32 %v2316, %v2372
        %v2391 = vadd.f32 %v2317, %v2375
        %v2392 = vstv %s2275
        %v2393 = vmul.f32 %v2245, %v2392
        %v2394 = vmul.f32 %v2246, %v2392
        %v2395 = vmul.f32 %v2247, %v2392
        %v2396 = vmul.f32 %v2248, %v2392
        %v2397 = vmul.f32 %v2249, %v2392
        %v2398 = vmul.f32 %v2250, %v2392
        %v2399 = vmul.f32 %v2251, %v2392
        %v2400 = vmul.f32 %v2252, %v2392
        %v2401 = vmul.f32 %v2253, %v2392
        %v2402 = vmul.f32 %v2254, %v2392
        %v2403 = vmul.f32 %v2255, %v2392
        %v2404 = vmul.f32 %v2256, %v2392
        %v2405 = vmul.f32 %v2257, %v2392
        %v2406 = vmul.f32 %v2258, %v2392
        %v2407 = vmul.f32 %v2259, %v2392
        %v2408 = vmul.f32 %v2260, %v2392
        %v2425 = vrot.slane %v2393, 1
        %v2426 = vrot.slane %v2394, 1
        %v2427 = vsel %vm2351, %v2425, %v2426
        %v2428 = vrot.slane %v2395, 1
        %v2429 = vrot.slane %v2396, 1
        %v2430 = vsel %vm2351, %v2428, %v2429
        %v2431 = vrot.slane %v2397, 1
        %v2432 = vrot.slane %v2398, 1
        %v2433 = vsel %vm2351, %v2431, %v2432
        %v2434 = vrot.slane %v2399, 1
        %v2435 = vrot.slane %v2400, 1
        %v2436 = vsel %vm2351, %v2434, %v2435
        %v2437 = vrot.slane %v2401, 1
        %v2438 = vrot.slane %v2402, 1
        %v2439 = vsel %vm2351, %v2437, %v2438
        %v2440 = vrot.slane %v2403, 1
        %v2441 = vrot.slane %v2404, 1
        %v2442 = vsel %vm2351, %v2440, %v2441
        %v2443 = vrot.slane %v2405, 1
        %v2444 = vrot.slane %v2406, 1
        %v2445 = vsel %vm2351, %v2443, %v2444
        %v2446 = vrot.slane %v2407, 1
        %v2447 = vrot.slane %v2408, 1
        %v2448 = vsel %vm2351, %v2446, %v2447
        %v2457 = vadd.f32 %v2384, %v2427
        %v2458 = vadd.f32 %v2385, %v2430
        %v2459 = vadd.f32 %v2386, %v2433
        %v2460 = vadd.f32 %v2387, %v2436
        %v2461 = vadd.f32 %v2388, %v2439
        %v2462 = vadd.f32 %v2389, %v2442
        %v2463 = vadd.f32 %v2390, %v2445
        %v2464 = vadd.f32 %v2391, %v2448
        %v2465 = vstv %s2267
        %v2466 = vmul.f32 %v2125, %v2465
        %v2467 = vmul.f32 %v2129, %v2465
        %v2468 = vmul.f32 %v2132, %v2465
        %v2469 = vmul.f32 %v2135, %v2465
        %v2470 = vmul.f32 %v2138, %v2465
        %v2471 = vmul.f32 %v2141, %v2465
        %v2472 = vmul.f32 %v2144, %v2465
        %v2473 = vmul.f32 %v2147, %v2465
        %v2474 = vmul.f32 %v2150, %v2465
        %v2475 = vmul.f32 %v2153, %v2465
        %v2476 = vmul.f32 %v2156, %v2465
        %v2477 = vmul.f32 %v2159, %v2465
        %v2478 = vmul.f32 %v2162, %v2465
        %v2479 = vmul.f32 %v2165, %v2465
        %v2480 = vmul.f32 %v2168, %v2465
        %v2481 = vmul.f32 %v2171, %v2465
        %vm2498 = vcmask 1045504
        %v2499 = vrot.slane %v2466, 2
        %v2500 = vrot.slane %v2467, 2
        %v2501 = vsel %vm2498, %v2499, %v2500
        %v2502 = vrot.slane %v2468, 2
        %v2503 = vrot.slane %v2469, 2
        %v2504 = vsel %vm2498, %v2502, %v2503
        %v2505 = vrot.slane %v2470, 2
        %v2506 = vrot.slane %v2471, 2
        %v2507 = vsel %vm2498, %v2505, %v2506
        %v2508 = vrot.slane %v2472, 2
        %v2509 = vrot.slane %v2473, 2
        %v2510 = vsel %vm2498, %v2508, %v2509
        %v2511 = vrot.slane %v2474, 2
        %v2512 = vrot.slane %v2475, 2
        %v2513 = vsel %vm2498, %v2511, %v2512
        %v2514 = vrot.slane %v2476, 2
        %v2515 = vrot.slane %v2477, 2
        %v2516 = vsel %vm2498, %v2514, %v2515
        %v2517 = vrot.slane %v2478, 2
        %v2518 = vrot.slane %v2479, 2
        %v2519 = vsel %vm2498, %v2517, %v2518
        %v2520 = vrot.slane %v2480, 2
        %v2521 = vrot.slane %v2481, 2
        %v2522 = vsel %vm2498, %v2520, %v2521
        %v2531 = vadd.f32 %v2457, %v2501
        %v2532 = vadd.f32 %v2458, %v2504
        %v2533 = vadd.f32 %v2459, %v2507
        %v2534 = vadd.f32 %v2460, %v2510
        %v2535 = vadd.f32 %v2461, %v2513
        %v2536 = vadd.f32 %v2462, %v2516
        %v2537 = vadd.f32 %v2463, %v2519
        %v2538 = vadd.f32 %v2464, %v2522
        %v2539 = vstv %s2276
        %v2540 = vmul.f32 %v2245, %v2539
        %v2541 = vmul.f32 %v2246, %v2539
        %v2542 = vmul.f32 %v2247, %v2539
        %v2543 = vmul.f32 %v2248, %v2539
        %v2544 = vmul.f32 %v2249, %v2539
        %v2545 = vmul.f32 %v2250, %v2539
        %v2546 = vmul.f32 %v2251, %v2539
        %v2547 = vmul.f32 %v2252, %v2539
        %v2548 = vmul.f32 %v2253, %v2539
        %v2549 = vmul.f32 %v2254, %v2539
        %v2550 = vmul.f32 %v2255, %v2539
        %v2551 = vmul.f32 %v2256, %v2539
        %v2552 = vmul.f32 %v2257, %v2539
        %v2553 = vmul.f32 %v2258, %v2539
        %v2554 = vmul.f32 %v2259, %v2539
        %v2555 = vmul.f32 %v2260, %v2539
        %v2572 = vrot.slane %v2540, 2
        %v2573 = vrot.slane %v2541, 2
        %v2574 = vsel %vm2498, %v2572, %v2573
        %v2575 = vrot.slane %v2542, 2
        %v2576 = vrot.slane %v2543, 2
        %v2577 = vsel %vm2498, %v2575, %v2576
        %v2578 = vrot.slane %v2544, 2
        %v2579 = vrot.slane %v2545, 2
        %v2580 = vsel %vm2498, %v2578, %v2579
        %v2581 = vrot.slane %v2546, 2
        %v2582 = vrot.slane %v2547, 2
        %v2583 = vsel %vm2498, %v2581, %v2582
        %v2584 = vrot.slane %v2548, 2
        %v2585 = vrot.slane %v2549, 2
        %v2586 = vsel %vm2498, %v2584, %v2585
        %v2587 = vrot.slane %v2550, 2
        %v2588 = vrot.slane %v2551, 2
        %v2589 = vsel %vm2498, %v2587, %v2588
        %v2590 = vrot.slane %v2552, 2
        %v2591 = vrot.slane %v2553, 2
        %v2592 = vsel %vm2498, %v2590, %v2591
        %v2593 = vrot.slane %v2554, 2
        %v2594 = vrot.slane %v2555, 2
        %v2595 = vsel %vm2498, %v2593, %v2594
        %v2604 = vadd.f32 %v2531, %v2574
        %v2605 = vadd.f32 %v2532, %v2577
        %v2606 = vadd.f32 %v2533, %v2580
        %v2607 = vadd.f32 %v2534, %v2583
        %v2608 = vadd.f32 %v2535, %v2586
        %v2609 = vadd.f32 %v2536, %v2589
        %v2610 = vadd.f32 %v2537, %v2592
        %v2611 = vadd.f32 %v2538, %v2595
        %v2612 = vstv %s2268
        %v2613 = vmul.f32 %v2132, %v2612
        %v2614 = vmul.f32 %v2138, %v2612
        %v2615 = vmul.f32 %v2144, %v2612
        %v2616 = vmul.f32 %v2150, %v2612
        %v2617 = vmul.f32 %v2156, %v2612
        %v2618 = vmul.f32 %v2162, %v2612
        %v2619 = vmul.f32 %v2168, %v2612
        %v2620 = vmul.f32 %v2174, %v2612
        %v2621 = vadd.f32 %v2604, %v2613
        %v2622 = vadd.f32 %v2605, %v2614
        %v2623 = vadd.f32 %v2606, %v2615
        %v2624 = vadd.f32 %v2607, %v2616
        %v2625 = vadd.f32 %v2608, %v2617
        %v2626 = vadd.f32 %v2609, %v2618
        %v2627 = vadd.f32 %v2610, %v2619
        %v2628 = vadd.f32 %v2611, %v2620
        %v2629 = vstv %s2277
        %v2630 = vmul.f32 %v2247, %v2629
        %v2631 = vmul.f32 %v2249, %v2629
        %v2632 = vmul.f32 %v2251, %v2629
        %v2633 = vmul.f32 %v2253, %v2629
        %v2634 = vmul.f32 %v2255, %v2629
        %v2635 = vmul.f32 %v2257, %v2629
        %v2636 = vmul.f32 %v2259, %v2629
        %v2637 = vmul.f32 %v2261, %v2629
        %v2638 = vadd.f32 %v2621, %v2630
        %v2639 = vadd.f32 %v2622, %v2631
        %v2640 = vadd.f32 %v2623, %v2632
        %v2641 = vadd.f32 %v2624, %v2633
        %v2642 = vadd.f32 %v2625, %v2634
        %v2643 = vadd.f32 %v2626, %v2635
        %v2644 = vadd.f32 %v2627, %v2636
        %v2645 = vadd.f32 %v2628, %v2637
        %v2646 = vstv %s2269
        %v2647 = vmul.f32 %v2132, %v2646
        %v2648 = vmul.f32 %v2135, %v2646
        %v2649 = vmul.f32 %v2138, %v2646
        %v2650 = vmul.f32 %v2141, %v2646
        %v2651 = vmul.f32 %v2144, %v2646
        %v2652 = vmul.f32 %v2147, %v2646
        %v2653 = vmul.f32 %v2150, %v2646
        %v2654 = vmul.f32 %v2153, %v2646
        %v2655 = vmul.f32 %v2156, %v2646
        %v2656 = vmul.f32 %v2159, %v2646
        %v2657 = vmul.f32 %v2162, %v2646
        %v2658 = vmul.f32 %v2165, %v2646
        %v2659 = vmul.f32 %v2168, %v2646
        %v2660 = vmul.f32 %v2171, %v2646
        %v2661 = vmul.f32 %v2174, %v2646
        %v2662 = vmul.f32 %v2177, %v2646
        %v2679 = vrot.slane %v2647, 1
        %v2680 = vrot.slane %v2648, 1
        %v2681 = vsel %vm2351, %v2679, %v2680
        %v2682 = vrot.slane %v2649, 1
        %v2683 = vrot.slane %v2650, 1
        %v2684 = vsel %vm2351, %v2682, %v2683
        %v2685 = vrot.slane %v2651, 1
        %v2686 = vrot.slane %v2652, 1
        %v2687 = vsel %vm2351, %v2685, %v2686
        %v2688 = vrot.slane %v2653, 1
        %v2689 = vrot.slane %v2654, 1
        %v2690 = vsel %vm2351, %v2688, %v2689
        %v2691 = vrot.slane %v2655, 1
        %v2692 = vrot.slane %v2656, 1
        %v2693 = vsel %vm2351, %v2691, %v2692
        %v2694 = vrot.slane %v2657, 1
        %v2695 = vrot.slane %v2658, 1
        %v2696 = vsel %vm2351, %v2694, %v2695
        %v2697 = vrot.slane %v2659, 1
        %v2698 = vrot.slane %v2660, 1
        %v2699 = vsel %vm2351, %v2697, %v2698
        %v2700 = vrot.slane %v2661, 1
        %v2701 = vrot.slane %v2662, 1
        %v2702 = vsel %vm2351, %v2700, %v2701
        %v2711 = vadd.f32 %v2638, %v2681
        %v2712 = vadd.f32 %v2639, %v2684
        %v2713 = vadd.f32 %v2640, %v2687
        %v2714 = vadd.f32 %v2641, %v2690
        %v2715 = vadd.f32 %v2642, %v2693
        %v2716 = vadd.f32 %v2643, %v2696
        %v2717 = vadd.f32 %v2644, %v2699
        %v2718 = vadd.f32 %v2645, %v2702
        %v2719 = vstv %s2278
        %v2720 = vmul.f32 %v2247, %v2719
        %v2721 = vmul.f32 %v2248, %v2719
        %v2722 = vmul.f32 %v2249, %v2719
        %v2723 = vmul.f32 %v2250, %v2719
        %v2724 = vmul.f32 %v2251, %v2719
        %v2725 = vmul.f32 %v2252, %v2719
        %v2726 = vmul.f32 %v2253, %v2719
        %v2727 = vmul.f32 %v2254, %v2719
        %v2728 = vmul.f32 %v2255, %v2719
        %v2729 = vmul.f32 %v2256, %v2719
        %v2730 = vmul.f32 %v2257, %v2719
        %v2731 = vmul.f32 %v2258, %v2719
        %v2732 = vmul.f32 %v2259, %v2719
        %v2733 = vmul.f32 %v2260, %v2719
        %v2734 = vmul.f32 %v2261, %v2719
        %v2735 = vmul.f32 %v2262, %v2719
        %v2752 = vrot.slane %v2720, 1
        %v2753 = vrot.slane %v2721, 1
        %v2754 = vsel %vm2351, %v2752, %v2753
        %v2755 = vrot.slane %v2722, 1
        %v2756 = vrot.slane %v2723, 1
        %v2757 = vsel %vm2351, %v2755, %v2756
        %v2758 = vrot.slane %v2724, 1
        %v2759 = vrot.slane %v2725, 1
        %v2760 = vsel %vm2351, %v2758, %v2759
        %v2761 = vrot.slane %v2726, 1
        %v2762 = vrot.slane %v2727, 1
        %v2763 = vsel %vm2351, %v2761, %v2762
        %v2764 = vrot.slane %v2728, 1
        %v2765 = vrot.slane %v2729, 1
        %v2766 = vsel %vm2351, %v2764, %v2765
        %v2767 = vrot.slane %v2730, 1
        %v2768 = vrot.slane %v2731, 1
        %v2769 = vsel %vm2351, %v2767, %v2768
        %v2770 = vrot.slane %v2732, 1
        %v2771 = vrot.slane %v2733, 1
        %v2772 = vsel %vm2351, %v2770, %v2771
        %v2773 = vrot.slane %v2734, 1
        %v2774 = vrot.slane %v2735, 1
        %v2775 = vsel %vm2351, %v2773, %v2774
        %v2784 = vadd.f32 %v2711, %v2754
        %v2785 = vadd.f32 %v2712, %v2757
        %v2786 = vadd.f32 %v2713, %v2760
        %v2787 = vadd.f32 %v2714, %v2763
        %v2788 = vadd.f32 %v2715, %v2766
        %v2789 = vadd.f32 %v2716, %v2769
        %v2790 = vadd.f32 %v2717, %v2772
        %v2791 = vadd.f32 %v2718, %v2775
        %v2792 = vstv %s2270
        %v2793 = vmul.f32 %v2132, %v2792
        %v2794 = vmul.f32 %v2135, %v2792
        %v2795 = vmul.f32 %v2138, %v2792
        %v2796 = vmul.f32 %v2141, %v2792
        %v2797 = vmul.f32 %v2144, %v2792
        %v2798 = vmul.f32 %v2147, %v2792
        %v2799 = vmul.f32 %v2150, %v2792
        %v2800 = vmul.f32 %v2153, %v2792
        %v2801 = vmul.f32 %v2156, %v2792
        %v2802 = vmul.f32 %v2159, %v2792
        %v2803 = vmul.f32 %v2162, %v2792
        %v2804 = vmul.f32 %v2165, %v2792
        %v2805 = vmul.f32 %v2168, %v2792
        %v2806 = vmul.f32 %v2171, %v2792
        %v2807 = vmul.f32 %v2174, %v2792
        %v2808 = vmul.f32 %v2177, %v2792
        %v2825 = vrot.slane %v2793, 2
        %v2826 = vrot.slane %v2794, 2
        %v2827 = vsel %vm2498, %v2825, %v2826
        %v2828 = vrot.slane %v2795, 2
        %v2829 = vrot.slane %v2796, 2
        %v2830 = vsel %vm2498, %v2828, %v2829
        %v2831 = vrot.slane %v2797, 2
        %v2832 = vrot.slane %v2798, 2
        %v2833 = vsel %vm2498, %v2831, %v2832
        %v2834 = vrot.slane %v2799, 2
        %v2835 = vrot.slane %v2800, 2
        %v2836 = vsel %vm2498, %v2834, %v2835
        %v2837 = vrot.slane %v2801, 2
        %v2838 = vrot.slane %v2802, 2
        %v2839 = vsel %vm2498, %v2837, %v2838
        %v2840 = vrot.slane %v2803, 2
        %v2841 = vrot.slane %v2804, 2
        %v2842 = vsel %vm2498, %v2840, %v2841
        %v2843 = vrot.slane %v2805, 2
        %v2844 = vrot.slane %v2806, 2
        %v2845 = vsel %vm2498, %v2843, %v2844
        %v2846 = vrot.slane %v2807, 2
        %v2847 = vrot.slane %v2808, 2
        %v2848 = vsel %vm2498, %v2846, %v2847
        %v2857 = vadd.f32 %v2784, %v2827
        %v2858 = vadd.f32 %v2785, %v2830
        %v2859 = vadd.f32 %v2786, %v2833
        %v2860 = vadd.f32 %v2787, %v2836
        %v2861 = vadd.f32 %v2788, %v2839
        %v2862 = vadd.f32 %v2789, %v2842
        %v2863 = vadd.f32 %v2790, %v2845
        %v2864 = vadd.f32 %v2791, %v2848
        %v2865 = vstv %s2279
        %v2866 = vmul.f32 %v2247, %v2865
        %v2867 = vmul.f32 %v2248, %v2865
        %v2868 = vmul.f32 %v2249, %v2865
        %v2869 = vmul.f32 %v2250, %v2865
        %v2870 = vmul.f32 %v2251, %v2865
        %v2871 = vmul.f32 %v2252, %v2865
        %v2872 = vmul.f32 %v2253, %v2865
        %v2873 = vmul.f32 %v2254, %v2865
        %v2874 = vmul.f32 %v2255, %v2865
        %v2875 = vmul.f32 %v2256, %v2865
        %v2876 = vmul.f32 %v2257, %v2865
        %v2877 = vmul.f32 %v2258, %v2865
        %v2878 = vmul.f32 %v2259, %v2865
        %v2879 = vmul.f32 %v2260, %v2865
        %v2880 = vmul.f32 %v2261, %v2865
        %v2881 = vmul.f32 %v2262, %v2865
        %v2898 = vrot.slane %v2866, 2
        %v2899 = vrot.slane %v2867, 2
        %v2900 = vsel %vm2498, %v2898, %v2899
        %v2901 = vrot.slane %v2868, 2
        %v2902 = vrot.slane %v2869, 2
        %v2903 = vsel %vm2498, %v2901, %v2902
        %v2904 = vrot.slane %v2870, 2
        %v2905 = vrot.slane %v2871, 2
        %v2906 = vsel %vm2498, %v2904, %v2905
        %v2907 = vrot.slane %v2872, 2
        %v2908 = vrot.slane %v2873, 2
        %v2909 = vsel %vm2498, %v2907, %v2908
        %v2910 = vrot.slane %v2874, 2
        %v2911 = vrot.slane %v2875, 2
        %v2912 = vsel %vm2498, %v2910, %v2911
        %v2913 = vrot.slane %v2876, 2
        %v2914 = vrot.slane %v2877, 2
        %v2915 = vsel %vm2498, %v2913, %v2914
        %v2916 = vrot.slane %v2878, 2
        %v2917 = vrot.slane %v2879, 2
        %v2918 = vsel %vm2498, %v2916, %v2917
        %v2919 = vrot.slane %v2880, 2
        %v2920 = vrot.slane %v2881, 2
        %v2921 = vsel %vm2498, %v2919, %v2920
        %v2930 = vadd.f32 %v2857, %v2900
        %v2931 = vadd.f32 %v2858, %v2903
        %v2932 = vadd.f32 %v2859, %v2906
        %v2933 = vadd.f32 %v2860, %v2909
        %v2934 = vadd.f32 %v2861, %v2912
        %v2935 = vadd.f32 %v2862, %v2915
        %v2936 = vadd.f32 %v2863, %v2918
        %v2937 = vadd.f32 %v2864, %v2921
        %v2938 = vstv %s2271
        %v2939 = vmul.f32 %v2138, %v2938
        %v2940 = vmul.f32 %v2144, %v2938
        %v2941 = vmul.f32 %v2150, %v2938
        %v2942 = vmul.f32 %v2156, %v2938
        %v2943 = vmul.f32 %v2162, %v2938
        %v2944 = vmul.f32 %v2168, %v2938
        %v2945 = vmul.f32 %v2174, %v2938
        %v2946 = vmul.f32 %v2180, %v2938
        %v2947 = vadd.f32 %v2930, %v2939
        %v2948 = vadd.f32 %v2931, %v2940
        %v2949 = vadd.f32 %v2932, %v2941
        %v2950 = vadd.f32 %v2933, %v2942
        %v2951 = vadd.f32 %v2934, %v2943
        %v2952 = vadd.f32 %v2935, %v2944
        %v2953 = vadd.f32 %v2936, %v2945
        %v2954 = vadd.f32 %v2937, %v2946
        %v2955 = vstv %s2280
        %v2956 = vmul.f32 %v2249, %v2955
        %v2957 = vmul.f32 %v2251, %v2955
        %v2958 = vmul.f32 %v2253, %v2955
        %v2959 = vmul.f32 %v2255, %v2955
        %v2960 = vmul.f32 %v2257, %v2955
        %v2961 = vmul.f32 %v2259, %v2955
        %v2962 = vmul.f32 %v2261, %v2955
        %v2963 = vmul.f32 %v2263, %v2955
        %v2964 = vadd.f32 %v2947, %v2956
        %v2965 = vadd.f32 %v2948, %v2957
        %v2966 = vadd.f32 %v2949, %v2958
        %v2967 = vadd.f32 %v2950, %v2959
        %v2968 = vadd.f32 %v2951, %v2960
        %v2969 = vadd.f32 %v2952, %v2961
        %v2970 = vadd.f32 %v2953, %v2962
        %v2971 = vadd.f32 %v2954, %v2963
        %v2972 = vstv %s2272
        %v2973 = vmul.f32 %v2138, %v2972
        %v2974 = vmul.f32 %v2141, %v2972
        %v2975 = vmul.f32 %v2144, %v2972
        %v2976 = vmul.f32 %v2147, %v2972
        %v2977 = vmul.f32 %v2150, %v2972
        %v2978 = vmul.f32 %v2153, %v2972
        %v2979 = vmul.f32 %v2156, %v2972
        %v2980 = vmul.f32 %v2159, %v2972
        %v2981 = vmul.f32 %v2162, %v2972
        %v2982 = vmul.f32 %v2165, %v2972
        %v2983 = vmul.f32 %v2168, %v2972
        %v2984 = vmul.f32 %v2171, %v2972
        %v2985 = vmul.f32 %v2174, %v2972
        %v2986 = vmul.f32 %v2177, %v2972
        %v2987 = vmul.f32 %v2180, %v2972
        %v2988 = vmul.f32 %v2183, %v2972
        %v3005 = vrot.slane %v2973, 1
        %v3006 = vrot.slane %v2974, 1
        %v3007 = vsel %vm2351, %v3005, %v3006
        %v3008 = vrot.slane %v2975, 1
        %v3009 = vrot.slane %v2976, 1
        %v3010 = vsel %vm2351, %v3008, %v3009
        %v3011 = vrot.slane %v2977, 1
        %v3012 = vrot.slane %v2978, 1
        %v3013 = vsel %vm2351, %v3011, %v3012
        %v3014 = vrot.slane %v2979, 1
        %v3015 = vrot.slane %v2980, 1
        %v3016 = vsel %vm2351, %v3014, %v3015
        %v3017 = vrot.slane %v2981, 1
        %v3018 = vrot.slane %v2982, 1
        %v3019 = vsel %vm2351, %v3017, %v3018
        %v3020 = vrot.slane %v2983, 1
        %v3021 = vrot.slane %v2984, 1
        %v3022 = vsel %vm2351, %v3020, %v3021
        %v3023 = vrot.slane %v2985, 1
        %v3024 = vrot.slane %v2986, 1
        %v3025 = vsel %vm2351, %v3023, %v3024
        %v3026 = vrot.slane %v2987, 1
        %v3027 = vrot.slane %v2988, 1
        %v3028 = vsel %vm2351, %v3026, %v3027
        %v3037 = vadd.f32 %v2964, %v3007
        %v3038 = vadd.f32 %v2965, %v3010
        %v3039 = vadd.f32 %v2966, %v3013
        %v3040 = vadd.f32 %v2967, %v3016
        %v3041 = vadd.f32 %v2968, %v3019
        %v3042 = vadd.f32 %v2969, %v3022
        %v3043 = vadd.f32 %v2970, %v3025
        %v3044 = vadd.f32 %v2971, %v3028
        %v3045 = vstv %s2281
        %v3046 = vmul.f32 %v2249, %v3045
        %v3047 = vmul.f32 %v2250, %v3045
        %v3048 = vmul.f32 %v2251, %v3045
        %v3049 = vmul.f32 %v2252, %v3045
        %v3050 = vmul.f32 %v2253, %v3045
        %v3051 = vmul.f32 %v2254, %v3045
        %v3052 = vmul.f32 %v2255, %v3045
        %v3053 = vmul.f32 %v2256, %v3045
        %v3054 = vmul.f32 %v2257, %v3045
        %v3055 = vmul.f32 %v2258, %v3045
        %v3056 = vmul.f32 %v2259, %v3045
        %v3057 = vmul.f32 %v2260, %v3045
        %v3058 = vmul.f32 %v2261, %v3045
        %v3059 = vmul.f32 %v2262, %v3045
        %v3060 = vmul.f32 %v2263, %v3045
        %v3061 = vmul.f32 %v2264, %v3045
        %v3078 = vrot.slane %v3046, 1
        %v3079 = vrot.slane %v3047, 1
        %v3080 = vsel %vm2351, %v3078, %v3079
        %v3081 = vrot.slane %v3048, 1
        %v3082 = vrot.slane %v3049, 1
        %v3083 = vsel %vm2351, %v3081, %v3082
        %v3084 = vrot.slane %v3050, 1
        %v3085 = vrot.slane %v3051, 1
        %v3086 = vsel %vm2351, %v3084, %v3085
        %v3087 = vrot.slane %v3052, 1
        %v3088 = vrot.slane %v3053, 1
        %v3089 = vsel %vm2351, %v3087, %v3088
        %v3090 = vrot.slane %v3054, 1
        %v3091 = vrot.slane %v3055, 1
        %v3092 = vsel %vm2351, %v3090, %v3091
        %v3093 = vrot.slane %v3056, 1
        %v3094 = vrot.slane %v3057, 1
        %v3095 = vsel %vm2351, %v3093, %v3094
        %v3096 = vrot.slane %v3058, 1
        %v3097 = vrot.slane %v3059, 1
        %v3098 = vsel %vm2351, %v3096, %v3097
        %v3099 = vrot.slane %v3060, 1
        %v3100 = vrot.slane %v3061, 1
        %v3101 = vsel %vm2351, %v3099, %v3100
        %v3110 = vadd.f32 %v3037, %v3080
        %v3111 = vadd.f32 %v3038, %v3083
        %v3112 = vadd.f32 %v3039, %v3086
        %v3113 = vadd.f32 %v3040, %v3089
        %v3114 = vadd.f32 %v3041, %v3092
        %v3115 = vadd.f32 %v3042, %v3095
        %v3116 = vadd.f32 %v3043, %v3098
        %v3117 = vadd.f32 %v3044, %v3101
        %v3118 = vstv %s2273
        %v3119 = vmul.f32 %v2138, %v3118
        %v3120 = vmul.f32 %v2141, %v3118
        %v3121 = vmul.f32 %v2144, %v3118
        %v3122 = vmul.f32 %v2147, %v3118
        %v3123 = vmul.f32 %v2150, %v3118
        %v3124 = vmul.f32 %v2153, %v3118
        %v3125 = vmul.f32 %v2156, %v3118
        %v3126 = vmul.f32 %v2159, %v3118
        %v3127 = vmul.f32 %v2162, %v3118
        %v3128 = vmul.f32 %v2165, %v3118
        %v3129 = vmul.f32 %v2168, %v3118
        %v3130 = vmul.f32 %v2171, %v3118
        %v3131 = vmul.f32 %v2174, %v3118
        %v3132 = vmul.f32 %v2177, %v3118
        %v3133 = vmul.f32 %v2180, %v3118
        %v3134 = vmul.f32 %v2183, %v3118
        %v3151 = vrot.slane %v3119, 2
        %v3152 = vrot.slane %v3120, 2
        %v3153 = vsel %vm2498, %v3151, %v3152
        %v3154 = vrot.slane %v3121, 2
        %v3155 = vrot.slane %v3122, 2
        %v3156 = vsel %vm2498, %v3154, %v3155
        %v3157 = vrot.slane %v3123, 2
        %v3158 = vrot.slane %v3124, 2
        %v3159 = vsel %vm2498, %v3157, %v3158
        %v3160 = vrot.slane %v3125, 2
        %v3161 = vrot.slane %v3126, 2
        %v3162 = vsel %vm2498, %v3160, %v3161
        %v3163 = vrot.slane %v3127, 2
        %v3164 = vrot.slane %v3128, 2
        %v3165 = vsel %vm2498, %v3163, %v3164
        %v3166 = vrot.slane %v3129, 2
        %v3167 = vrot.slane %v3130, 2
        %v3168 = vsel %vm2498, %v3166, %v3167
        %v3169 = vrot.slane %v3131, 2
        %v3170 = vrot.slane %v3132, 2
        %v3171 = vsel %vm2498, %v3169, %v3170
        %v3172 = vrot.slane %v3133, 2
        %v3173 = vrot.slane %v3134, 2
        %v3174 = vsel %vm2498, %v3172, %v3173
        %v3183 = vadd.f32 %v3110, %v3153
        %v3184 = vadd.f32 %v3111, %v3156
        %v3185 = vadd.f32 %v3112, %v3159
        %v3186 = vadd.f32 %v3113, %v3162
        %v3187 = vadd.f32 %v3114, %v3165
        %v3188 = vadd.f32 %v3115, %v3168
        %v3189 = vadd.f32 %v3116, %v3171
        %v3190 = vadd.f32 %v3117, %v3174
        %v3191 = vstv %s2282
        %v3192 = vmul.f32 %v2249, %v3191
        %v3193 = vmul.f32 %v2250, %v3191
        %v3194 = vmul.f32 %v2251, %v3191
        %v3195 = vmul.f32 %v2252, %v3191
        %v3196 = vmul.f32 %v2253, %v3191
        %v3197 = vmul.f32 %v2254, %v3191
        %v3198 = vmul.f32 %v2255, %v3191
        %v3199 = vmul.f32 %v2256, %v3191
        %v3200 = vmul.f32 %v2257, %v3191
        %v3201 = vmul.f32 %v2258, %v3191
        %v3202 = vmul.f32 %v2259, %v3191
        %v3203 = vmul.f32 %v2260, %v3191
        %v3204 = vmul.f32 %v2261, %v3191
        %v3205 = vmul.f32 %v2262, %v3191
        %v3206 = vmul.f32 %v2263, %v3191
        %v3207 = vmul.f32 %v2264, %v3191
        %v3224 = vrot.slane %v3192, 2
        %v3225 = vrot.slane %v3193, 2
        %v3226 = vsel %vm2498, %v3224, %v3225
        %v3227 = vrot.slane %v3194, 2
        %v3228 = vrot.slane %v3195, 2
        %v3229 = vsel %vm2498, %v3227, %v3228
        %v3230 = vrot.slane %v3196, 2
        %v3231 = vrot.slane %v3197, 2
        %v3232 = vsel %vm2498, %v3230, %v3231
        %v3233 = vrot.slane %v3198, 2
        %v3234 = vrot.slane %v3199, 2
        %v3235 = vsel %vm2498, %v3233, %v3234
        %v3236 = vrot.slane %v3200, 2
        %v3237 = vrot.slane %v3201, 2
        %v3238 = vsel %vm2498, %v3236, %v3237
        %v3239 = vrot.slane %v3202, 2
        %v3240 = vrot.slane %v3203, 2
        %v3241 = vsel %vm2498, %v3239, %v3240
        %v3242 = vrot.slane %v3204, 2
        %v3243 = vrot.slane %v3205, 2
        %v3244 = vsel %vm2498, %v3242, %v3243
        %v3245 = vrot.slane %v3206, 2
        %v3246 = vrot.slane %v3207, 2
        %v3247 = vsel %vm2498, %v3245, %v3246
        %v3256 = vadd.f32 %v3183, %v3226
        %v3257 = vadd.f32 %v3184, %v3229
        %v3258 = vadd.f32 %v3185, %v3232
        %v3259 = vadd.f32 %v3186, %v3235
        %v3260 = vadd.f32 %v3187, %v3238
        %v3261 = vadd.f32 %v3188, %v3241
        %v3262 = vadd.f32 %v3189, %v3244
        %v3263 = vadd.f32 %v3190, %v3247
        %v3264 = vstv %s2283
        %v3265 = vadd.f32 %v3256, %v3264
        %v3266 = vadd.f32 %v3257, %v3264
        %v3267 = vadd.f32 %v3258, %v3264
        %v3268 = vadd.f32 %v3259, %v3264
        %v3269 = vadd.f32 %v3260, %v3264
        %v3270 = vadd.f32 %v3261, %v3264
        %v3271 = vadd.f32 %v3262, %v3264
        %v3272 = vadd.f32 %v3263, %v3264
        %v3273 = vxor.u32 %v3265, 2147483648
        %v3274 = vxor.u32 %v3266, 2147483648
        %v3275 = vxor.u32 %v3267, 2147483648
        %v3276 = vxor.u32 %v3268, 2147483648
        %v3277 = vxor.u32 %v3269, 2147483648
        %v3278 = vxor.u32 %v3270, 2147483648
        %v3279 = vxor.u32 %v3271, 2147483648
        %v3280 = vxor.u32 %v3272, 2147483648
        %v3281 = vmul.f32 %v3273, 1.442695
        %v3282 = vpow.pop %v3281
        %v3283 = vmul.f32 %v3274, 1.442695
        %v3284 = vpow.pop %v3283
        %v3285 = vmul.f32 %v3275, 1.442695
        %v3286 = vpow.pop %v3285
        %v3287 = vmul.f32 %v3276, 1.442695
        %v3288 = vpow.pop %v3287
        %v3289 = vmul.f32 %v3277, 1.442695
        %v3290 = vpow.pop %v3289
        %v3291 = vmul.f32 %v3278, 1.442695
        %v3292 = vpow.pop %v3291
        %v3293 = vmul.f32 %v3279, 1.442695
        %v3294 = vpow.pop %v3293
        %v3295 = vmul.f32 %v3280, 1.442695
        %v3296 = vpow.pop %v3295
        %v3297 = vadd.f32 %v3282, 1.0
        %v3298 = vadd.f32 %v3284, 1.0
        %v3299 = vadd.f32 %v3286, 1.0
        %v3300 = vadd.f32 %v3288, 1.0
        %v3301 = vadd.f32 %v3290, 1.0
        %v3302 = vadd.f32 %v3292, 1.0
        %v3303 = vadd.f32 %v3294, 1.0
        %v3304 = vadd.f32 %v3296, 1.0
        %v3305 = vrcp.pop %v3297
        %v3306 = vmul.f32 1.0, %v3305
        %v3307 = vrcp.pop %v3298
        %v3308 = vmul.f32 1.0, %v3307
        %v3309 = vrcp.pop %v3299
        %v3310 = vmul.f32 1.0, %v3309
        %v3311 = vrcp.pop %v3300
        %v3312 = vmul.f32 1.0, %v3311
        %v3313 = vrcp.pop %v3301
        %v3314 = vmul.f32 1.0, %v3313
        %v3315 = vrcp.pop %v3302
        %v3316 = vmul.f32 1.0, %v3315
        %v3317 = vrcp.pop %v3303
        %v3318 = vmul.f32 1.0, %v3317
        %v3319 = vrcp.pop %v3304
        %v3320 = vmul.f32 1.0, %v3319
        %v3321 = vadd.f32 %v1016, 1.0
        %v3322 = vlaneseq
        %v3323 = vshrl.u32 %v3322, 7
        %v3324 = vsub.s32 0, %v3323
        %v3325 = vrot.slane %v3321, %v3324
        %3327 = vset.pattern.permute.xlu0 0
        %3328 = vperm.xlu0 %3327, %v3306
        %v3329 = vpop.permute.xlu0 %3328
        %3332 = vset.pattern.permute.xlu0 0
        %3333 = vperm.xlu0 %3332, %v3308
        %v3334 = vpop.permute.xlu0 %3333
        %3337 = vset.pattern.permute.xlu0 0
        %3338 = vperm.xlu0 %3337, %v3310
        %v3339 = vpop.permute.xlu0 %3338
        %3342 = vset.pattern.permute.xlu0 0
        %3343 = vperm.xlu0 %3342, %v3312
        %v3344 = vpop.permute.xlu0 %3343
        %3347 = vset.pattern.permute.xlu0 0
        %3348 = vperm.xlu0 %3347, %v3314
        %v3349 = vpop.permute.xlu0 %3348
        %3352 = vset.pattern.permute.xlu0 0
        %3353 = vperm.xlu0 %3352, %v3316
        %v3354 = vpop.permute.xlu0 %3353
        %3357 = vset.pattern.permute.xlu0 0
        %3358 = vperm.xlu0 %3357, %v3318
        %v3359 = vpop.permute.xlu0 %3358
        %3362 = vset.pattern.permute.xlu0 0
        %3363 = vperm.xlu0 %3362, %v3320
        %v3364 = vpop.permute.xlu0 %3363
        %v3366 = vadd.f32 %v3325, %v3329
        %v3367 = vadd.f32 %v3325, %v3334
        %v3368 = vadd.f32 %v3325, %v3339
        %v3369 = vadd.f32 %v3325, %v3344
        %v3370 = vadd.f32 %v3325, %v3349
        %v3371 = vadd.f32 %v3325, %v3354
        %v3372 = vadd.f32 %v3325, %v3359
        %v3373 = vadd.f32 %v3325, %v3364
        %v3374 = vmul.f32 %v1618, %v3366
        %v3375 = vmul.f32 %v1619, %v3367
        %v3376 = vmul.f32 %v1620, %v3368
        %v3377 = vmul.f32 %v1621, %v3369
        %v3378 = vmul.f32 %v1622, %v3370
        %v3379 = vmul.f32 %v1623, %v3371
        %v3380 = vmul.f32 %v1624, %v3372
        %v3381 = vmul.f32 %v1625, %v3373
        %v3382 = vadd.f32 %v2065, %v3374
        %v3383 = vadd.f32 %v2070, %v3375
        %v3384 = vadd.f32 %v2075, %v3376
        %v3385 = vadd.f32 %v2080, %v3377
        %v3386 = vadd.f32 %v2085, %v3378
        %v3387 = vadd.f32 %v2090, %v3379
        %v3388 = vadd.f32 %v2095, %v3380
        %v3389 = vadd.f32 %v2100, %v3381
        %3390 = vst.msk [vmem:[%s500] sm:$0xff] %vm523, %v3382
        %3391 = vst.msk [vmem:[%s500 + $0x8] sm:$0xff] %vm523, %v3383
        %3392 = vst.msk [vmem:[%s500 + $0x10] sm:$0xff] %vm523, %v3384
        %3393 = vst.msk [vmem:[%s500 + $0x18] sm:$0xff] %vm523, %v3385
        %3394 = vst.msk [vmem:[%s500 + $0x20] sm:$0xff] %vm523, %v3386
        %3395 = vst.msk [vmem:[%s500 + $0x28] sm:$0xff] %vm523, %v3387
        %3396 = vst.msk [vmem:[%s500 + $0x30] sm:$0xff] %vm523, %v3388
        %3397 = vst.msk [vmem:[%s500 + $0x38] sm:$0xff] %vm523, %v3389
        %s3398 = sand.u32 %s346, 1
        %s3399 = scalar_lea.sflag [#allocation3], %s3398
        %s3400 = sand.u32 %s346, 1
        %s3401 = smul.addr %s3400, 64
        %s3402 = scalar_lea.vmem [#allocation5], %s3401
        // Predicated region
        $region81: #{da_conv_forward.1} parent=75 // pred_check
          %p3403 = pneg %p356
        $region82: #{da_conv_forward.1} parent=75 // pred_check_branch
          %3405 = sbr.rel (%p3403) target = $region84
        $region83: #{da_conv_forward.1} parent=75 // pred_region
          %s3407 = ssub.s32 1024, 1024
          %3408 = vsyncadd %s3399, %s3407
          %s3409 = smul.addr %s29, 8
          %s3410 = smul.addr %s3409, 128
          %s3411 = scalar_lea.hbm %s14, %s3410
          %s3412 = sshll.u32 %s3402, 4
          %s3413 = int_to_ptr.vmem [resolvable:$true] %s3412
          %3418 = dma.vmem_to_hbm [thread:$0]  %s3413, 1024, %s3411, %s3399, 128, 128, 8
        $region84: #{da_conv_forward.1} parent=75 // pred_fallthru
          _
      $region76: #{da_conv_forward.1} parent=5 // pred_fallthru
        _
      %p3419 = scmp.le.s32.totalorder 2, %s24
      // Predicated region
      $region85: #{da_conv_forward.1} parent=5 // pred_check
        %p3420 = pneg %p3419
      $region86: #{da_conv_forward.1} parent=5 // pred_check_branch
        %3422 = sbr.rel (%p3420) target = $region88
      $region87: #{da_conv_forward.1} parent=5 // pred_region
        %s3423 = ssub.s32 %s24, 2
        // Predicated region
        $region89: #{da_conv_forward.1} parent=87 // pred_check
          %p3424 = pneg %p362
        $region90: #{da_conv_forward.1} parent=87 // pred_check_branch
          %3426 = sbr.rel (%p3424) target = $region92
        $region91: #{da_conv_forward.1} parent=87 // pred_region
          %s3427 = sand.u32 %s347, 1
          %s3428 = scalar_lea.sflag [#allocation3], %s3427
          %s3429 = sand.u32 %s347, 1
          %s3430 = smul.addr %s3429, 64
          %s3431 = scalar_lea.vmem [#allocation5], %s3430
          %3432 = dma.done %s3428, 1024
        $region92: #{da_conv_forward.1} parent=87 // pred_fallthru
          _
      $region88: #{da_conv_forward.1} parent=5 // pred_fallthru
        _
    $region6: #{da_conv_forward.1} parent=1 // loop_footer
      %s28 = sadd.s32 1, %s24
    $region7: #{da_conv_forward.1} parent=1 // loop_footer_branch
      %23 = sbr.rel target = $region3
    $region8: #{da_conv_forward.1} parent=1 // loop_exit
      _
    %3433 = vsyncpa [#allocation3], 1
    %s3434 = scalar_lea.sflag [#allocation3], 1
    %3435 = vsyncpa %s3434, 1
    %3436 = vsyncpa [#allocation4], 1
    %s3437 = scalar_lea.sflag [#allocation4], 1
    %3438 = vsyncpa %s3437, 1

</llo_original>
